<compile_context>
chip_gen: v5e
topology: v5e:2x2
jax: 0.10.0
libtpu: 0.0.40
codegen_flags: <defaults>
</compile_context>

<pallas_src>
import math
import functools

import jax
import jax.numpy as jnp
from jax.experimental import pallas as pl
from jax.experimental.pallas import tpu as pltpu


HPARAMS = dict(
    vqemb_size=32,            # encoder_hidden (skip_decoder=False -> vqemb_size)
    hidden_size=32,
    skip_decoder=False,
    residual_layers=4,
    residual_channels=32,
    dilation_cycle_length=2,
    diffusion_use_film=False,
    diffusion_has_sattn=False,
    diffusion_sa_per_layer=1,
    pe_scale=1.0,
    detach_wavenet=True,
)


# ----------------------------------------------------------------------------- kernel
def wavnet_kernel(spec_ref, cond_ref, dstep_ref,
                  w_in_ref, b_in_ref, wc_ref, bc_ref, wk_ref,
                  wo_ref, bo_ref, ws_ref, bs_ref, wout_ref, bout_ref,
                  out_ref, cond_scr,
                  *, dilations, res_channels, halo, t_tile, total_t):
    """One (batch, time-tile) per grid step.  Channels-first: activations are [C, W]
    where W = t_tile + 2*halo (halo columns are recomputed and discarded)."""
    f32 = jnp.float32
    bf16 = jnp.bfloat16
    C = res_channels
    L = len(dilations)
    W = t_tile + 2 * halo

    spec = spec_ref[0, 0]                       # [M, W] bf16
    cond = cond_ref[0, 0]                       # [E, W] bf16

    # validity mask: 1.0 where the window column maps to a real sequence position.
    # Reproduces the dilated conv's zero padding at the true sequence boundaries.
    g = (jax.lax.broadcasted_iota(jnp.int32, (1, W), 1)
         + (pl.program_id(1) * t_tile - halo))
    valid = ((g >= 0) & (g < total_t)).astype(f32)                    # [1, W]

    # input_projection (1x1 conv) + ReLU                               -> [C, W] f32
    x = jnp.maximum(
        jnp.dot(w_in_ref[...], spec, preferred_element_type=f32) + b_in_ref[...],
        0.0)

    # all-layer conditioner_projection fused into one bf16 matmul      -> [L*2C, W]
    # (dilated-conv bias bk already folded into bc in the wrapper); staged through
    # a VMEM scratch so only a [2C, W] slice is live per layer.
    cond_scr[...] = (jnp.dot(wc_ref[...], cond, preferred_element_type=f32)
                     + bc_ref[...])

    skip_acc = jnp.zeros((C, W), f32)
    inv_sqrt2 = 1.0 / math.sqrt(2.0)

    for l, dil in enumerate(dilations):         # static unroll over residual layers
        # diffusion step (precomputed in the wrapper), broadcast over time
        y = x + dstep_ref[0, l]                                   # [C, W] + [C, 1]
        y = y * valid                                             # true zero padding
        y_bf = y.astype(bf16)

        # k=3 dilated conv: build prev/next taps in-register (shift + zero fill),
        # fuse the three taps into one K=3C MXU matmul.
        zcol = jnp.zeros((C, dil), bf16)
        prev = jnp.concatenate([zcol, y_bf[:, :W - dil]], axis=1)  # y[t - dil]
        nxt = jnp.concatenate([y_bf[:, dil:], zcol], axis=1)       # y[t + dil]
        stacked = jnp.concatenate([prev, y_bf, nxt], axis=0)       # [3C, W] bf16

        y2 = (jnp.dot(wk_ref[l], stacked, preferred_element_type=f32)
              + cond_scr[2 * C * l:2 * C * (l + 1), :])            # [2C, W] f32

        gate = y2[:C, :]
        filt = y2[C:, :]
        z = jax.nn.sigmoid(gate) * jnp.tanh(filt)                  # [C, W] f32 (EUP)

        # output_projection (1x1 conv C -> 2C), split residual / skip
        w = (jnp.dot(wo_ref[l], z.astype(bf16), preferred_element_type=f32)
             + bo_ref[l])                                          # [2C, W]
        x = (x + w[:C, :]) * inv_sqrt2
        skip_acc = skip_acc + w[C:, :]

    s = skip_acc * (1.0 / math.sqrt(float(L)))
    s = jnp.maximum(
        jnp.dot(ws_ref[...], s.astype(bf16), preferred_element_type=f32) + bs_ref[...],
        0.0)
    out = (jnp.dot(wout_ref[...], s.astype(bf16), preferred_element_type=f32)
           + bout_ref[...])                                        # [M, W] f32

    # write only the exact centre columns of the window
    out_ref[0] = out[:, halo:halo + t_tile]


# ----------------------------------------------------------------------------- wrapper
def wavnet_forward(spec, x_mask, diffusion_step, cond, spk, params, hp):
    """spec: [B, in_dims, T] (NCW), cond: [B, encoder_hidden, T], diffusion_step: [B]."""
    del x_mask, spk  # unused in this configuration (no FiLM / self-attention)
    B, M, T = spec.shape
    E = cond.shape[1]
    C = hp['residual_channels']
    L = hp['residual_layers']
    dilations = tuple(2 ** (i % hp['dilation_cycle_length']) for i in range(L))
    H = int(sum(dilations))          # receptive-field radius of the whole stack

    spec = spec.astype(jnp.float32)
    cond = cond.astype(jnp.float32)
    if hp['detach_wavenet']:
        cond = jax.lax.stop_gradient(cond)

    # ---- tiny scalar-side preprocessing in plain JAX (off the kernel critical path)
    # SinusoidalPosEmb + diffusion MLP (Mish via softplus) + per-layer diffusion_projection
    half = C // 2
    freqs = jnp.exp(jnp.arange(half, dtype=jnp.float32)
                    * -(math.log(10000.0) / (half - 1)))
    ang = diffusion_step.astype(jnp.float32)[:, None] * freqs[None, :] * hp['pe_scale']
    demb = jnp.concatenate([jnp.sin(ang), jnp.cos(ang)], axis=-1)            # [B, C]
    h = demb @ params['w1'].T + params['b1']                                 # [B, 4C]
    h = h * jnp.tanh(jax.nn.softplus(h))                                     # Mish
    d = h @ params['w2'].T + params['b2']                                    # [B, C]
    dstep = jnp.einsum('bc,loc->blo', d, params['wd']) + params['bd'][None]  # [B, L, C]
    dstep = dstep[..., None].astype(jnp.float32)                             # [B, L, C, 1]

    # ---- time tiling with halo recompute: overlapping bf16 windows (layout plumbing)
    tt = T
    for cand in (2048, 1024, 512, 256, 128):
        if cand <= T and T % cand == 0:
            tt = cand
            break
    nt = T // tt
    W = tt + 2 * H

    def window(a):   # [B, X, T] f32 -> [B, nt, X, W] bf16 overlapping windows
        ap = jnp.pad(a, ((0, 0), (0, 0), (H, H)))
        idx = (jnp.arange(nt) * tt)[:, None] + jnp.arange(W)[None, :]        # [nt, W]
        aw = ap[:, :, idx]                                                   # [B, X, nt, W]
        return jnp.transpose(aw, (0, 2, 1, 3)).astype(jnp.bfloat16)

    spec_w = window(spec)                                  # [B, nt, M, W]
    cond_w = window(cond)                                  # [B, nt, E, W]

    # ---- pre-pack weights: bf16 MXU operands, f32 biases [out, 1]
    bf = jnp.bfloat16
    w_in = params['w_in'].astype(bf)                       # [C, M]
    b_in = params['b_in'][:, None]                         # [C, 1]
    wc_all = params['wc'].reshape(L * 2 * C, -1).astype(bf)           # [L*2C, E]
    bc_all = (params['bc'] + params['bk']).reshape(L * 2 * C, 1)      # fold conv bias
    # conv weight [L, 2C, C, 3] -> [L, 2C, 3C] (column blocks = taps: prev, center, next)
    wk_mat = jnp.transpose(params['wk'], (0, 1, 3, 2)).reshape(L, 2 * C, 3 * C).astype(bf)
    wo = params['wo'].astype(bf)                           # [L, 2C, C]
    bo = params['bo'][..., None]                           # [L, 2C, 1]
    ws = params['ws'].astype(bf)                           # [C, C]
    bs = params['bs'][:, None]                             # [C, 1]
    wout = params['wout'].astype(bf)                       # [M, C]
    bout = params['bout'][:, None]                         # [M, 1]

    weights = [w_in, b_in, wc_all, bc_all, wk_mat, wo, bo, ws, bs, wout, bout]

    def const_spec(a):
        zeros = (0,) * a.ndim
        return pl.BlockSpec(a.shape, lambda b, t, _z=zeros: _z)

    in_specs = [
        pl.BlockSpec((1, 1, M, W), lambda b, t: (b, t, 0, 0)),
        pl.BlockSpec((1, 1, E, W), lambda b, t: (b, t, 0, 0)),
        pl.BlockSpec((1, L, C, 1), lambda b, t: (b, 0, 0, 0)),
    ] + [const_spec(w) for w in weights]

    kernel = functools.partial(
        wavnet_kernel, dilations=dilations, res_channels=C,
        halo=H, t_tile=tt, total_t=T)

    out = pl.pallas_call(
        kernel,
        out_shape=jax.ShapeDtypeStruct((B, M, T), jnp.float32),
        grid=(B, nt),
        in_specs=in_specs,
        out_specs=pl.BlockSpec((1, M, tt), lambda b, t: (b, 0, t)),
        scratch_shapes=[pltpu.VMEM((L * 2 * C, W), jnp.float32)],
        compiler_params=pltpu.CompilerParams(
            dimension_semantics=("parallel", "parallel")),
    )(spec_w, cond_w, dstep, *weights)

    return out   # PyTorch layout [B, in_dims, T]


# ----------------------------------------------------------------------------- reference
def wavnet_reference(spec, diffusion_step, cond, p, hp):
    """Pure-JAX (f32) NCW reference of the same forward math (mirrors the PyTorch module)."""
    B, M, T = spec.shape
    C = hp['residual_channels']
    L = hp['residual_layers']
    dilations = [2 ** (i % hp['dilation_cycle_length']) for i in range(L)]

    half = C // 2
    freqs = jnp.exp(jnp.arange(half, dtype=jnp.float32)
                    * -(math.log(10000.0) / (half - 1)))
    ang = diffusion_step.astype(jnp.float32)[:, None] * freqs[None, :] * hp['pe_scale']
    demb = jnp.concatenate([jnp.sin(ang), jnp.cos(ang)], axis=-1)
    h = demb @ p['w1'].T + p['b1']
    h = h * jnp.tanh(jax.nn.softplus(h))
    d = h @ p['w2'].T + p['b2']                                              # [B, C]

    x = jax.nn.relu(jnp.einsum('cm,bmt->bct', p['w_in'], spec)
                    + p['b_in'][None, :, None])
    skip_sum = jnp.zeros((B, C, T), jnp.float32)
    for l, dil in enumerate(dilations):
        ds_l = d @ p['wd'][l].T + p['bd'][l]                                 # [B, C]
        y = x + ds_l[:, :, None]
        condp = (jnp.einsum('oe,bet->bot', p['wc'][l], cond)
                 + p['bc'][l][None, :, None])
        ypad = jnp.pad(y, ((0, 0), (0, 0), (dil, dil)))
        y2 = (jnp.einsum('oc,bct->bot', p['wk'][l, :, :, 0], ypad[:, :, :T])
              + jnp.einsum('oc,bct->bot', p['wk'][l, :, :, 1], ypad[:, :, dil:dil + T])
              + jnp.einsum('oc,bct->bot', p['wk'][l, :, :, 2], ypad[:, :, 2 * dil:2 * dil + T])
              + p['bk'][l][None, :, None] + condp)
        gate, filt = y2[:, :C], y2[:, C:]
        z = jax.nn.sigmoid(gate) * jnp.tanh(filt)
        w = jnp.einsum('oc,bct->bot', p['wo'][l], z) + p['bo'][l][None, :, None]
        x = (x + w[:, :C]) / math.sqrt(2.0)
        skip_sum = skip_sum + w[:, C:]
    s = skip_sum / math.sqrt(float(L))
    s = jax.nn.relu(jnp.einsum('oc,bct->bot', p['ws'], s) + p['bs'][None, :, None])
    return jnp.einsum('mc,bct->bmt', p['wout'], s) + p['bout'][None, :, None]


# ----------------------------------------------------------------------------- params
def init_params(key, in_dims, C, E, L):
    ks = iter(jax.random.split(key, 24))

    def rnd(shape, scale=0.1):
        return (scale * jax.random.normal(next(ks), shape)).astype(jnp.float32)

    p = {}
    p['w_in'] = rnd((C, in_dims));      p['b_in'] = rnd((C,))          # input_projection
    p['w1'] = rnd((4 * C, C));          p['b1'] = rnd((4 * C,))        # mlp[0]
    p['w2'] = rnd((C, 4 * C));          p['b2'] = rnd((C,))            # mlp[2]
    p['wd'] = rnd((L, C, C));           p['bd'] = rnd((L, C))          # diffusion_projection
    p['wc'] = rnd((L, 2 * C, E));       p['bc'] = rnd((L, 2 * C))      # conditioner_projection
    p['wk'] = rnd((L, 2 * C, C, 3));    p['bk'] = rnd((L, 2 * C))      # dilated_conv (k=3)
    p['wo'] = rnd((L, 2 * C, C));       p['bo'] = rnd((L, 2 * C))      # output_projection (layer)
    p['ws'] = rnd((C, C));              p['bs'] = rnd((C,))            # skip_projection
    p['wout'] = rnd((in_dims, C));      p['bout'] = rnd((in_dims,))    # final output_projection
    # TODO(synk): PyTorch zero-inits final output_projection.weight; small random
    # weights are used instead so the synthetic check exercises the full data path.
    return p


# ----------------------------------------------------------------------------- main
if __name__ == "__main__":
    hp = HPARAMS
    B, M, T = 2, 16, 128                       # batch, in_dims (mel bins), time
    C = hp['residual_channels']
    E = hp['vqemb_size']
    L = hp['residual_layers']

    key = jax.random.PRNGKey(0)
    k1, k2, k3, kp = jax.random.split(key, 4)
    spec = jax.random.normal(k1, (B, M, T), jnp.float32)          # [B, in_dims, T]
    cond = jax.random.normal(k2, (B, E, T), jnp.float32)          # [B, encoder_hidden, T]
    diffusion_step = jax.random.uniform(k3, (B,), jnp.float32, 0.0, 100.0)
    x_mask = jnp.ones((B, 1, T), jnp.float32)                     # unused by forward
    params = init_params(kp, M, C, E, L)

    out = wavnet_forward(spec, x_mask, diffusion_step, cond, None, params, hp)
    out = jax.block_until_ready(out)

    ref = wavnet_reference(spec, diffusion_step, cond, params, hp)
    assert out.shape == (B, M, T)
    # bf16 MXU operands vs. f32 reference -> loosened tolerance (per review note).
    assert jnp.allclose(out, ref, atol=5e-2, rtol=5e-2), "mismatch vs reference"

    print("KERNEL_OK")
</pallas_src>

<mosaic_0001>
module attributes {stable_mosaic.version = 11 : i64} {
  func.func @wavnet_kernel(%arg0: i32, %arg1: i32, %arg2: memref<1x1x16x140xbf16, #tpu.memory_space<vmem>>, %arg3: memref<1x1x32x140xbf16, #tpu.memory_space<vmem>>, %arg4: memref<1x4x32x1xf32, #tpu.memory_space<vmem>>, %arg5: memref<32x16xbf16, #tpu.memory_space<vmem>>, %arg6: memref<32x1xf32, #tpu.memory_space<vmem>>, %arg7: memref<256x32xbf16, #tpu.memory_space<vmem>>, %arg8: memref<256x1xf32, #tpu.memory_space<vmem>>, %arg9: memref<4x64x96xbf16, #tpu.memory_space<vmem>>, %arg10: memref<4x64x32xbf16, #tpu.memory_space<vmem>>, %arg11: memref<4x64x1xf32, #tpu.memory_space<vmem>>, %arg12: memref<32x32xbf16, #tpu.memory_space<vmem>>, %arg13: memref<32x1xf32, #tpu.memory_space<vmem>>, %arg14: memref<16x32xbf16, #tpu.memory_space<vmem>>, %arg15: memref<16x1xf32, #tpu.memory_space<vmem>>, %arg16: memref<1x16x128xf32, #tpu.memory_space<vmem>>, %arg17: memref<256x140xf32, #tpu.memory_space<vmem>>) attributes {dimension_semantics = [#tpu.dimension_semantics<parallel>, #tpu.dimension_semantics<parallel>], iteration_bounds = array<i64: 2, 1>, scalar_prefetch = 0 : i64, scratch_operands = 1 : i64, tpu.core_type = #tpu.core_type<tc>, window_params = [{transform_indices = @transform_0, window_bounds = array<i64: 1, 1, 16, 140>}, {transform_indices = @transform_1, window_bounds = array<i64: 1, 1, 32, 140>}, {transform_indices = @transform_2, window_bounds = array<i64: 1, 4, 32, 1>}, {pipeline_mode = #tpu.pipeline_mode<synchronous>, transform_indices = @transform_3, window_bounds = array<i64: 32, 16>}, {pipeline_mode = #tpu.pipeline_mode<synchronous>, transform_indices = @transform_4, window_bounds = array<i64: 32, 1>}, {pipeline_mode = #tpu.pipeline_mode<synchronous>, transform_indices = @transform_5, window_bounds = array<i64: 256, 32>}, {pipeline_mode = #tpu.pipeline_mode<synchronous>, transform_indices = @transform_6, window_bounds = array<i64: 256, 1>}, {pipeline_mode = #tpu.pipeline_mode<synchronous>, transform_indices = @transform_7, window_bounds = array<i64: 4, 64, 96>}, {pipeline_mode = #tpu.pipeline_mode<synchronous>, transform_indices = @transform_8, window_bounds = array<i64: 4, 64, 32>}, {pipeline_mode = #tpu.pipeline_mode<synchronous>, transform_indices = @transform_9, window_bounds = array<i64: 4, 64, 1>}, {pipeline_mode = #tpu.pipeline_mode<synchronous>, transform_indices = @transform_10, window_bounds = array<i64: 32, 32>}, {pipeline_mode = #tpu.pipeline_mode<synchronous>, transform_indices = @transform_11, window_bounds = array<i64: 32, 1>}, {pipeline_mode = #tpu.pipeline_mode<synchronous>, transform_indices = @transform_12, window_bounds = array<i64: 16, 32>}, {pipeline_mode = #tpu.pipeline_mode<synchronous>, transform_indices = @transform_13, window_bounds = array<i64: 16, 1>}, {transform_indices = @transform_14, window_bounds = array<i64: 1, 16, 128>}]} {
    %c0 = arith.constant 0 : index
    %c0_0 = arith.constant 0 : index
    %c0_1 = arith.constant 0 : index
    %c0_2 = arith.constant 0 : index
    %0 = vector.load %arg2[%c0, %c0_0, %c0_1, %c0_2] : memref<1x1x16x140xbf16, #tpu.memory_space<vmem>>, vector<1x1x16x140xbf16>
    %1 = vector.shape_cast %0 : vector<1x1x16x140xbf16> to vector<16x140xbf16>
    %c0_3 = arith.constant 0 : index
    %c0_4 = arith.constant 0 : index
    %c0_5 = arith.constant 0 : index
    %c0_6 = arith.constant 0 : index
    %2 = vector.load %arg3[%c0_3, %c0_4, %c0_5, %c0_6] : memref<1x1x32x140xbf16, #tpu.memory_space<vmem>>, vector<1x1x32x140xbf16>
    %3 = vector.shape_cast %2 : vector<1x1x32x140xbf16> to vector<32x140xbf16>
    %4 = tpu.iota {dimensions = array<i32: 1>} : vector<1x140xi32>
    %c128_i32 = arith.constant 128 : i32
    %5 = arith.muli %arg1, %c128_i32 : i32
    %c6_i32 = arith.constant 6 : i32
    %6 = arith.subi %5, %c6_i32 : i32
    %7 = vector.broadcast %6 : i32 to vector<1x140xi32>
    %8 = arith.addi %4, %7 : vector<1x140xi32>
    %c0_i32 = arith.constant 0 : i32
    %9 = vector.broadcast %c0_i32 : i32 to vector<1x140xi32>
    %10 = arith.cmpi sge, %8, %9 : vector<1x140xi32>
    %c128_i32_7 = arith.constant 128 : i32
    %11 = vector.broadcast %c128_i32_7 : i32 to vector<1x140xi32>
    %12 = arith.cmpi slt, %8, %11 : vector<1x140xi32>
    %13 = arith.andi %10, %12 : vector<1x140xi1>
    %14 = arith.extui %13 : vector<1x140xi1> to vector<1x140xi32>
    %15 = arith.sitofp %14 : vector<1x140xi32> to vector<1x140xf32>
    %c0_8 = arith.constant 0 : index
    %c0_9 = arith.constant 0 : index
    %16 = vector.load %arg5[%c0_8, %c0_9] : memref<32x16xbf16, #tpu.memory_space<vmem>>, vector<32x16xbf16>
    %cst = arith.constant dense<0.000000e+00> : vector<32x140xf32>
    %17 = tpu.matmul %16, %1, %cst {dimension_numbers = #tpu.dot_dimension_numbers<[1], [0], [0], [1], [0, 0, 1, 1], [], []>} : vector<32x16xbf16>, vector<16x140xbf16>, vector<32x140xf32> -> vector<32x140xf32>
    %c0_10 = arith.constant 0 : index
    %c0_11 = arith.constant 0 : index
    %18 = vector.load %arg6[%c0_10, %c0_11] : memref<32x1xf32, #tpu.memory_space<vmem>>, vector<32x1xf32>
    %19 = vector.broadcast %18 : vector<32x1xf32> to vector<32x140xf32>
    %20 = arith.addf %17, %19 : vector<32x140xf32>
    %cst_12 = arith.constant 0.000000e+00 : f32
    %21 = vector.broadcast %cst_12 : f32 to vector<32x140xf32>
    %22 = arith.maximumf %20, %21 : vector<32x140xf32>
    %c0_13 = arith.constant 0 : index
    %c0_14 = arith.constant 0 : index
    %23 = vector.load %arg7[%c0_13, %c0_14] : memref<256x32xbf16, #tpu.memory_space<vmem>>, vector<256x32xbf16>
    %cst_15 = arith.constant dense<0.000000e+00> : vector<256x140xf32>
    %24 = tpu.matmul %23, %3, %cst_15 {dimension_numbers = #tpu.dot_dimension_numbers<[1], [0], [0], [1], [0, 0, 1, 1], [], []>} : vector<256x32xbf16>, vector<32x140xbf16>, vector<256x140xf32> -> vector<256x140xf32>
    %c0_16 = arith.constant 0 : index
    %c0_17 = arith.constant 0 : index
    %25 = vector.load %arg8[%c0_16, %c0_17] : memref<256x1xf32, #tpu.memory_space<vmem>>, vector<256x1xf32>
    %26 = vector.broadcast %25 : vector<256x1xf32> to vector<256x140xf32>
    %27 = arith.addf %24, %26 : vector<256x140xf32>
    %c0_18 = arith.constant 0 : index
    %c0_19 = arith.constant 0 : index
    %28 = vector.load %arg17[%c0_18, %c0_19] : memref<256x140xf32, #tpu.memory_space<vmem>>, vector<256x140xf32>
    tpu.vector_store %arg17[%c0_18, %c0_19], %27 {strides = array<i32>} : memref<256x140xf32, #tpu.memory_space<vmem>>, vector<256x140xf32>,
    %cst_20 = arith.constant 0.000000e+00 : f32
    %29 = vector.broadcast %cst_20 : f32 to vector<32x140xf32>
    %c0_21 = arith.constant 0 : index
    %c0_22 = arith.constant 0 : index
    %c0_23 = arith.constant 0 : index
    %c0_24 = arith.constant 0 : index
    %30 = vector.load %arg4[%c0_21, %c0_22, %c0_23, %c0_24] : memref<1x4x32x1xf32, #tpu.memory_space<vmem>>, vector<1x1x32x1xf32>
    %31 = vector.shape_cast %30 : vector<1x1x32x1xf32> to vector<32x1xf32>
    %32 = vector.broadcast %31 : vector<32x1xf32> to vector<32x140xf32>
    %33 = arith.addf %22, %32 : vector<32x140xf32>
    %34 = vector.broadcast %15 : vector<1x140xf32> to vector<32x140xf32>
    %35 = arith.mulf %33, %34 : vector<32x140xf32>
    %36 = arith.truncf %35 : vector<32x140xf32> to vector<32x140xbf16>
    %cst_25 = arith.constant 0.000000e+00 : bf16
    %37 = vector.broadcast %cst_25 : bf16 to vector<32x1xbf16>
    %38 = vector.extract_strided_slice %36 {offsets = [0, 0], sizes = [32, 139], strides = [1, 1]} : vector<32x140xbf16> to vector<32x139xbf16>
    %39 = tpu.concatenate %37, %38 in 1 : vector<32x1xbf16>, vector<32x139xbf16> -> vector<32x140xbf16>
    %40 = vector.extract_strided_slice %36 {offsets = [0, 1], sizes = [32, 139], strides = [1, 1]} : vector<32x140xbf16> to vector<32x139xbf16>
    %41 = tpu.concatenate %40, %37 in 1 : vector<32x139xbf16>, vector<32x1xbf16> -> vector<32x140xbf16>
    %42 = tpu.concatenate %39, %36, %41 in 0 : vector<32x140xbf16>, vector<32x140xbf16>, vector<32x140xbf16> -> vector<96x140xbf16>
    %c0_26 = arith.constant 0 : index
    %c0_27 = arith.constant 0 : index
    %c0_28 = arith.constant 0 : index
    %43 = vector.load %arg9[%c0_26, %c0_27, %c0_28] : memref<4x64x96xbf16, #tpu.memory_space<vmem>>, vector<1x64x96xbf16>
    %44 = vector.shape_cast %43 : vector<1x64x96xbf16> to vector<64x96xbf16>
    %cst_29 = arith.constant dense<0.000000e+00> : vector<64x140xf32>
    %45 = tpu.matmul %44, %42, %cst_29 {dimension_numbers = #tpu.dot_dimension_numbers<[1], [0], [0], [1], [0, 0, 1, 1], [], []>} : vector<64x96xbf16>, vector<96x140xbf16>, vector<64x140xf32> -> vector<64x140xf32>
    %c0_30 = arith.constant 0 : index
    %c0_31 = arith.constant 0 : index
    %46 = vector.load %arg17[%c0_30, %c0_31] : memref<256x140xf32, #tpu.memory_space<vmem>>, vector<64x140xf32>
    %47 = arith.addf %45, %46 : vector<64x140xf32>
    %48 = vector.extract_strided_slice %47 {offsets = [0, 0], sizes = [32, 140], strides = [1, 1]} : vector<64x140xf32> to vector<32x140xf32>
    %49 = vector.extract_strided_slice %47 {offsets = [32, 0], sizes = [32, 140], strides = [1, 1]} : vector<64x140xf32> to vector<32x140xf32>
    %50 = arith.negf %48 : vector<32x140xf32>
    %51 = math.exp %50 : vector<32x140xf32>
    %cst_32 = arith.constant 1.000000e+00 : f32
    %52 = vector.broadcast %cst_32 : f32 to vector<32x140xf32>
    %53 = arith.addf %52, %51 : vector<32x140xf32>
    %54 = arith.divf %52, %53 : vector<32x140xf32>
    %55 = math.tanh %49 : vector<32x140xf32>
    %56 = arith.mulf %54, %55 : vector<32x140xf32>
    %c0_33 = arith.constant 0 : index
    %c0_34 = arith.constant 0 : index
    %c0_35 = arith.constant 0 : index
    %57 = vector.load %arg10[%c0_33, %c0_34, %c0_35] : memref<4x64x32xbf16, #tpu.memory_space<vmem>>, vector<1x64x32xbf16>
    %58 = vector.shape_cast %57 : vector<1x64x32xbf16> to vector<64x32xbf16>
    %59 = arith.truncf %56 : vector<32x140xf32> to vector<32x140xbf16>
    %cst_36 = arith.constant dense<0.000000e+00> : vector<64x140xf32>
    %60 = tpu.matmul %58, %59, %cst_36 {dimension_numbers = #tpu.dot_dimension_numbers<[1], [0], [0], [1], [0, 0, 1, 1], [], []>} : vector<64x32xbf16>, vector<32x140xbf16>, vector<64x140xf32> -> vector<64x140xf32>
    %c0_37 = arith.constant 0 : index
    %c0_38 = arith.constant 0 : index
    %c0_39 = arith.constant 0 : index
    %61 = vector.load %arg11[%c0_37, %c0_38, %c0_39] : memref<4x64x1xf32, #tpu.memory_space<vmem>>, vector<1x64x1xf32>
    %62 = vector.shape_cast %61 : vector<1x64x1xf32> to vector<64x1xf32>
    %63 = vector.broadcast %62 : vector<64x1xf32> to vector<64x140xf32>
    %64 = arith.addf %60, %63 : vector<64x140xf32>
    %65 = vector.extract_strided_slice %64 {offsets = [0, 0], sizes = [32, 140], strides = [1, 1]} : vector<64x140xf32> to vector<32x140xf32>
    %66 = arith.addf %22, %65 : vector<32x140xf32>
    %cst_40 = arith.constant 0.707106769 : f32
    %67 = vector.broadcast %cst_40 : f32 to vector<32x140xf32>
    %68 = arith.mulf %66, %67 : vector<32x140xf32>
    %69 = vector.extract_strided_slice %64 {offsets = [32, 0], sizes = [32, 140], strides = [1, 1]} : vector<64x140xf32> to vector<32x140xf32>
    %70 = arith.addf %29, %69 : vector<32x140xf32>
    %c0_41 = arith.constant 0 : index
    %c1 = arith.constant 1 : index
    %c0_42 = arith.constant 0 : index
    %c0_43 = arith.constant 0 : index
    %71 = vector.load %arg4[%c0_41, %c1, %c0_42, %c0_43] : memref<1x4x32x1xf32, #tpu.memory_space<vmem>>, vector<1x1x32x1xf32>
    %72 = vector.shape_cast %71 : vector<1x1x32x1xf32> to vector<32x1xf32>
    %73 = vector.broadcast %72 : vector<32x1xf32> to vector<32x140xf32>
    %74 = arith.addf %68, %73 : vector<32x140xf32>
    %75 = vector.broadcast %15 : vector<1x140xf32> to vector<32x140xf32>
    %76 = arith.mulf %74, %75 : vector<32x140xf32>
    %77 = arith.truncf %76 : vector<32x140xf32> to vector<32x140xbf16>
    %cst_44 = arith.constant 0.000000e+00 : bf16
    %78 = vector.broadcast %cst_44 : bf16 to vector<32x2xbf16>
    %79 = vector.extract_strided_slice %77 {offsets = [0, 0], sizes = [32, 138], strides = [1, 1]} : vector<32x140xbf16> to vector<32x138xbf16>
    %80 = tpu.concatenate %78, %79 in 1 : vector<32x2xbf16>, vector<32x138xbf16> -> vector<32x140xbf16>
    %81 = vector.extract_strided_slice %77 {offsets = [0, 2], sizes = [32, 138], strides = [1, 1]} : vector<32x140xbf16> to vector<32x138xbf16>
    %82 = tpu.concatenate %81, %78 in 1 : vector<32x138xbf16>, vector<32x2xbf16> -> vector<32x140xbf16>
    %83 = tpu.concatenate %80, %77, %82 in 0 : vector<32x140xbf16>, vector<32x140xbf16>, vector<32x140xbf16> -> vector<96x140xbf16>
    %c1_45 = arith.constant 1 : index
    %c0_46 = arith.constant 0 : index
    %c0_47 = arith.constant 0 : index
    %84 = vector.load %arg9[%c1_45, %c0_46, %c0_47] : memref<4x64x96xbf16, #tpu.memory_space<vmem>>, vector<1x64x96xbf16>
    %85 = vector.shape_cast %84 : vector<1x64x96xbf16> to vector<64x96xbf16>
    %cst_48 = arith.constant dense<0.000000e+00> : vector<64x140xf32>
    %86 = tpu.matmul %85, %83, %cst_48 {dimension_numbers = #tpu.dot_dimension_numbers<[1], [0], [0], [1], [0, 0, 1, 1], [], []>} : vector<64x96xbf16>, vector<96x140xbf16>, vector<64x140xf32> -> vector<64x140xf32>
    %c64 = arith.constant 64 : index
    %c0_49 = arith.constant 0 : index
    %87 = vector.load %arg17[%c64, %c0_49] : memref<256x140xf32, #tpu.memory_space<vmem>>, vector<64x140xf32>
    %88 = arith.addf %86, %87 : vector<64x140xf32>
    %89 = vector.extract_strided_slice %88 {offsets = [0, 0], sizes = [32, 140], strides = [1, 1]} : vector<64x140xf32> to vector<32x140xf32>
    %90 = vector.extract_strided_slice %88 {offsets = [32, 0], sizes = [32, 140], strides = [1, 1]} : vector<64x140xf32> to vector<32x140xf32>
    %91 = arith.negf %89 : vector<32x140xf32>
    %92 = math.exp %91 : vector<32x140xf32>
    %cst_50 = arith.constant 1.000000e+00 : f32
    %93 = vector.broadcast %cst_50 : f32 to vector<32x140xf32>
    %94 = arith.addf %93, %92 : vector<32x140xf32>
    %95 = arith.divf %93, %94 : vector<32x140xf32>
    %96 = math.tanh %90 : vector<32x140xf32>
    %97 = arith.mulf %95, %96 : vector<32x140xf32>
    %c1_51 = arith.constant 1 : index
    %c0_52 = arith.constant 0 : index
    %c0_53 = arith.constant 0 : index
    %98 = vector.load %arg10[%c1_51, %c0_52, %c0_53] : memref<4x64x32xbf16, #tpu.memory_space<vmem>>, vector<1x64x32xbf16>
    %99 = vector.shape_cast %98 : vector<1x64x32xbf16> to vector<64x32xbf16>
    %100 = arith.truncf %97 : vector<32x140xf32> to vector<32x140xbf16>
    %cst_54 = arith.constant dense<0.000000e+00> : vector<64x140xf32>
    %101 = tpu.matmul %99, %100, %cst_54 {dimension_numbers = #tpu.dot_dimension_numbers<[1], [0], [0], [1], [0, 0, 1, 1], [], []>} : vector<64x32xbf16>, vector<32x140xbf16>, vector<64x140xf32> -> vector<64x140xf32>
    %c1_55 = arith.constant 1 : index
    %c0_56 = arith.constant 0 : index
    %c0_57 = arith.constant 0 : index
    %102 = vector.load %arg11[%c1_55, %c0_56, %c0_57] : memref<4x64x1xf32, #tpu.memory_space<vmem>>, vector<1x64x1xf32>
    %103 = vector.shape_cast %102 : vector<1x64x1xf32> to vector<64x1xf32>
    %104 = vector.broadcast %103 : vector<64x1xf32> to vector<64x140xf32>
    %105 = arith.addf %101, %104 : vector<64x140xf32>
    %106 = vector.extract_strided_slice %105 {offsets = [0, 0], sizes = [32, 140], strides = [1, 1]} : vector<64x140xf32> to vector<32x140xf32>
    %107 = arith.addf %68, %106 : vector<32x140xf32>
    %cst_58 = arith.constant 0.707106769 : f32
    %108 = vector.broadcast %cst_58 : f32 to vector<32x140xf32>
    %109 = arith.mulf %107, %108 : vector<32x140xf32>
    %110 = vector.extract_strided_slice %105 {offsets = [32, 0], sizes = [32, 140], strides = [1, 1]} : vector<64x140xf32> to vector<32x140xf32>
    %111 = arith.addf %70, %110 : vector<32x140xf32>
    %c0_59 = arith.constant 0 : index
    %c2 = arith.constant 2 : index
    %c0_60 = arith.constant 0 : index
    %c0_61 = arith.constant 0 : index
    %112 = vector.load %arg4[%c0_59, %c2, %c0_60, %c0_61] : memref<1x4x32x1xf32, #tpu.memory_space<vmem>>, vector<1x1x32x1xf32>
    %113 = vector.shape_cast %112 : vector<1x1x32x1xf32> to vector<32x1xf32>
    %114 = vector.broadcast %113 : vector<32x1xf32> to vector<32x140xf32>
    %115 = arith.addf %109, %114 : vector<32x140xf32>
    %116 = vector.broadcast %15 : vector<1x140xf32> to vector<32x140xf32>
    %117 = arith.mulf %115, %116 : vector<32x140xf32>
    %118 = arith.truncf %117 : vector<32x140xf32> to vector<32x140xbf16>
    %cst_62 = arith.constant 0.000000e+00 : bf16
    %119 = vector.broadcast %cst_62 : bf16 to vector<32x1xbf16>
    %120 = vector.extract_strided_slice %118 {offsets = [0, 0], sizes = [32, 139], strides = [1, 1]} : vector<32x140xbf16> to vector<32x139xbf16>
    %121 = tpu.concatenate %119, %120 in 1 : vector<32x1xbf16>, vector<32x139xbf16> -> vector<32x140xbf16>
    %122 = vector.extract_strided_slice %118 {offsets = [0, 1], sizes = [32, 139], strides = [1, 1]} : vector<32x140xbf16> to vector<32x139xbf16>
    %123 = tpu.concatenate %122, %119 in 1 : vector<32x139xbf16>, vector<32x1xbf16> -> vector<32x140xbf16>
    %124 = tpu.concatenate %121, %118, %123 in 0 : vector<32x140xbf16>, vector<32x140xbf16>, vector<32x140xbf16> -> vector<96x140xbf16>
    %c2_63 = arith.constant 2 : index
    %c0_64 = arith.constant 0 : index
    %c0_65 = arith.constant 0 : index
    %125 = vector.load %arg9[%c2_63, %c0_64, %c0_65] : memref<4x64x96xbf16, #tpu.memory_space<vmem>>, vector<1x64x96xbf16>
    %126 = vector.shape_cast %125 : vector<1x64x96xbf16> to vector<64x96xbf16>
    %cst_66 = arith.constant dense<0.000000e+00> : vector<64x140xf32>
    %127 = tpu.matmul %126, %124, %cst_66 {dimension_numbers = #tpu.dot_dimension_numbers<[1], [0], [0], [1], [0, 0, 1, 1], [], []>} : vector<64x96xbf16>, vector<96x140xbf16>, vector<64x140xf32> -> vector<64x140xf32>
    %c128 = arith.constant 128 : index
    %c0_67 = arith.constant 0 : index
    %128 = vector.load %arg17[%c128, %c0_67] : memref<256x140xf32, #tpu.memory_space<vmem>>, vector<64x140xf32>
    %129 = arith.addf %127, %128 : vector<64x140xf32>
    %130 = vector.extract_strided_slice %129 {offsets = [0, 0], sizes = [32, 140], strides = [1, 1]} : vector<64x140xf32> to vector<32x140xf32>
    %131 = vector.extract_strided_slice %129 {offsets = [32, 0], sizes = [32, 140], strides = [1, 1]} : vector<64x140xf32> to vector<32x140xf32>
    %132 = arith.negf %130 : vector<32x140xf32>
    %133 = math.exp %132 : vector<32x140xf32>
    %cst_68 = arith.constant 1.000000e+00 : f32
    %134 = vector.broadcast %cst_68 : f32 to vector<32x140xf32>
    %135 = arith.addf %134, %133 : vector<32x140xf32>
    %136 = arith.divf %134, %135 : vector<32x140xf32>
    %137 = math.tanh %131 : vector<32x140xf32>
    %138 = arith.mulf %136, %137 : vector<32x140xf32>
    %c2_69 = arith.constant 2 : index
    %c0_70 = arith.constant 0 : index
    %c0_71 = arith.constant 0 : index
    %139 = vector.load %arg10[%c2_69, %c0_70, %c0_71] : memref<4x64x32xbf16, #tpu.memory_space<vmem>>, vector<1x64x32xbf16>
    %140 = vector.shape_cast %139 : vector<1x64x32xbf16> to vector<64x32xbf16>
    %141 = arith.truncf %138 : vector<32x140xf32> to vector<32x140xbf16>
    %cst_72 = arith.constant dense<0.000000e+00> : vector<64x140xf32>
    %142 = tpu.matmul %140, %141, %cst_72 {dimension_numbers = #tpu.dot_dimension_numbers<[1], [0], [0], [1], [0, 0, 1, 1], [], []>} : vector<64x32xbf16>, vector<32x140xbf16>, vector<64x140xf32> -> vector<64x140xf32>
    %c2_73 = arith.constant 2 : index
    %c0_74 = arith.constant 0 : index
    %c0_75 = arith.constant 0 : index
    %143 = vector.load %arg11[%c2_73, %c0_74, %c0_75] : memref<4x64x1xf32, #tpu.memory_space<vmem>>, vector<1x64x1xf32>
    %144 = vector.shape_cast %143 : vector<1x64x1xf32> to vector<64x1xf32>
    %145 = vector.broadcast %144 : vector<64x1xf32> to vector<64x140xf32>
    %146 = arith.addf %142, %145 : vector<64x140xf32>
    %147 = vector.extract_strided_slice %146 {offsets = [0, 0], sizes = [32, 140], strides = [1, 1]} : vector<64x140xf32> to vector<32x140xf32>
    %148 = arith.addf %109, %147 : vector<32x140xf32>
    %cst_76 = arith.constant 0.707106769 : f32
    %149 = vector.broadcast %cst_76 : f32 to vector<32x140xf32>
    %150 = arith.mulf %148, %149 : vector<32x140xf32>
    %151 = vector.extract_strided_slice %146 {offsets = [32, 0], sizes = [32, 140], strides = [1, 1]} : vector<64x140xf32> to vector<32x140xf32>
    %152 = arith.addf %111, %151 : vector<32x140xf32>
    %c0_77 = arith.constant 0 : index
    %c3 = arith.constant 3 : index
    %c0_78 = arith.constant 0 : index
    %c0_79 = arith.constant 0 : index
    %153 = vector.load %arg4[%c0_77, %c3, %c0_78, %c0_79] : memref<1x4x32x1xf32, #tpu.memory_space<vmem>>, vector<1x1x32x1xf32>
    %154 = vector.shape_cast %153 : vector<1x1x32x1xf32> to vector<32x1xf32>
    %155 = vector.broadcast %154 : vector<32x1xf32> to vector<32x140xf32>
    %156 = arith.addf %150, %155 : vector<32x140xf32>
    %157 = vector.broadcast %15 : vector<1x140xf32> to vector<32x140xf32>
    %158 = arith.mulf %156, %157 : vector<32x140xf32>
    %159 = arith.truncf %158 : vector<32x140xf32> to vector<32x140xbf16>
    %cst_80 = arith.constant 0.000000e+00 : bf16
    %160 = vector.broadcast %cst_80 : bf16 to vector<32x2xbf16>
    %161 = vector.extract_strided_slice %159 {offsets = [0, 0], sizes = [32, 138], strides = [1, 1]} : vector<32x140xbf16> to vector<32x138xbf16>
    %162 = tpu.concatenate %160, %161 in 1 : vector<32x2xbf16>, vector<32x138xbf16> -> vector<32x140xbf16>
    %163 = vector.extract_strided_slice %159 {offsets = [0, 2], sizes = [32, 138], strides = [1, 1]} : vector<32x140xbf16> to vector<32x138xbf16>
    %164 = tpu.concatenate %163, %160 in 1 : vector<32x138xbf16>, vector<32x2xbf16> -> vector<32x140xbf16>
    %165 = tpu.concatenate %162, %159, %164 in 0 : vector<32x140xbf16>, vector<32x140xbf16>, vector<32x140xbf16> -> vector<96x140xbf16>
    %c3_81 = arith.constant 3 : index
    %c0_82 = arith.constant 0 : index
    %c0_83 = arith.constant 0 : index
    %166 = vector.load %arg9[%c3_81, %c0_82, %c0_83] : memref<4x64x96xbf16, #tpu.memory_space<vmem>>, vector<1x64x96xbf16>
    %167 = vector.shape_cast %166 : vector<1x64x96xbf16> to vector<64x96xbf16>
    %cst_84 = arith.constant dense<0.000000e+00> : vector<64x140xf32>
    %168 = tpu.matmul %167, %165, %cst_84 {dimension_numbers = #tpu.dot_dimension_numbers<[1], [0], [0], [1], [0, 0, 1, 1], [], []>} : vector<64x96xbf16>, vector<96x140xbf16>, vector<64x140xf32> -> vector<64x140xf32>
    %c192 = arith.constant 192 : index
    %c0_85 = arith.constant 0 : index
    %169 = vector.load %arg17[%c192, %c0_85] : memref<256x140xf32, #tpu.memory_space<vmem>>, vector<64x140xf32>
    %170 = arith.addf %168, %169 : vector<64x140xf32>
    %171 = vector.extract_strided_slice %170 {offsets = [0, 0], sizes = [32, 140], strides = [1, 1]} : vector<64x140xf32> to vector<32x140xf32>
    %172 = vector.extract_strided_slice %170 {offsets = [32, 0], sizes = [32, 140], strides = [1, 1]} : vector<64x140xf32> to vector<32x140xf32>
    %173 = arith.negf %171 : vector<32x140xf32>
    %174 = math.exp %173 : vector<32x140xf32>
    %cst_86 = arith.constant 1.000000e+00 : f32
    %175 = vector.broadcast %cst_86 : f32 to vector<32x140xf32>
    %176 = arith.addf %175, %174 : vector<32x140xf32>
    %177 = arith.divf %175, %176 : vector<32x140xf32>
    %178 = math.tanh %172 : vector<32x140xf32>
    %179 = arith.mulf %177, %178 : vector<32x140xf32>
    %c3_87 = arith.constant 3 : index
    %c0_88 = arith.constant 0 : index
    %c0_89 = arith.constant 0 : index
    %180 = vector.load %arg10[%c3_87, %c0_88, %c0_89] : memref<4x64x32xbf16, #tpu.memory_space<vmem>>, vector<1x64x32xbf16>
    %181 = vector.shape_cast %180 : vector<1x64x32xbf16> to vector<64x32xbf16>
    %182 = arith.truncf %179 : vector<32x140xf32> to vector<32x140xbf16>
    %cst_90 = arith.constant dense<0.000000e+00> : vector<64x140xf32>
    %183 = tpu.matmul %181, %182, %cst_90 {dimension_numbers = #tpu.dot_dimension_numbers<[1], [0], [0], [1], [0, 0, 1, 1], [], []>} : vector<64x32xbf16>, vector<32x140xbf16>, vector<64x140xf32> -> vector<64x140xf32>
    %c3_91 = arith.constant 3 : index
    %c0_92 = arith.constant 0 : index
    %c0_93 = arith.constant 0 : index
    %184 = vector.load %arg11[%c3_91, %c0_92, %c0_93] : memref<4x64x1xf32, #tpu.memory_space<vmem>>, vector<1x64x1xf32>
    %185 = vector.shape_cast %184 : vector<1x64x1xf32> to vector<64x1xf32>
    %186 = vector.broadcast %185 : vector<64x1xf32> to vector<64x140xf32>
    %187 = arith.addf %183, %186 : vector<64x140xf32>
    %188 = vector.extract_strided_slice %187 {offsets = [32, 0], sizes = [32, 140], strides = [1, 1]} : vector<64x140xf32> to vector<32x140xf32>
    %189 = arith.addf %152, %188 : vector<32x140xf32>
    %cst_94 = arith.constant 5.000000e-01 : f32
    %190 = vector.broadcast %cst_94 : f32 to vector<32x140xf32>
    %191 = arith.mulf %189, %190 : vector<32x140xf32>
    %c0_95 = arith.constant 0 : index
    %c0_96 = arith.constant 0 : index
    %192 = vector.load %arg12[%c0_95, %c0_96] : memref<32x32xbf16, #tpu.memory_space<vmem>>, vector<32x32xbf16>
    %193 = arith.truncf %191 : vector<32x140xf32> to vector<32x140xbf16>
    %cst_97 = arith.constant dense<0.000000e+00> : vector<32x140xf32>
    %194 = tpu.matmul %192, %193, %cst_97 {dimension_numbers = #tpu.dot_dimension_numbers<[1], [0], [0], [1], [0, 0, 1, 1], [], []>} : vector<32x32xbf16>, vector<32x140xbf16>, vector<32x140xf32> -> vector<32x140xf32>
    %c0_98 = arith.constant 0 : index
    %c0_99 = arith.constant 0 : index
    %195 = vector.load %arg13[%c0_98, %c0_99] : memref<32x1xf32, #tpu.memory_space<vmem>>, vector<32x1xf32>
    %196 = vector.broadcast %195 : vector<32x1xf32> to vector<32x140xf32>
    %197 = arith.addf %194, %196 : vector<32x140xf32>
    %cst_100 = arith.constant 0.000000e+00 : f32
    %198 = vector.broadcast %cst_100 : f32 to vector<32x140xf32>
    %199 = arith.maximumf %197, %198 : vector<32x140xf32>
    %c0_101 = arith.constant 0 : index
    %c0_102 = arith.constant 0 : index
    %200 = vector.load %arg14[%c0_101, %c0_102] : memref<16x32xbf16, #tpu.memory_space<vmem>>, vector<16x32xbf16>
    %201 = arith.truncf %199 : vector<32x140xf32> to vector<32x140xbf16>
    %cst_103 = arith.constant dense<0.000000e+00> : vector<16x140xf32>
    %202 = tpu.matmul %200, %201, %cst_103 {dimension_numbers = #tpu.dot_dimension_numbers<[1], [0], [0], [1], [0, 0, 1, 1], [], []>} : vector<16x32xbf16>, vector<32x140xbf16>, vector<16x140xf32> -> vector<16x140xf32>
    %c0_104 = arith.constant 0 : index
    %c0_105 = arith.constant 0 : index
    %203 = vector.load %arg15[%c0_104, %c0_105] : memref<16x1xf32, #tpu.memory_space<vmem>>, vector<16x1xf32>
    %204 = vector.broadcast %203 : vector<16x1xf32> to vector<16x140xf32>
    %205 = arith.addf %202, %204 : vector<16x140xf32>
    %206 = vector.extract_strided_slice %205 {offsets = [0, 6], sizes = [16, 128], strides = [1, 1]} : vector<16x140xf32> to vector<16x128xf32>
    %c0_106 = arith.constant 0 : index
    %c0_107 = arith.constant 0 : index
    %c0_108 = arith.constant 0 : index
    %207 = vector.load %arg16[%c0_106, %c0_107, %c0_108] : memref<1x16x128xf32, #tpu.memory_space<vmem>>, vector<1x16x128xf32>
    %208 = vector.shape_cast %207 : vector<1x16x128xf32> to vector<16x128xf32>
    %209 = vector.shape_cast %206 : vector<16x128xf32> to vector<1x16x128xf32>
    tpu.vector_store %arg16[%c0_106, %c0_107, %c0_108], %209 {strides = array<i32>} : memref<1x16x128xf32, #tpu.memory_space<vmem>>, vector<1x16x128xf32>,
    return
  }
  func.func @transform_0(%arg0: i32, %arg1: i32) -> (i32, i32, i32, i32) {
    %c0_i32 = arith.constant 0 : i32
    %c0_i32_0 = arith.constant 0 : i32
    %c0_i32_1 = arith.constant 0 : i32
    return %arg0, %arg1, %c0_i32, %c0_i32_0 : i32, i32, i32, i32
  }
  func.func @transform_1(%arg0: i32, %arg1: i32) -> (i32, i32, i32, i32) {
    %c0_i32 = arith.constant 0 : i32
    %c0_i32_0 = arith.constant 0 : i32
    %c0_i32_1 = arith.constant 0 : i32
    return %arg0, %arg1, %c0_i32, %c0_i32_0 : i32, i32, i32, i32
  }
  func.func @transform_2(%arg0: i32, %arg1: i32) -> (i32, i32, i32, i32) {
    %c0_i32 = arith.constant 0 : i32
    %c0_i32_0 = arith.constant 0 : i32
    %c0_i32_1 = arith.constant 0 : i32
    %c0_i32_2 = arith.constant 0 : i32
    return %arg0, %c0_i32, %c0_i32_0, %c0_i32_1 : i32, i32, i32, i32
  }
  func.func @transform_3(%arg0: i32, %arg1: i32) -> (i32, i32) {
    %c0_i32 = arith.constant 0 : i32
    %c0_i32_0 = arith.constant 0 : i32
    %c0_i32_1 = arith.constant 0 : i32
    return %c0_i32, %c0_i32_0 : i32, i32
  }
  func.func @transform_4(%arg0: i32, %arg1: i32) -> (i32, i32) {
    %c0_i32 = arith.constant 0 : i32
    %c0_i32_0 = arith.constant 0 : i32
    %c0_i32_1 = arith.constant 0 : i32
    return %c0_i32, %c0_i32_0 : i32, i32
  }
  func.func @transform_5(%arg0: i32, %arg1: i32) -> (i32, i32) {
    %c0_i32 = arith.constant 0 : i32
    %c0_i32_0 = arith.constant 0 : i32
    %c0_i32_1 = arith.constant 0 : i32
    return %c0_i32, %c0_i32_0 : i32, i32
  }
  func.func @transform_6(%arg0: i32, %arg1: i32) -> (i32, i32) {
    %c0_i32 = arith.constant 0 : i32
    %c0_i32_0 = arith.constant 0 : i32
    %c0_i32_1 = arith.constant 0 : i32
    return %c0_i32, %c0_i32_0 : i32, i32
  }
  func.func @transform_7(%arg0: i32, %arg1: i32) -> (i32, i32, i32) {
    %c0_i32 = arith.constant 0 : i32
    %c0_i32_0 = arith.constant 0 : i32
    %c0_i32_1 = arith.constant 0 : i32
    %c0_i32_2 = arith.constant 0 : i32
    return %c0_i32, %c0_i32_0, %c0_i32_1 : i32, i32, i32
  }
  func.func @transform_8(%arg0: i32, %arg1: i32) -> (i32, i32, i32) {
    %c0_i32 = arith.constant 0 : i32
    %c0_i32_0 = arith.constant 0 : i32
    %c0_i32_1 = arith.constant 0 : i32
    %c0_i32_2 = arith.constant 0 : i32
    return %c0_i32, %c0_i32_0, %c0_i32_1 : i32, i32, i32
  }
  func.func @transform_9(%arg0: i32, %arg1: i32) -> (i32, i32, i32) {
    %c0_i32 = arith.constant 0 : i32
    %c0_i32_0 = arith.constant 0 : i32
    %c0_i32_1 = arith.constant 0 : i32
    %c0_i32_2 = arith.constant 0 : i32
    return %c0_i32, %c0_i32_0, %c0_i32_1 : i32, i32, i32
  }
  func.func @transform_10(%arg0: i32, %arg1: i32) -> (i32, i32) {
    %c0_i32 = arith.constant 0 : i32
    %c0_i32_0 = arith.constant 0 : i32
    %c0_i32_1 = arith.constant 0 : i32
    return %c0_i32, %c0_i32_0 : i32, i32
  }
  func.func @transform_11(%arg0: i32, %arg1: i32) -> (i32, i32) {
    %c0_i32 = arith.constant 0 : i32
    %c0_i32_0 = arith.constant 0 : i32
    %c0_i32_1 = arith.constant 0 : i32
    return %c0_i32, %c0_i32_0 : i32, i32
  }
  func.func @transform_12(%arg0: i32, %arg1: i32) -> (i32, i32) {
    %c0_i32 = arith.constant 0 : i32
    %c0_i32_0 = arith.constant 0 : i32
    %c0_i32_1 = arith.constant 0 : i32
    return %c0_i32, %c0_i32_0 : i32, i32
  }
  func.func @transform_13(%arg0: i32, %arg1: i32) -> (i32, i32) {
    %c0_i32 = arith.constant 0 : i32
    %c0_i32_0 = arith.constant 0 : i32
    %c0_i32_1 = arith.constant 0 : i32
    return %c0_i32, %c0_i32_0 : i32, i32
  }
  func.func @transform_14(%arg0: i32, %arg1: i32) -> (i32, i32, i32) {
    %c0_i32 = arith.constant 0 : i32
    %c0_i32_0 = arith.constant 0 : i32
    return %arg0, %c0_i32, %arg1 : i32, i32, i32
  }
}

</mosaic_0001>

<llo_original>
// kernel: tpu_custom_call.1
$region0: #{tpu_custom_call.1}
  #allocation0 [shape = 'u32[]', space=smem, size = 0x4, offset = 0x4, fixed_abs, tag = 'smem constant byte address 0x4 - core index']
  #allocation1 [shape = 'u32[72,128]{1,0:T(1,128)}', space=vmem, size = 0x9000, scoped, tag = 'internal scratch']
  #allocation2 [shape = 'f32[256,140]{1,0:T(8,128)}', space=vmem, size = 0x40000, scoped, tag = 'scratch operand']
  %s0 = inlined_call_operand.vmem [shape: bf16[2,1,16,140], index: 0, kind: input, shape index: {}]
  %s1 = inlined_call_operand.vmem [shape: bf16[2,1,32,140], index: 1, kind: input, shape index: {}]
  %s2 = inlined_call_operand.vmem [shape: f32[2,4,32,1], index: 2, kind: input, shape index: {}]
  %s3 = inlined_call_operand.vmem [shape: bf16[32,16], index: 3, kind: input, shape index: {}]
  %s4 = inlined_call_operand.vmem [shape: f32[32,1], index: 4, kind: input, shape index: {}]
  %s5 = inlined_call_operand.vmem [shape: bf16[256,32], index: 5, kind: input, shape index: {}]
  %s6 = inlined_call_operand.vmem [shape: f32[256,1], index: 6, kind: input, shape index: {}]
  %s7 = inlined_call_operand.vmem [shape: bf16[4,64,96], index: 7, kind: input, shape index: {}]
  %s8 = inlined_call_operand.vmem [shape: bf16[4,64,32], index: 8, kind: input, shape index: {}]
  %s9 = inlined_call_operand.vmem [shape: f32[4,64,1], index: 9, kind: input, shape index: {}]
  %s10 = inlined_call_operand.vmem [shape: bf16[32,32], index: 10, kind: input, shape index: {}]
  %s11 = inlined_call_operand.vmem [shape: f32[32,1], index: 11, kind: input, shape index: {}]
  %s12 = inlined_call_operand.vmem [shape: bf16[16,32], index: 12, kind: input, shape index: {}]
  %s13 = inlined_call_operand.vmem [shape: f32[16,1], index: 13, kind: input, shape index: {}]
  %s14 = inlined_call_operand.hbm [shape: f32[2,16,128], index: 14, kind: output, shape index: {}]
  %s15 = sld [smem:[#allocation0]]
  $region89: #{tpu_custom_call.1} parent=0
    _
  %s17 = ssub.s32 1, %s15
  %s18 = scalar_select 0, %s17, %s15
  $region1: #{tpu_custom_call.1} parent=0
    #allocation3 [shape = 'u8[16384]{0}', space=vmem, size = 0x4000, scoped, tag = 'output window, operand 0']
    #allocation4 [shape = 's32[2]{0}', space=sflag, size = 0x8, scoped, tag = 'scoped memory for tpu_custom_call.1']
    %19 = vsyncpa [#allocation4], 0
    %s20 = scalar_lea.sflag [#allocation4], 1
    %21 = vsyncpa %s20, 0
    loop: start=0, step=1, limit=4
    $region2: #{tpu_custom_call.1} parent=1 // loop_pre_header
      _
    $region3: #{tpu_custom_call.1} parent=1 // loop_header
      %s23 = sphi 0, %s27
      %p24 = scmp.ge.s32.totalorder %s23, 4
      %s30 = sphi 0, %s42
      %s31 = sphi 0, %s38
      %s32 = sphi 0, %s30
      %s33 = sphi 0, %s31
      %s34 = sphi 0, %s32
      %s35 = sphi 0, %s33
      %s47 = sphi 0, %s49
      %s50 = sphi 0, %s47
      %s51 = sphi 0, %s50
      %s67 = sphi 0, %s51
      %s75 = sphi 0, %s77
      %s78 = sphi 0, %s75
      %s79 = sphi 0, %s78
      %s95 = sphi 0, %s79
      %s101 = sphi 0, %s103
      %s104 = sphi 0, %s101
      %s105 = sphi 0, %s104
      %s121 = sphi 0, %s105
      %s125 = sphi 0, %s125
      %s127 = sphi 0, %s125
      %s128 = sphi 0, %s127
      %s142 = sphi 0, %s128
      %s146 = sphi 0, %s146
      %s148 = sphi 0, %s146
      %s149 = sphi 0, %s148
      %s163 = sphi 0, %s149
      %s167 = sphi 0, %s167
      %s169 = sphi 0, %s167
      %s170 = sphi 0, %s169
      %s184 = sphi 0, %s170
      %s188 = sphi 0, %s188
      %s190 = sphi 0, %s188
      %s191 = sphi 0, %s190
      %s205 = sphi 0, %s191
      %s209 = sphi 0, %s209
      %s211 = sphi 0, %s209
      %s212 = sphi 0, %s211
      %s226 = sphi 0, %s212
      %s230 = sphi 0, %s230
      %s232 = sphi 0, %s230
      %s233 = sphi 0, %s232
      %s247 = sphi 0, %s233
      %s251 = sphi 0, %s251
      %s253 = sphi 0, %s251
      %s254 = sphi 0, %s253
      %s268 = sphi 0, %s254
      %s272 = sphi 0, %s272
      %s274 = sphi 0, %s272
      %s275 = sphi 0, %s274
      %s289 = sphi 0, %s275
      %s293 = sphi 0, %s293
      %s295 = sphi 0, %s293
      %s296 = sphi 0, %s295
      %s310 = sphi 0, %s296
      %s314 = sphi 0, %s314
      %s316 = sphi 0, %s314
      %s317 = sphi 0, %s316
      %s331 = sphi 0, %s317
      %s335 = sphi 0, %s335
      %s337 = sphi 0, %s335
      %s338 = sphi 0, %s337
      %s352 = sphi 0, %s338
      %s360 = sphi 0, %s362
      %s363 = sphi 0, %s360
      %s364 = sphi 0, %s363
      %s380 = sphi 0, %s364
    $region4: #{tpu_custom_call.1} parent=1 // loop_header_branch
      %26 = sbr.rel (%p24) target = $region8
    $region5: #{tpu_custom_call.1} parent=1 // loop_body
      %s28 = ssub.s32 %s23, 1
      %s29 = ssub.s32 %s23, 2
      %s36 = sadd.s32 1, %s31
      %p37 = scmp.ge.s32.totalorder %s36, 1
      %s38 = scalar_select %p37, 0, %s36
      %s39 = sadd.s32 1, %s30
      %s40 = scalar_select %p37, %s39, %s30
      %p41 = scmp.ge.s32.totalorder %s40, 2
      %s42 = scalar_select %p41, 0, %s40
      %s43 = ssub.s32 %s30, %s42
      %s44 = ssub.s32 %s31, %s38
      %s45 = sor.u32 %s43, %s44
      %p46 = scmp.eq.s32.totalorder %s45, 0
      %s48 = sadd.s32 %s47, 1
      %s49 = scalar_select %p46, %s47, %s48
      %p52 = pneg %p46
      %p53 = scmp.eq.s32.totalorder %s23, 1
      %p54 = por %p52, %p53
      %p55 = scmp.ne.s32.totalorder %s47, %s50
      %p56 = scmp.eq.s32.totalorder %s23, 0
      %p57 = por %p55, %p56
      %p58 = scmp.ne.s32.totalorder %s47, %s50
      %p59 = scmp.eq.s32.totalorder %s28, 1
      %p60 = por %p58, %p59
      %p61 = scmp.ne.s32.totalorder %s50, %s51
      %p62 = scmp.eq.s32.totalorder %s28, 0
      %p63 = por %p61, %p62
      %p64 = scmp.ne.s32.totalorder %s50, %s51
      %p65 = scmp.eq.s32.totalorder %s29, 1
      %p66 = por %p64, %p65
      %p68 = scmp.ne.s32.totalorder %s51, %s67
      %p69 = scmp.eq.s32.totalorder %s29, 0
      %p70 = por %p68, %p69
      %s71 = ssub.s32 %s30, %s42
      %s72 = ssub.s32 %s31, %s38
      %s73 = sor.u32 %s71, %s72
      %p74 = scmp.eq.s32.totalorder %s73, 0
      %s76 = sadd.s32 %s75, 1
      %s77 = scalar_select %p74, %s75, %s76
      %p80 = pneg %p74
      %p81 = scmp.eq.s32.totalorder %s23, 1
      %p82 = por %p80, %p81
      %p83 = scmp.ne.s32.totalorder %s75, %s78
      %p84 = scmp.eq.s32.totalorder %s23, 0
      %p85 = por %p83, %p84
      %p86 = scmp.ne.s32.totalorder %s75, %s78
      %p87 = scmp.eq.s32.totalorder %s28, 1
      %p88 = por %p86, %p87
      %p89 = scmp.ne.s32.totalorder %s78, %s79
      %p90 = scmp.eq.s32.totalorder %s28, 0
      %p91 = por %p89, %p90
      %p92 = scmp.ne.s32.totalorder %s78, %s79
      %p93 = scmp.eq.s32.totalorder %s29, 1
      %p94 = por %p92, %p93
      %p96 = scmp.ne.s32.totalorder %s79, %s95
      %p97 = scmp.eq.s32.totalorder %s29, 0
      %p98 = por %p96, %p97
      %s99 = ssub.s32 %s30, %s42
      %p100 = scmp.eq.s32.totalorder %s99, 0
      %s102 = sadd.s32 %s101, 1
      %s103 = scalar_select %p100, %s101, %s102
      %p106 = pneg %p100
      %p107 = scmp.eq.s32.totalorder %s23, 1
      %p108 = por %p106, %p107
      %p109 = scmp.ne.s32.totalorder %s101, %s104
      %p110 = scmp.eq.s32.totalorder %s23, 0
      %p111 = por %p109, %p110
      %p112 = scmp.ne.s32.totalorder %s101, %s104
      %p113 = scmp.eq.s32.totalorder %s28, 1
      %p114 = por %p112, %p113
      %p115 = scmp.ne.s32.totalorder %s104, %s105
      %p116 = scmp.eq.s32.totalorder %s28, 0
      %p117 = por %p115, %p116
      %p118 = scmp.ne.s32.totalorder %s104, %s105
      %p119 = scmp.eq.s32.totalorder %s29, 1
      %p120 = por %p118, %p119
      %p122 = scmp.ne.s32.totalorder %s105, %s121
      %p123 = scmp.eq.s32.totalorder %s29, 0
      %p124 = por %p122, %p123
      %s126 = sadd.s32 %s125, 1
      %p129 = scmp.eq.s32.totalorder %s23, 1
      %p130 = scmp.ne.s32.totalorder %s125, %s127
      %p131 = scmp.eq.s32.totalorder %s23, 0
      %p132 = por %p130, %p131
      %p133 = scmp.ne.s32.totalorder %s125, %s127
      %p134 = scmp.eq.s32.totalorder %s28, 1
      %p135 = por %p133, %p134
      %p136 = scmp.ne.s32.totalorder %s127, %s128
      %p137 = scmp.eq.s32.totalorder %s28, 0
      %p138 = por %p136, %p137
      %p139 = scmp.ne.s32.totalorder %s127, %s128
      %p140 = scmp.eq.s32.totalorder %s29, 1
      %p141 = por %p139, %p140
      %p143 = scmp.ne.s32.totalorder %s128, %s142
      %p144 = scmp.eq.s32.totalorder %s29, 0
      %p145 = por %p143, %p144
      %s147 = sadd.s32 %s146, 1
      %p150 = scmp.eq.s32.totalorder %s23, 1
      %p151 = scmp.ne.s32.totalorder %s146, %s148
      %p152 = scmp.eq.s32.totalorder %s23, 0
      %p153 = por %p151, %p152
      %p154 = scmp.ne.s32.totalorder %s146, %s148
      %p155 = scmp.eq.s32.totalorder %s28, 1
      %p156 = por %p154, %p155
      %p157 = scmp.ne.s32.totalorder %s148, %s149
      %p158 = scmp.eq.s32.totalorder %s28, 0
      %p159 = por %p157, %p158
      %p160 = scmp.ne.s32.totalorder %s148, %s149
      %p161 = scmp.eq.s32.totalorder %s29, 1
      %p162 = por %p160, %p161
      %p164 = scmp.ne.s32.totalorder %s149, %s163
      %p165 = scmp.eq.s32.totalorder %s29, 0
      %p166 = por %p164, %p165
      %s168 = sadd.s32 %s167, 1
      %p171 = scmp.eq.s32.totalorder %s23, 1
      %p172 = scmp.ne.s32.totalorder %s167, %s169
      %p173 = scmp.eq.s32.totalorder %s23, 0
      %p174 = por %p172, %p173
      %p175 = scmp.ne.s32.totalorder %s167, %s169
      %p176 = scmp.eq.s32.totalorder %s28, 1
      %p177 = por %p175, %p176
      %p178 = scmp.ne.s32.totalorder %s169, %s170
      %p179 = scmp.eq.s32.totalorder %s28, 0
      %p180 = por %p178, %p179
      %p181 = scmp.ne.s32.totalorder %s169, %s170
      %p182 = scmp.eq.s32.totalorder %s29, 1
      %p183 = por %p181, %p182
      %p185 = scmp.ne.s32.totalorder %s170, %s184
      %p186 = scmp.eq.s32.totalorder %s29, 0
      %p187 = por %p185, %p186
      %s189 = sadd.s32 %s188, 1
      %p192 = scmp.eq.s32.totalorder %s23, 1
      %p193 = scmp.ne.s32.totalorder %s188, %s190
      %p194 = scmp.eq.s32.totalorder %s23, 0
      %p195 = por %p193, %p194
      %p196 = scmp.ne.s32.totalorder %s188, %s190
      %p197 = scmp.eq.s32.totalorder %s28, 1
      %p198 = por %p196, %p197
      %p199 = scmp.ne.s32.totalorder %s190, %s191
      %p200 = scmp.eq.s32.totalorder %s28, 0
      %p201 = por %p199, %p200
      %p202 = scmp.ne.s32.totalorder %s190, %s191
      %p203 = scmp.eq.s32.totalorder %s29, 1
      %p204 = por %p202, %p203
      %p206 = scmp.ne.s32.totalorder %s191, %s205
      %p207 = scmp.eq.s32.totalorder %s29, 0
      %p208 = por %p206, %p207
      %s210 = sadd.s32 %s209, 1
      %p213 = scmp.eq.s32.totalorder %s23, 1
      %p214 = scmp.ne.s32.totalorder %s209, %s211
      %p215 = scmp.eq.s32.totalorder %s23, 0
      %p216 = por %p214, %p215
      %p217 = scmp.ne.s32.totalorder %s209, %s211
      %p218 = scmp.eq.s32.totalorder %s28, 1
      %p219 = por %p217, %p218
      %p220 = scmp.ne.s32.totalorder %s211, %s212
      %p221 = scmp.eq.s32.totalorder %s28, 0
      %p222 = por %p220, %p221
      %p223 = scmp.ne.s32.totalorder %s211, %s212
      %p224 = scmp.eq.s32.totalorder %s29, 1
      %p225 = por %p223, %p224
      %p227 = scmp.ne.s32.totalorder %s212, %s226
      %p228 = scmp.eq.s32.totalorder %s29, 0
      %p229 = por %p227, %p228
      %s231 = sadd.s32 %s230, 1
      %p234 = scmp.eq.s32.totalorder %s23, 1
      %p235 = scmp.ne.s32.totalorder %s230, %s232
      %p236 = scmp.eq.s32.totalorder %s23, 0
      %p237 = por %p235, %p236
      %p238 = scmp.ne.s32.totalorder %s230, %s232
      %p239 = scmp.eq.s32.totalorder %s28, 1
      %p240 = por %p238, %p239
      %p241 = scmp.ne.s32.totalorder %s232, %s233
      %p242 = scmp.eq.s32.totalorder %s28, 0
      %p243 = por %p241, %p242
      %p244 = scmp.ne.s32.totalorder %s232, %s233
      %p245 = scmp.eq.s32.totalorder %s29, 1
      %p246 = por %p244, %p245
      %p248 = scmp.ne.s32.totalorder %s233, %s247
      %p249 = scmp.eq.s32.totalorder %s29, 0
      %p250 = por %p248, %p249
      %s252 = sadd.s32 %s251, 1
      %p255 = scmp.eq.s32.totalorder %s23, 1
      %p256 = scmp.ne.s32.totalorder %s251, %s253
      %p257 = scmp.eq.s32.totalorder %s23, 0
      %p258 = por %p256, %p257
      %p259 = scmp.ne.s32.totalorder %s251, %s253
      %p260 = scmp.eq.s32.totalorder %s28, 1
      %p261 = por %p259, %p260
      %p262 = scmp.ne.s32.totalorder %s253, %s254
      %p263 = scmp.eq.s32.totalorder %s28, 0
      %p264 = por %p262, %p263
      %p265 = scmp.ne.s32.totalorder %s253, %s254
      %p266 = scmp.eq.s32.totalorder %s29, 1
      %p267 = por %p265, %p266
      %p269 = scmp.ne.s32.totalorder %s254, %s268
      %p270 = scmp.eq.s32.totalorder %s29, 0
      %p271 = por %p269, %p270
      %s273 = sadd.s32 %s272, 1
      %p276 = scmp.eq.s32.totalorder %s23, 1
      %p277 = scmp.ne.s32.totalorder %s272, %s274
      %p278 = scmp.eq.s32.totalorder %s23, 0
      %p279 = por %p277, %p278
      %p280 = scmp.ne.s32.totalorder %s272, %s274
      %p281 = scmp.eq.s32.totalorder %s28, 1
      %p282 = por %p280, %p281
      %p283 = scmp.ne.s32.totalorder %s274, %s275
      %p284 = scmp.eq.s32.totalorder %s28, 0
      %p285 = por %p283, %p284
      %p286 = scmp.ne.s32.totalorder %s274, %s275
      %p287 = scmp.eq.s32.totalorder %s29, 1
      %p288 = por %p286, %p287
      %p290 = scmp.ne.s32.totalorder %s275, %s289
      %p291 = scmp.eq.s32.totalorder %s29, 0
      %p292 = por %p290, %p291
      %s294 = sadd.s32 %s293, 1
      %p297 = scmp.eq.s32.totalorder %s23, 1
      %p298 = scmp.ne.s32.totalorder %s293, %s295
      %p299 = scmp.eq.s32.totalorder %s23, 0
      %p300 = por %p298, %p299
      %p301 = scmp.ne.s32.totalorder %s293, %s295
      %p302 = scmp.eq.s32.totalorder %s28, 1
      %p303 = por %p301, %p302
      %p304 = scmp.ne.s32.totalorder %s295, %s296
      %p305 = scmp.eq.s32.totalorder %s28, 0
      %p306 = por %p304, %p305
      %p307 = scmp.ne.s32.totalorder %s295, %s296
      %p308 = scmp.eq.s32.totalorder %s29, 1
      %p309 = por %p307, %p308
      %p311 = scmp.ne.s32.totalorder %s296, %s310
      %p312 = scmp.eq.s32.totalorder %s29, 0
      %p313 = por %p311, %p312
      %s315 = sadd.s32 %s314, 1
      %p318 = scmp.eq.s32.totalorder %s23, 1
      %p319 = scmp.ne.s32.totalorder %s314, %s316
      %p320 = scmp.eq.s32.totalorder %s23, 0
      %p321 = por %p319, %p320
      %p322 = scmp.ne.s32.totalorder %s314, %s316
      %p323 = scmp.eq.s32.totalorder %s28, 1
      %p324 = por %p322, %p323
      %p325 = scmp.ne.s32.totalorder %s316, %s317
      %p326 = scmp.eq.s32.totalorder %s28, 0
      %p327 = por %p325, %p326
      %p328 = scmp.ne.s32.totalorder %s316, %s317
      %p329 = scmp.eq.s32.totalorder %s29, 1
      %p330 = por %p328, %p329
      %p332 = scmp.ne.s32.totalorder %s317, %s331
      %p333 = scmp.eq.s32.totalorder %s29, 0
      %p334 = por %p332, %p333
      %s336 = sadd.s32 %s335, 1
      %p339 = scmp.eq.s32.totalorder %s23, 1
      %p340 = scmp.ne.s32.totalorder %s335, %s337
      %p341 = scmp.eq.s32.totalorder %s23, 0
      %p342 = por %p340, %p341
      %p343 = scmp.ne.s32.totalorder %s335, %s337
      %p344 = scmp.eq.s32.totalorder %s28, 1
      %p345 = por %p343, %p344
      %p346 = scmp.ne.s32.totalorder %s337, %s338
      %p347 = scmp.eq.s32.totalorder %s28, 0
      %p348 = por %p346, %p347
      %p349 = scmp.ne.s32.totalorder %s337, %s338
      %p350 = scmp.eq.s32.totalorder %s29, 1
      %p351 = por %p349, %p350
      %p353 = scmp.ne.s32.totalorder %s338, %s352
      %p354 = scmp.eq.s32.totalorder %s29, 0
      %p355 = por %p353, %p354
      %s356 = ssub.s32 %s30, %s42
      %s357 = ssub.s32 %s31, %s38
      %s358 = sor.u32 %s356, %s357
      %p359 = scmp.eq.s32.totalorder %s358, 0
      %s361 = sadd.s32 %s360, 1
      %s362 = scalar_select %p359, %s360, %s361
      %p365 = pneg %p359
      %p366 = scmp.eq.s32.totalorder %s23, 1
      %p367 = por %p365, %p366
      %p368 = scmp.ne.s32.totalorder %s360, %s363
      %p369 = scmp.eq.s32.totalorder %s23, 0
      %p370 = por %p368, %p369
      %p371 = scmp.ne.s32.totalorder %s360, %s363
      %p372 = scmp.eq.s32.totalorder %s28, 1
      %p373 = por %p371, %p372
      %p374 = scmp.ne.s32.totalorder %s363, %s364
      %p375 = scmp.eq.s32.totalorder %s28, 0
      %p376 = por %p374, %p375
      %p377 = scmp.ne.s32.totalorder %s363, %s364
      %p378 = scmp.eq.s32.totalorder %s29, 1
      %p379 = por %p377, %p378
      %p381 = scmp.ne.s32.totalorder %s364, %s380
      %p382 = scmp.eq.s32.totalorder %s29, 0
      %p383 = por %p381, %p382
      %p384 = scmp.le.s32.totalorder 1, %s23
      %p385 = scmp.lt.s32.totalorder %s23, 3
      %p386 = pnand %p384, %p385
      %p387 = pneg %p386
      // Predicated region
      $region9: #{tpu_custom_call.1} parent=5 // pred_check
        _
      $region10: #{tpu_custom_call.1} parent=5 // pred_check_branch
        %389 = sbr.rel (%p386) target = $region12
      $region11: #{tpu_custom_call.1} parent=5 // pred_region
        %s390 = ssub.s32 %s23, 1
        // Predicated region
        $region13: #{tpu_custom_call.1} parent=11 // pred_check
          %p391 = pneg %p138
        $region14: #{tpu_custom_call.1} parent=11 // pred_check_branch
          %393 = sbr.rel (%p391) target = $region16
        $region15: #{tpu_custom_call.1} parent=11 // pred_region
          _
        $region16: #{tpu_custom_call.1} parent=11 // pred_fallthru
          _
        // Predicated region
        $region17: #{tpu_custom_call.1} parent=11 // pred_check
          %p394 = pneg %p159
        $region18: #{tpu_custom_call.1} parent=11 // pred_check_branch
          %396 = sbr.rel (%p394) target = $region20
        $region19: #{tpu_custom_call.1} parent=11 // pred_region
          _
        $region20: #{tpu_custom_call.1} parent=11 // pred_fallthru
          _
        // Predicated region
        $region21: #{tpu_custom_call.1} parent=11 // pred_check
          %p397 = pneg %p180
        $region22: #{tpu_custom_call.1} parent=11 // pred_check_branch
          %399 = sbr.rel (%p397) target = $region24
        $region23: #{tpu_custom_call.1} parent=11 // pred_region
          _
        $region24: #{tpu_custom_call.1} parent=11 // pred_fallthru
          _
        // Predicated region
        $region25: #{tpu_custom_call.1} parent=11 // pred_check
          %p400 = pneg %p201
        $region26: #{tpu_custom_call.1} parent=11 // pred_check_branch
          %402 = sbr.rel (%p400) target = $region28
        $region27: #{tpu_custom_call.1} parent=11 // pred_region
          _
        $region28: #{tpu_custom_call.1} parent=11 // pred_fallthru
          _
        // Predicated region
        $region29: #{tpu_custom_call.1} parent=11 // pred_check
          %p403 = pneg %p222
        $region30: #{tpu_custom_call.1} parent=11 // pred_check_branch
          %405 = sbr.rel (%p403) target = $region32
        $region31: #{tpu_custom_call.1} parent=11 // pred_region
          _
        $region32: #{tpu_custom_call.1} parent=11 // pred_fallthru
          _
        // Predicated region
        $region33: #{tpu_custom_call.1} parent=11 // pred_check
          %p406 = pneg %p243
        $region34: #{tpu_custom_call.1} parent=11 // pred_check_branch
          %408 = sbr.rel (%p406) target = $region36
        $region35: #{tpu_custom_call.1} parent=11 // pred_region
          _
        $region36: #{tpu_custom_call.1} parent=11 // pred_fallthru
          _
        // Predicated region
        $region37: #{tpu_custom_call.1} parent=11 // pred_check
          %p409 = pneg %p264
        $region38: #{tpu_custom_call.1} parent=11 // pred_check_branch
          %411 = sbr.rel (%p409) target = $region40
        $region39: #{tpu_custom_call.1} parent=11 // pred_region
          _
        $region40: #{tpu_custom_call.1} parent=11 // pred_fallthru
          _
        // Predicated region
        $region41: #{tpu_custom_call.1} parent=11 // pred_check
          %p412 = pneg %p285
        $region42: #{tpu_custom_call.1} parent=11 // pred_check_branch
          %414 = sbr.rel (%p412) target = $region44
        $region43: #{tpu_custom_call.1} parent=11 // pred_region
          _
        $region44: #{tpu_custom_call.1} parent=11 // pred_fallthru
          _
        // Predicated region
        $region45: #{tpu_custom_call.1} parent=11 // pred_check
          %p415 = pneg %p306
        $region46: #{tpu_custom_call.1} parent=11 // pred_check_branch
          %417 = sbr.rel (%p415) target = $region48
        $region47: #{tpu_custom_call.1} parent=11 // pred_region
          _
        $region48: #{tpu_custom_call.1} parent=11 // pred_fallthru
          _
        // Predicated region
        $region49: #{tpu_custom_call.1} parent=11 // pred_check
          %p418 = pneg %p327
        $region50: #{tpu_custom_call.1} parent=11 // pred_check_branch
          %420 = sbr.rel (%p418) target = $region52
        $region51: #{tpu_custom_call.1} parent=11 // pred_region
          _
        $region52: #{tpu_custom_call.1} parent=11 // pred_fallthru
          _
        // Predicated region
        $region53: #{tpu_custom_call.1} parent=11 // pred_check
          %p421 = pneg %p348
        $region54: #{tpu_custom_call.1} parent=11 // pred_check_branch
          %423 = sbr.rel (%p421) target = $region56
        $region55: #{tpu_custom_call.1} parent=11 // pred_region
          _
        $region56: #{tpu_custom_call.1} parent=11 // pred_fallthru
          _
      $region12: #{tpu_custom_call.1} parent=5 // pred_fallthru
        _
      %p424 = scmp.lt.s32.totalorder %s23, 2
      // Predicated region
      $region57: #{tpu_custom_call.1} parent=5 // pred_check
        %p425 = pneg %p424
      $region58: #{tpu_custom_call.1} parent=5 // pred_check_branch
        %427 = sbr.rel (%p425) target = $region60
      $region59: #{tpu_custom_call.1} parent=5 // pred_region
        // Predicated region
        $region61: #{tpu_custom_call.1} parent=59 // pred_check
          %p428 = pneg %p57
        $region62: #{tpu_custom_call.1} parent=59 // pred_check_branch
          %430 = sbr.rel (%p428) target = $region64
        $region63: #{tpu_custom_call.1} parent=59 // pred_region
          %p431 = scmp.lt.s32.totalorder %s30, 1
          %s432 = scalar_select %p431, %s30, 1
          %p433 = scmp.lt.s32.totalorder %s31, 0
          %s434 = scalar_select %p433, %s31, 0
          %s435 = smul.addr %s434, 4
          %s436 = smul.addr %s432, 4
          %s437 = sadd.s32 %s435, %s436
          %s438 = smul.addr %s437, 4
          %s439 = scalar_lea.vmem %s0, %s438
        $region64: #{tpu_custom_call.1} parent=59 // pred_fallthru
          _
        // Predicated region
        $region65: #{tpu_custom_call.1} parent=59 // pred_check
          %p440 = pneg %p85
        $region66: #{tpu_custom_call.1} parent=59 // pred_check_branch
          %442 = sbr.rel (%p440) target = $region68
        $region67: #{tpu_custom_call.1} parent=59 // pred_region
          %p443 = scmp.lt.s32.totalorder %s30, 1
          %s444 = scalar_select %p443, %s30, 1
          %p445 = scmp.lt.s32.totalorder %s31, 0
          %s446 = scalar_select %p445, %s31, 0
          %s447 = smul.addr %s446, 8
          %s448 = smul.addr %s444, 8
          %s449 = sadd.s32 %s447, %s448
          %s450 = smul.addr %s449, 4
          %s451 = scalar_lea.vmem %s1, %s450
        $region68: #{tpu_custom_call.1} parent=59 // pred_fallthru
          _
        // Predicated region
        $region69: #{tpu_custom_call.1} parent=59 // pred_check
          %p452 = pneg %p111
        $region70: #{tpu_custom_call.1} parent=59 // pred_check_branch
          %454 = sbr.rel (%p452) target = $region72
        $region71: #{tpu_custom_call.1} parent=59 // pred_region
          %p455 = scmp.lt.s32.totalorder %s30, 1
          %s456 = scalar_select %p455, %s30, 1
          %s457 = smul.addr %s456, 16
          %s458 = smul.addr %s457, 8
          %s459 = scalar_lea.vmem %s2, %s458
        $region72: #{tpu_custom_call.1} parent=59 // pred_fallthru
          _
      $region60: #{tpu_custom_call.1} parent=5 // pred_fallthru
        _
      %p460 = scmp.le.s32.totalorder 1, %s23
      %p461 = scmp.lt.s32.totalorder %s23, 3
      %p462 = pnand %p460, %p461
      %p463 = pneg %p462
      // Predicated region
      $region73: #{tpu_custom_call.1} parent=5 // pred_check
        _
      $region74: #{tpu_custom_call.1} parent=5 // pred_check_branch
        %465 = sbr.rel (%p462) target = $region76
      $region75: #{tpu_custom_call.1} parent=5 // pred_region
        %s466 = ssub.s32 %s23, 1
        %p467 = scmp.lt.s32.totalorder %s32, 1
        %s468 = scalar_select %p467, %s32, 1
        %p469 = scmp.lt.s32.totalorder %s33, 0
        %s470 = scalar_select %p469, %s33, 0
        %s471 = smul.addr %s470, 4
        %s472 = smul.addr %s468, 4
        %s473 = sadd.s32 %s471, %s472
        %s474 = smul.addr %s473, 4
        %s475 = scalar_lea.vmem %s0, %s474
        %p476 = pneg %p63
        %p477 = pneg %p60
        %p478 = scmp.lt.s32.totalorder %s32, 1
        %s479 = scalar_select %p478, %s32, 1
        %p480 = scmp.lt.s32.totalorder %s33, 0
        %s481 = scalar_select %p480, %s33, 0
        %s482 = smul.addr %s481, 8
        %s483 = smul.addr %s479, 8
        %s484 = sadd.s32 %s482, %s483
        %s485 = smul.addr %s484, 4
        %s486 = scalar_lea.vmem %s1, %s485
        %p487 = pneg %p91
        %p488 = pneg %p88
        %p489 = scmp.lt.s32.totalorder %s32, 1
        %s490 = scalar_select %p489, %s32, 1
        %s491 = smul.addr %s490, 16
        %s492 = smul.addr %s491, 8
        %s493 = scalar_lea.vmem %s2, %s492
        %p494 = pneg %p117
        %p495 = pneg %p114
        %p496 = pneg %p138
        %p497 = pneg %p135
        %p498 = pneg %p159
        %p499 = pneg %p156
        %p500 = pneg %p180
        %p501 = pneg %p177
        %p502 = pneg %p201
        %p503 = pneg %p198
        %p504 = pneg %p222
        %p505 = pneg %p219
        %p506 = pneg %p243
        %p507 = pneg %p240
        %p508 = pneg %p264
        %p509 = pneg %p261
        %p510 = pneg %p285
        %p511 = pneg %p282
        %p512 = pneg %p306
        %p513 = pneg %p303
        %p514 = pneg %p327
        %p515 = pneg %p324
        %p516 = pneg %p348
        %p517 = pneg %p345
        %p518 = pneg %p376
        %p519 = pneg %p373
        %s520 = sand.u32 %s363, 1
        %s521 = scalar_lea.sflag [#allocation4], %s520
        %s522 = sand.u32 %s363, 1
        %s523 = smul.addr %s522, 16
        %s524 = scalar_lea.vmem [#allocation3], %s523
        %p525 = scmp.lt.s32.totalorder %s32, 1
        %s526 = scalar_select %p525, %s32, 1
        %p527 = scmp.lt.s32.totalorder %s33, 0
        %s528 = scalar_select %p527, %s33, 0
        %s529 = smul.addr %s528, 4
        %s530 = smul.addr %s526, 4
        %s531 = sadd.s32 %s529, %s530
        %s532 = smul.addr %s531, 4
        %s533 = scalar_lea.vmem %s0, %s532
        %p534 = scmp.lt.s32.totalorder %s32, 1
        %s535 = scalar_select %p534, %s32, 1
        %p536 = scmp.lt.s32.totalorder %s33, 0
        %s537 = scalar_select %p536, %s33, 0
        %s538 = smul.addr %s537, 8
        %s539 = smul.addr %s535, 8
        %s540 = sadd.s32 %s538, %s539
        %s541 = smul.addr %s540, 4
        %s542 = scalar_lea.vmem %s1, %s541
        %p543 = scmp.lt.s32.totalorder %s32, 1
        %s544 = scalar_select %p543, %s32, 1
        %s545 = smul.addr %s544, 16
        %s546 = smul.addr %s545, 8
        %s547 = scalar_lea.vmem %s2, %s546
        %v549 = vld [vmem:[%s533] sm:$0xff]
        %v550 = vld [vmem:[%s533 + $0x8] sm:$0xff]
        %v551 = vld [vmem:[%s542] sm:$0xff]
        %v552 = vld [vmem:[%s542 + $0x8] sm:$0xff]
        %v553 = vld [vmem:[%s542 + $0x10] sm:$0xff]
        %v554 = vld [vmem:[%s542 + $0x18] sm:$0xff]
        %v555 = vlaneseq
        %v556 = vand.u32 %v555, 127
        %v557 = vadd.s32 %v556, 128
        %s558 = smul.u32 %s33, 128
        %s559 = ssub.s32 %s558, 6
        %v560 = vstv %s559
        %v561 = vadd.s32 %v556, %v560
        %v562 = vadd.s32 %v557, %v560
        %vm563 = vcmp.ge.s32.totalorder %v561, 0
        %vm564 = vcmp.ge.s32.totalorder %v562, 0
        %vm565 = vcmp.lt.s32.totalorder %v561, 128
        %vm566 = vcmp.lt.s32.totalorder %v562, 128
        %vm567 = vmand %vm563, %vm565
        %vm568 = vmand %vm564, %vm566
        %v569 = vsel %vm567, 1, 0
        %v570 = vsel %vm568, 1, 0
        %v571 = vcvt.s32.f32 %v569
        %v572 = vcvt.s32.f32 %v570
        %v573 = vld [vmem:[%s3] sm:$0xf]
        %v574 = vld [vmem:[%s3 + $0x4] sm:$0xf]
        %v575 = vld [vmem:[%s3 + $0x8] sm:$0xf]
        %v576 = vld [vmem:[%s3 + $0xc] sm:$0xf]
        %v577 = vld [vmem:[%s4] sm:$0xff]
        %v578 = vld [vmem:[%s4 + $0x8] sm:$0xff]
        %v579 = vld [vmem:[%s4 + $0x10] sm:$0xff]
        %v580 = vld [vmem:[%s4 + $0x18] sm:$0xff]
        %582 = vset.pattern.permute.xlu0 0
        %583 = vperm.xlu0 %582, %v577
        %v584 = vpop.permute.xlu0 %583
        %587 = vset.pattern.permute.xlu0 0
        %588 = vperm.xlu0 %587, %v578
        %v589 = vpop.permute.xlu0 %588
        %592 = vset.pattern.permute.xlu0 0
        %593 = vperm.xlu0 %592, %v579
        %v594 = vpop.permute.xlu0 %593
        %597 = vset.pattern.permute.xlu0 0
        %598 = vperm.xlu0 %597, %v580
        %v599 = vpop.permute.xlu0 %598
        %v605 = vunpack.c.l.b16 %v573
        %v606 = vunpack.c.l.b16 %v574
        %v607 = vunpack.c.l.b16 %v575
        %v608 = vunpack.c.l.b16 %v576
        %v609 = vpack.c.b16 %v606, %v605
        %v610 = vpack.c.b16 %v608, %v607
        %v613 = vunpack.c.l.b16 %v549
        %v614 = vunpack.c.h.b16 %v549
        %v615 = vunpack.c.l.b16 %v550
        %v616 = vunpack.c.h.b16 %v550
        %v617 = vpack.c.b16 %v615, %v613
        %v618 = vpack.c.b16 %v616, %v614
        %vm621 = vcmask 130048
        %v623 = vsel %vm621, %v609, 0
        %v626 = vsel %vm621, %v610, 0
        %628 = vmatpush.bf16.msra.mxu0 0
        %629 = vmatpush.bf16.msra.mxu0 0
        %630 = vmatpush.bf16.msra.mxu0 0
        %631 = vmatpush.bf16.msra.mxu0 0
        %632 = vmatpush.bf16.msra.mxu0 0
        %633 = vmatpush.bf16.msra.mxu0 0
        %634 = vmatpush.bf16.msra.mxu0 0
        %635 = vmatpush.bf16.msra.mxu0 %v617
        %636 = vmatmul.bf16.gmra.mxu0 %v623
        %v637 = vpop.f32.mrf.mxu0
        %v638 = vadd.f32 %v584, %v637
        %v639 = vpop.f32.mrf.mxu0
        %v640 = vadd.f32 %v589, %v639
        %641 = vmatmul.bf16.gmra.mxu0 %v626
        %v642 = vpop.f32.mrf.mxu0
        %v643 = vadd.f32 %v594, %v642
        %v644 = vpop.f32.mrf.mxu0
        %v645 = vadd.f32 %v599, %v644
        %646 = vdwg.mxu0
        %647 = vmatpush.bf16.msra.mxu0 0
        %648 = vmatpush.bf16.msra.mxu0 0
        %649 = vmatpush.bf16.msra.mxu0 0
        %650 = vmatpush.bf16.msra.mxu0 0
        %651 = vmatpush.bf16.msra.mxu0 0
        %652 = vmatpush.bf16.msra.mxu0 0
        %653 = vmatpush.bf16.msra.mxu0 0
        %654 = vmatpush.bf16.msra.mxu0 %v618
        %655 = vmatmul.bf16.gmra.mxu0 %v623
        %v656 = vpop.f32.mrf.mxu0
        %v657 = vadd.f32 %v584, %v656
        %v658 = vpop.f32.mrf.mxu0
        %v659 = vadd.f32 %v589, %v658
        %660 = vmatmul.bf16.gmra.mxu0 %v626
        %v661 = vpop.f32.mrf.mxu0
        %v662 = vadd.f32 %v594, %v661
        %v663 = vpop.f32.mrf.mxu0
        %v664 = vadd.f32 %v599, %v663
        %665 = vdwg.mxu0
        %v666 = vmax.f32 %v638, 0.0
        %v667 = vmax.f32 %v657, 0.0
        %v668 = vmax.f32 %v640, 0.0
        %v669 = vmax.f32 %v659, 0.0
        %v670 = vmax.f32 %v643, 0.0
        %v671 = vmax.f32 %v662, 0.0
        %v672 = vmax.f32 %v645, 0.0
        %v673 = vmax.f32 %v664, 0.0
        %v674 = vld [vmem:[%s5] sm:$0xf]
        %v675 = vld [vmem:[%s5 + $0x4] sm:$0xf]
        %v676 = vld [vmem:[%s5 + $0x8] sm:$0xf]
        %v677 = vld [vmem:[%s5 + $0xc] sm:$0xf]
        %v678 = vld [vmem:[%s5 + $0x10] sm:$0xf]
        %v679 = vld [vmem:[%s5 + $0x14] sm:$0xf]
        %v680 = vld [vmem:[%s5 + $0x18] sm:$0xf]
        %v681 = vld [vmem:[%s5 + $0x1c] sm:$0xf]
        %v682 = vld [vmem:[%s5 + $0x20] sm:$0xf]
        %v683 = vld [vmem:[%s5 + $0x24] sm:$0xf]
        %v684 = vld [vmem:[%s5 + $0x28] sm:$0xf]
        %v685 = vld [vmem:[%s5 + $0x2c] sm:$0xf]
        %v686 = vld [vmem:[%s5 + $0x30] sm:$0xf]
        %v687 = vld [vmem:[%s5 + $0x34] sm:$0xf]
        %v688 = vld [vmem:[%s5 + $0x38] sm:$0xf]
        %v689 = vld [vmem:[%s5 + $0x3c] sm:$0xf]
        %v690 = vld [vmem:[%s5 + $0x40] sm:$0xf]
        %v691 = vld [vmem:[%s5 + $0x44] sm:$0xf]
        %v692 = vld [vmem:[%s5 + $0x48] sm:$0xf]
        %v693 = vld [vmem:[%s5 + $0x4c] sm:$0xf]
        %v694 = vld [vmem:[%s5 + $0x50] sm:$0xf]
        %v695 = vld [vmem:[%s5 + $0x54] sm:$0xf]
        %v696 = vld [vmem:[%s5 + $0x58] sm:$0xf]
        %v697 = vld [vmem:[%s5 + $0x5c] sm:$0xf]
        %v698 = vld [vmem:[%s5 + $0x60] sm:$0xf]
        %v699 = vld [vmem:[%s5 + $0x64] sm:$0xf]
        %v700 = vld [vmem:[%s5 + $0x68] sm:$0xf]
        %v701 = vld [vmem:[%s5 + $0x6c] sm:$0xf]
        %v702 = vld [vmem:[%s5 + $0x70] sm:$0xf]
        %v703 = vld [vmem:[%s5 + $0x74] sm:$0xf]
        %v704 = vld [vmem:[%s5 + $0x78] sm:$0xf]
        %v705 = vld [vmem:[%s5 + $0x7c] sm:$0xf]
        %v706 = vld [vmem:[%s6] sm:$0xff]
        %v707 = vld [vmem:[%s6 + $0x8] sm:$0xff]
        %v708 = vld [vmem:[%s6 + $0x10] sm:$0xff]
        %v709 = vld [vmem:[%s6 + $0x18] sm:$0xff]
        %v710 = vld [vmem:[%s6 + $0x20] sm:$0xff]
        %v711 = vld [vmem:[%s6 + $0x28] sm:$0xff]
        %v712 = vld [vmem:[%s6 + $0x30] sm:$0xff]
        %v713 = vld [vmem:[%s6 + $0x38] sm:$0xff]
        %v714 = vld [vmem:[%s6 + $0x40] sm:$0xff]
        %v715 = vld [vmem:[%s6 + $0x48] sm:$0xff]
        %v716 = vld [vmem:[%s6 + $0x50] sm:$0xff]
        %v717 = vld [vmem:[%s6 + $0x58] sm:$0xff]
        %v718 = vld [vmem:[%s6 + $0x60] sm:$0xff]
        %v719 = vld [vmem:[%s6 + $0x68] sm:$0xff]
        %v720 = vld [vmem:[%s6 + $0x70] sm:$0xff]
        %v721 = vld [vmem:[%s6 + $0x78] sm:$0xff]
        %v722 = vld [vmem:[%s6 + $0x80] sm:$0xff]
        %v723 = vld [vmem:[%s6 + $0x88] sm:$0xff]
        %v724 = vld [vmem:[%s6 + $0x90] sm:$0xff]
        %v725 = vld [vmem:[%s6 + $0x98] sm:$0xff]
        %v726 = vld [vmem:[%s6 + $0xa0] sm:$0xff]
        %v727 = vld [vmem:[%s6 + $0xa8] sm:$0xff]
        %v728 = vld [vmem:[%s6 + $0xb0] sm:$0xff]
        %v729 = vld [vmem:[%s6 + $0xb8] sm:$0xff]
        %v730 = vld [vmem:[%s6 + $0xc0] sm:$0xff]
        %v731 = vld [vmem:[%s6 + $0xc8] sm:$0xff]
        %v732 = vld [vmem:[%s6 + $0xd0] sm:$0xff]
        %v733 = vld [vmem:[%s6 + $0xd8] sm:$0xff]
        %v734 = vld [vmem:[%s6 + $0xe0] sm:$0xff]
        %v735 = vld [vmem:[%s6 + $0xe8] sm:$0xff]
        %v736 = vld [vmem:[%s6 + $0xf0] sm:$0xff]
        %v737 = vld [vmem:[%s6 + $0xf8] sm:$0xff]
        %739 = vset.pattern.permute.xlu0 0
        %740 = vperm.xlu0 %739, %v706
        %v741 = vpop.permute.xlu0 %740
        %744 = vset.pattern.permute.xlu0 0
        %745 = vperm.xlu0 %744, %v707
        %v746 = vpop.permute.xlu0 %745
        %749 = vset.pattern.permute.xlu0 0
        %750 = vperm.xlu0 %749, %v708
        %v751 = vpop.permute.xlu0 %750
        %754 = vset.pattern.permute.xlu0 0
        %755 = vperm.xlu0 %754, %v709
        %v756 = vpop.permute.xlu0 %755
        %759 = vset.pattern.permute.xlu0 0
        %760 = vperm.xlu0 %759, %v710
        %v761 = vpop.permute.xlu0 %760
        %764 = vset.pattern.permute.xlu0 0
        %765 = vperm.xlu0 %764, %v711
        %v766 = vpop.permute.xlu0 %765
        %769 = vset.pattern.permute.xlu0 0
        %770 = vperm.xlu0 %769, %v712
        %v771 = vpop.permute.xlu0 %770
        %774 = vset.pattern.permute.xlu0 0
        %775 = vperm.xlu0 %774, %v713
        %v776 = vpop.permute.xlu0 %775
        %779 = vset.pattern.permute.xlu0 0
        %780 = vperm.xlu0 %779, %v714
        %v781 = vpop.permute.xlu0 %780
        %784 = vset.pattern.permute.xlu0 0
        %785 = vperm.xlu0 %784, %v715
        %v786 = vpop.permute.xlu0 %785
        %789 = vset.pattern.permute.xlu0 0
        %790 = vperm.xlu0 %789, %v716
        %v791 = vpop.permute.xlu0 %790
        %794 = vset.pattern.permute.xlu0 0
        %795 = vperm.xlu0 %794, %v717
        %v796 = vpop.permute.xlu0 %795
        %799 = vset.pattern.permute.xlu0 0
        %800 = vperm.xlu0 %799, %v718
        %v801 = vpop.permute.xlu0 %800
        %804 = vset.pattern.permute.xlu0 0
        %805 = vperm.xlu0 %804, %v719
        %v806 = vpop.permute.xlu0 %805
        %809 = vset.pattern.permute.xlu0 0
        %810 = vperm.xlu0 %809, %v720
        %v811 = vpop.permute.xlu0 %810
        %814 = vset.pattern.permute.xlu0 0
        %815 = vperm.xlu0 %814, %v721
        %v816 = vpop.permute.xlu0 %815
        %819 = vset.pattern.permute.xlu0 0
        %820 = vperm.xlu0 %819, %v722
        %v821 = vpop.permute.xlu0 %820
        %824 = vset.pattern.permute.xlu0 0
        %825 = vperm.xlu0 %824, %v723
        %v826 = vpop.permute.xlu0 %825
        %829 = vset.pattern.permute.xlu0 0
        %830 = vperm.xlu0 %829, %v724
        %v831 = vpop.permute.xlu0 %830
        %834 = vset.pattern.permute.xlu0 0
        %835 = vperm.xlu0 %834, %v725
        %v836 = vpop.permute.xlu0 %835
        %839 = vset.pattern.permute.xlu0 0
        %840 = vperm.xlu0 %839, %v726
        %v841 = vpop.permute.xlu0 %840
        %844 = vset.pattern.permute.xlu0 0
        %845 = vperm.xlu0 %844, %v727
        %v846 = vpop.permute.xlu0 %845
        %849 = vset.pattern.permute.xlu0 0
        %850 = vperm.xlu0 %849, %v728
        %v851 = vpop.permute.xlu0 %850
        %854 = vset.pattern.permute.xlu0 0
        %855 = vperm.xlu0 %854, %v729
        %v856 = vpop.permute.xlu0 %855
        %859 = vset.pattern.permute.xlu0 0
        %860 = vperm.xlu0 %859, %v730
        %v861 = vpop.permute.xlu0 %860
        %864 = vset.pattern.permute.xlu0 0
        %865 = vperm.xlu0 %864, %v731
        %v866 = vpop.permute.xlu0 %865
        %869 = vset.pattern.permute.xlu0 0
        %870 = vperm.xlu0 %869, %v732
        %v871 = vpop.permute.xlu0 %870
        %874 = vset.pattern.permute.xlu0 0
        %875 = vperm.xlu0 %874, %v733
        %v876 = vpop.permute.xlu0 %875
        %879 = vset.pattern.permute.xlu0 0
        %880 = vperm.xlu0 %879, %v734
        %v881 = vpop.permute.xlu0 %880
        %884 = vset.pattern.permute.xlu0 0
        %885 = vperm.xlu0 %884, %v735
        %v886 = vpop.permute.xlu0 %885
        %889 = vset.pattern.permute.xlu0 0
        %890 = vperm.xlu0 %889, %v736
        %v891 = vpop.permute.xlu0 %890
        %894 = vset.pattern.permute.xlu0 0
        %895 = vperm.xlu0 %894, %v737
        %v896 = vpop.permute.xlu0 %895
        %v930 = vunpack.c.l.b16 %v674
        %v931 = vunpack.c.l.b16 %v675
        %v932 = vunpack.c.l.b16 %v676
        %v933 = vunpack.c.l.b16 %v677
        %v934 = vunpack.c.l.b16 %v678
        %v935 = vunpack.c.l.b16 %v679
        %v936 = vunpack.c.l.b16 %v680
        %v937 = vunpack.c.l.b16 %v681
        %v938 = vunpack.c.l.b16 %v682
        %v939 = vunpack.c.l.b16 %v683
        %v940 = vunpack.c.l.b16 %v684
        %v941 = vunpack.c.l.b16 %v685
        %v942 = vunpack.c.l.b16 %v686
        %v943 = vunpack.c.l.b16 %v687
        %v944 = vunpack.c.l.b16 %v688
        %v945 = vunpack.c.l.b16 %v689
        %v946 = vunpack.c.l.b16 %v690
        %v947 = vunpack.c.l.b16 %v691
        %v948 = vunpack.c.l.b16 %v692
        %v949 = vunpack.c.l.b16 %v693
        %v950 = vunpack.c.l.b16 %v694
        %v951 = vunpack.c.l.b16 %v695
        %v952 = vunpack.c.l.b16 %v696
        %v953 = vunpack.c.l.b16 %v697
        %v954 = vunpack.c.l.b16 %v698
        %v955 = vunpack.c.l.b16 %v699
        %v956 = vunpack.c.l.b16 %v700
        %v957 = vunpack.c.l.b16 %v701
        %v958 = vunpack.c.l.b16 %v702
        %v959 = vunpack.c.l.b16 %v703
        %v960 = vunpack.c.l.b16 %v704
        %v961 = vunpack.c.l.b16 %v705
        %v962 = vpack.c.b16 %v931, %v930
        %v963 = vpack.c.b16 %v933, %v932
        %v964 = vpack.c.b16 %v935, %v934
        %v965 = vpack.c.b16 %v937, %v936
        %v966 = vpack.c.b16 %v939, %v938
        %v967 = vpack.c.b16 %v941, %v940
        %v968 = vpack.c.b16 %v943, %v942
        %v969 = vpack.c.b16 %v945, %v944
        %v970 = vpack.c.b16 %v947, %v946
        %v971 = vpack.c.b16 %v949, %v948
        %v972 = vpack.c.b16 %v951, %v950
        %v973 = vpack.c.b16 %v953, %v952
        %v974 = vpack.c.b16 %v955, %v954
        %v975 = vpack.c.b16 %v957, %v956
        %v976 = vpack.c.b16 %v959, %v958
        %v977 = vpack.c.b16 %v961, %v960
        %v982 = vunpack.c.l.b16 %v551
        %v983 = vunpack.c.h.b16 %v551
        %v984 = vunpack.c.l.b16 %v552
        %v985 = vunpack.c.h.b16 %v552
        %v986 = vunpack.c.l.b16 %v553
        %v987 = vunpack.c.h.b16 %v553
        %v988 = vunpack.c.l.b16 %v554
        %v989 = vunpack.c.h.b16 %v554
        %v990 = vpack.c.b16 %v984, %v982
        %v991 = vpack.c.b16 %v985, %v983
        %v992 = vpack.c.b16 %v988, %v986
        %v993 = vpack.c.b16 %v989, %v987
        %vm998 = vcmask 261120
        %v1000 = vsel %vm998, %v962, 0
        %v1003 = vsel %vm998, %v963, 0
        %v1006 = vsel %vm998, %v964, 0
        %v1009 = vsel %vm998, %v965, 0
        %v1012 = vsel %vm998, %v966, 0
        %v1015 = vsel %vm998, %v967, 0
        %v1018 = vsel %vm998, %v968, 0
        %v1021 = vsel %vm998, %v969, 0
        %v1024 = vsel %vm998, %v970, 0
        %v1027 = vsel %vm998, %v971, 0
        %v1030 = vsel %vm998, %v972, 0
        %v1033 = vsel %vm998, %v973, 0
        %v1036 = vsel %vm998, %v974, 0
        %v1039 = vsel %vm998, %v975, 0
        %v1042 = vsel %vm998, %v976, 0
        %v1045 = vsel %vm998, %v977, 0
        %1047 = vmatpush.bf16.msra.mxu0 0
        %1048 = vmatpush.bf16.msra.mxu0 0
        %1049 = vmatpush.bf16.msra.mxu0 0
        %1050 = vmatpush.bf16.msra.mxu0 0
        %1051 = vmatpush.bf16.msra.mxu0 0
        %1052 = vmatpush.bf16.msra.mxu0 0
        %1053 = vmatpush.bf16.msra.mxu0 %v992
        %1054 = vmatpush.bf16.msra.mxu0 %v990
        %1055 = vmatmul.bf16.gmra.mxu0 %v1000
        %v1056 = vpop.f32.mrf.mxu0
        %v1057 = vadd.f32 %v741, %v1056
        %v1058 = vpop.f32.mrf.mxu0
        %v1059 = vadd.f32 %v746, %v1058
        %1060 = vmatmul.bf16.gmra.mxu0 %v1003
        %v1061 = vpop.f32.mrf.mxu0
        %v1062 = vadd.f32 %v751, %v1061
        %v1063 = vpop.f32.mrf.mxu0
        %v1064 = vadd.f32 %v756, %v1063
        %1065 = vmatmul.bf16.gmra.mxu0 %v1006
        %v1066 = vpop.f32.mrf.mxu0
        %v1067 = vadd.f32 %v761, %v1066
        %v1068 = vpop.f32.mrf.mxu0
        %v1069 = vadd.f32 %v766, %v1068
        %1070 = vmatmul.bf16.gmra.mxu0 %v1009
        %v1071 = vpop.f32.mrf.mxu0
        %v1072 = vadd.f32 %v771, %v1071
        %v1073 = vpop.f32.mrf.mxu0
        %v1074 = vadd.f32 %v776, %v1073
        %1075 = vmatmul.bf16.gmra.mxu0 %v1012
        %v1076 = vpop.f32.mrf.mxu0
        %v1077 = vadd.f32 %v781, %v1076
        %v1078 = vpop.f32.mrf.mxu0
        %v1079 = vadd.f32 %v786, %v1078
        %1080 = vmatmul.bf16.gmra.mxu0 %v1015
        %v1081 = vpop.f32.mrf.mxu0
        %v1082 = vadd.f32 %v791, %v1081
        %v1083 = vpop.f32.mrf.mxu0
        %v1084 = vadd.f32 %v796, %v1083
        %1085 = vmatmul.bf16.gmra.mxu0 %v1018
        %v1086 = vpop.f32.mrf.mxu0
        %v1087 = vadd.f32 %v801, %v1086
        %v1088 = vpop.f32.mrf.mxu0
        %v1089 = vadd.f32 %v806, %v1088
        %1090 = vmatmul.bf16.gmra.mxu0 %v1021
        %v1091 = vpop.f32.mrf.mxu0
        %v1092 = vadd.f32 %v811, %v1091
        %v1093 = vpop.f32.mrf.mxu0
        %v1094 = vadd.f32 %v816, %v1093
        %1095 = vmatmul.bf16.gmra.mxu0 %v1024
        %v1096 = vpop.f32.mrf.mxu0
        %v1097 = vadd.f32 %v821, %v1096
        %v1098 = vpop.f32.mrf.mxu0
        %v1099 = vadd.f32 %v826, %v1098
        %1100 = vmatmul.bf16.gmra.mxu0 %v1027
        %v1101 = vpop.f32.mrf.mxu0
        %v1102 = vadd.f32 %v831, %v1101
        %v1103 = vpop.f32.mrf.mxu0
        %v1104 = vadd.f32 %v836, %v1103
        %1105 = vmatmul.bf16.gmra.mxu0 %v1030
        %v1106 = vpop.f32.mrf.mxu0
        %v1107 = vadd.f32 %v841, %v1106
        %v1108 = vpop.f32.mrf.mxu0
        %v1109 = vadd.f32 %v846, %v1108
        %1110 = vmatmul.bf16.gmra.mxu0 %v1033
        %v1111 = vpop.f32.mrf.mxu0
        %v1112 = vadd.f32 %v851, %v1111
        %v1113 = vpop.f32.mrf.mxu0
        %v1114 = vadd.f32 %v856, %v1113
        %1115 = vmatmul.bf16.gmra.mxu0 %v1036
        %v1116 = vpop.f32.mrf.mxu0
        %v1117 = vadd.f32 %v861, %v1116
        %v1118 = vpop.f32.mrf.mxu0
        %v1119 = vadd.f32 %v866, %v1118
        %1120 = vmatmul.bf16.gmra.mxu0 %v1039
        %v1121 = vpop.f32.mrf.mxu0
        %v1122 = vadd.f32 %v871, %v1121
        %v1123 = vpop.f32.mrf.mxu0
        %v1124 = vadd.f32 %v876, %v1123
        %1125 = vmatmul.bf16.gmra.mxu0 %v1042
        %v1126 = vpop.f32.mrf.mxu0
        %v1127 = vadd.f32 %v881, %v1126
        %v1128 = vpop.f32.mrf.mxu0
        %v1129 = vadd.f32 %v886, %v1128
        %1130 = vmatmul.bf16.gmra.mxu0 %v1045
        %v1131 = vpop.f32.mrf.mxu0
        %v1132 = vadd.f32 %v891, %v1131
        %v1133 = vpop.f32.mrf.mxu0
        %v1134 = vadd.f32 %v896, %v1133
        %1135 = vdwg.mxu0
        %1136 = vmatpush.bf16.msra.mxu0 0
        %1137 = vmatpush.bf16.msra.mxu0 0
        %1138 = vmatpush.bf16.msra.mxu0 0
        %1139 = vmatpush.bf16.msra.mxu0 0
        %1140 = vmatpush.bf16.msra.mxu0 0
        %1141 = vmatpush.bf16.msra.mxu0 0
        %1142 = vmatpush.bf16.msra.mxu0 %v993
        %1143 = vmatpush.bf16.msra.mxu0 %v991
        %1144 = vmatmul.bf16.gmra.mxu0 %v1000
        %v1145 = vpop.f32.mrf.mxu0
        %v1146 = vadd.f32 %v741, %v1145
        %v1147 = vpop.f32.mrf.mxu0
        %v1148 = vadd.f32 %v746, %v1147
        %1149 = vmatmul.bf16.gmra.mxu0 %v1003
        %v1150 = vpop.f32.mrf.mxu0
        %v1151 = vadd.f32 %v751, %v1150
        %v1152 = vpop.f32.mrf.mxu0
        %v1153 = vadd.f32 %v756, %v1152
        %1154 = vmatmul.bf16.gmra.mxu0 %v1006
        %v1155 = vpop.f32.mrf.mxu0
        %v1156 = vadd.f32 %v761, %v1155
        %v1157 = vpop.f32.mrf.mxu0
        %v1158 = vadd.f32 %v766, %v1157
        %1159 = vmatmul.bf16.gmra.mxu0 %v1009
        %v1160 = vpop.f32.mrf.mxu0
        %v1161 = vadd.f32 %v771, %v1160
        %v1162 = vpop.f32.mrf.mxu0
        %v1163 = vadd.f32 %v776, %v1162
        %1164 = vmatmul.bf16.gmra.mxu0 %v1012
        %v1165 = vpop.f32.mrf.mxu0
        %v1166 = vadd.f32 %v781, %v1165
        %v1167 = vpop.f32.mrf.mxu0
        %v1168 = vadd.f32 %v786, %v1167
        %1169 = vmatmul.bf16.gmra.mxu0 %v1015
        %v1170 = vpop.f32.mrf.mxu0
        %v1171 = vadd.f32 %v791, %v1170
        %v1172 = vpop.f32.mrf.mxu0
        %v1173 = vadd.f32 %v796, %v1172
        %1174 = vmatmul.bf16.gmra.mxu0 %v1018
        %v1175 = vpop.f32.mrf.mxu0
        %v1176 = vadd.f32 %v801, %v1175
        %v1177 = vpop.f32.mrf.mxu0
        %v1178 = vadd.f32 %v806, %v1177
        %1179 = vmatmul.bf16.gmra.mxu0 %v1021
        %v1180 = vpop.f32.mrf.mxu0
        %v1181 = vadd.f32 %v811, %v1180
        %v1182 = vpop.f32.mrf.mxu0
        %v1183 = vadd.f32 %v816, %v1182
        %1184 = vmatmul.bf16.gmra.mxu0 %v1024
        %v1185 = vpop.f32.mrf.mxu0
        %v1186 = vadd.f32 %v821, %v1185
        %v1187 = vpop.f32.mrf.mxu0
        %v1188 = vadd.f32 %v826, %v1187
        %1189 = vmatmul.bf16.gmra.mxu0 %v1027
        %v1190 = vpop.f32.mrf.mxu0
        %v1191 = vadd.f32 %v831, %v1190
        %v1192 = vpop.f32.mrf.mxu0
        %v1193 = vadd.f32 %v836, %v1192
        %1194 = vmatmul.bf16.gmra.mxu0 %v1030
        %v1195 = vpop.f32.mrf.mxu0
        %v1196 = vadd.f32 %v841, %v1195
        %v1197 = vpop.f32.mrf.mxu0
        %v1198 = vadd.f32 %v846, %v1197
        %1199 = vmatmul.bf16.gmra.mxu0 %v1033
        %v1200 = vpop.f32.mrf.mxu0
        %v1201 = vadd.f32 %v851, %v1200
        %v1202 = vpop.f32.mrf.mxu0
        %v1203 = vadd.f32 %v856, %v1202
        %1204 = vmatmul.bf16.gmra.mxu0 %v1036
        %v1205 = vpop.f32.mrf.mxu0
        %v1206 = vadd.f32 %v861, %v1205
        %v1207 = vpop.f32.mrf.mxu0
        %v1208 = vadd.f32 %v866, %v1207
        %1209 = vmatmul.bf16.gmra.mxu0 %v1039
        %v1210 = vpop.f32.mrf.mxu0
        %v1211 = vadd.f32 %v871, %v1210
        %v1212 = vpop.f32.mrf.mxu0
        %v1213 = vadd.f32 %v876, %v1212
        %1214 = vmatmul.bf16.gmra.mxu0 %v1042
        %v1215 = vpop.f32.mrf.mxu0
        %v1216 = vadd.f32 %v881, %v1215
        %v1217 = vpop.f32.mrf.mxu0
        %v1218 = vadd.f32 %v886, %v1217
        %1219 = vmatmul.bf16.gmra.mxu0 %v1045
        %v1220 = vpop.f32.mrf.mxu0
        %v1221 = vadd.f32 %v891, %v1220
        %v1222 = vpop.f32.mrf.mxu0
        %v1223 = vadd.f32 %v896, %v1222
        %1224 = vdwg.mxu0
        %1225 = vst [vmem:[#allocation2] sm:$0xff] %v1057
        %vm1226 = vcmask 97280
        %1227 = vst.msk [vmem:[#allocation2 + $0x8] sm:$0xff] %vm1226, %v1146
        %1228 = vst [vmem:[#allocation2 + $0x10] sm:$0xff] %v1059
        %1229 = vst.msk [vmem:[#allocation2 + $0x18] sm:$0xff] %vm1226, %v1148
        %1230 = vst [vmem:[#allocation2 + $0x20] sm:$0xff] %v1062
        %1231 = vst.msk [vmem:[#allocation2 + $0x28] sm:$0xff] %vm1226, %v1151
        %1232 = vst [vmem:[#allocation2 + $0x30] sm:$0xff] %v1064
        %1233 = vst.msk [vmem:[#allocation2 + $0x38] sm:$0xff] %vm1226, %v1153
        %1234 = vst [vmem:[#allocation2 + $0x40] sm:$0xff] %v1067
        %1235 = vst.msk [vmem:[#allocation2 + $0x48] sm:$0xff] %vm1226, %v1156
        %1236 = vst [vmem:[#allocation2 + $0x50] sm:$0xff] %v1069
        %1237 = vst.msk [vmem:[#allocation2 + $0x58] sm:$0xff] %vm1226, %v1158
        %1238 = vst [vmem:[#allocation2 + $0x60] sm:$0xff] %v1072
        %1239 = vst.msk [vmem:[#allocation2 + $0x68] sm:$0xff] %vm1226, %v1161
        %1240 = vst [vmem:[#allocation2 + $0x70] sm:$0xff] %v1074
        %1241 = vst.msk [vmem:[#allocation2 + $0x78] sm:$0xff] %vm1226, %v1163
        %1242 = vst [vmem:[#allocation2 + $0x80] sm:$0xff] %v1077
        %1243 = vst.msk [vmem:[#allocation2 + $0x88] sm:$0xff] %vm1226, %v1166
        %1244 = vst [vmem:[#allocation2 + $0x90] sm:$0xff] %v1079
        %1245 = vst.msk [vmem:[#allocation2 + $0x98] sm:$0xff] %vm1226, %v1168
        %1246 = vst [vmem:[#allocation2 + $0xa0] sm:$0xff] %v1082
        %1247 = vst.msk [vmem:[#allocation2 + $0xa8] sm:$0xff] %vm1226, %v1171
        %1248 = vst [vmem:[#allocation2 + $0xb0] sm:$0xff] %v1084
        %1249 = vst.msk [vmem:[#allocation2 + $0xb8] sm:$0xff] %vm1226, %v1173
        %1250 = vst [vmem:[#allocation2 + $0xc0] sm:$0xff] %v1087
        %1251 = vst.msk [vmem:[#allocation2 + $0xc8] sm:$0xff] %vm1226, %v1176
        %1252 = vst [vmem:[#allocation2 + $0xd0] sm:$0xff] %v1089
        %1253 = vst.msk [vmem:[#allocation2 + $0xd8] sm:$0xff] %vm1226, %v1178
        %1254 = vst [vmem:[#allocation2 + $0xe0] sm:$0xff] %v1092
        %1255 = vst.msk [vmem:[#allocation2 + $0xe8] sm:$0xff] %vm1226, %v1181
        %1256 = vst [vmem:[#allocation2 + $0xf0] sm:$0xff] %v1094
        %1257 = vst.msk [vmem:[#allocation2 + $0xf8] sm:$0xff] %vm1226, %v1183
        %1258 = vst [vmem:[#allocation2 + $0x100] sm:$0xff] %v1097
        %1259 = vst.msk [vmem:[#allocation2 + $0x108] sm:$0xff] %vm1226, %v1186
        %1260 = vst [vmem:[#allocation2 + $0x110] sm:$0xff] %v1099
        %1261 = vst.msk [vmem:[#allocation2 + $0x118] sm:$0xff] %vm1226, %v1188
        %1262 = vst [vmem:[#allocation2 + $0x120] sm:$0xff] %v1102
        %1263 = vst.msk [vmem:[#allocation2 + $0x128] sm:$0xff] %vm1226, %v1191
        %1264 = vst [vmem:[#allocation2 + $0x130] sm:$0xff] %v1104
        %1265 = vst.msk [vmem:[#allocation2 + $0x138] sm:$0xff] %vm1226, %v1193
        %1266 = vst [vmem:[#allocation2 + $0x140] sm:$0xff] %v1107
        %1267 = vst.msk [vmem:[#allocation2 + $0x148] sm:$0xff] %vm1226, %v1196
        %1268 = vst [vmem:[#allocation2 + $0x150] sm:$0xff] %v1109
        %1269 = vst.msk [vmem:[#allocation2 + $0x158] sm:$0xff] %vm1226, %v1198
        %1270 = vst [vmem:[#allocation2 + $0x160] sm:$0xff] %v1112
        %1271 = vst.msk [vmem:[#allocation2 + $0x168] sm:$0xff] %vm1226, %v1201
        %1272 = vst [vmem:[#allocation2 + $0x170] sm:$0xff] %v1114
        %1273 = vst.msk [vmem:[#allocation2 + $0x178] sm:$0xff] %vm1226, %v1203
        %1274 = vst [vmem:[#allocation2 + $0x180] sm:$0xff] %v1117
        %1275 = vst.msk [vmem:[#allocation2 + $0x188] sm:$0xff] %vm1226, %v1206
        %1276 = vst [vmem:[#allocation2 + $0x190] sm:$0xff] %v1119
        %1277 = vst.msk [vmem:[#allocation2 + $0x198] sm:$0xff] %vm1226, %v1208
        %1278 = vst [vmem:[#allocation2 + $0x1a0] sm:$0xff] %v1122
        %1279 = vst.msk [vmem:[#allocation2 + $0x1a8] sm:$0xff] %vm1226, %v1211
        %1280 = vst [vmem:[#allocation2 + $0x1b0] sm:$0xff] %v1124
        %1281 = vst.msk [vmem:[#allocation2 + $0x1b8] sm:$0xff] %vm1226, %v1213
        %1282 = vst [vmem:[#allocation2 + $0x1c0] sm:$0xff] %v1127
        %1283 = vst.msk [vmem:[#allocation2 + $0x1c8] sm:$0xff] %vm1226, %v1216
        %1284 = vst [vmem:[#allocation2 + $0x1d0] sm:$0xff] %v1129
        %1285 = vst.msk [vmem:[#allocation2 + $0x1d8] sm:$0xff] %vm1226, %v1218
        %1286 = vst [vmem:[#allocation2 + $0x1e0] sm:$0xff] %v1132
        %1287 = vst.msk [vmem:[#allocation2 + $0x1e8] sm:$0xff] %vm1226, %v1221
        %1288 = vst [vmem:[#allocation2 + $0x1f0] sm:$0xff] %v1134
        %1289 = vst.msk [vmem:[#allocation2 + $0x1f8] sm:$0xff] %vm1226, %v1223
        %v1290 = vld [vmem:[%s547] sm:$0xff]
        %v1291 = vld [vmem:[%s547 + $0x8] sm:$0xff]
        %v1292 = vld [vmem:[%s547 + $0x10] sm:$0xff]
        %v1293 = vld [vmem:[%s547 + $0x18] sm:$0xff]
        %1295 = vset.pattern.permute.xlu0 0
        %1296 = vperm.xlu0 %1295, %v1290
        %v1297 = vpop.permute.xlu0 %1296
        %1300 = vset.pattern.permute.xlu0 0
        %1301 = vperm.xlu0 %1300, %v1291
        %v1302 = vpop.permute.xlu0 %1301
        %1305 = vset.pattern.permute.xlu0 0
        %1306 = vperm.xlu0 %1305, %v1292
        %v1307 = vpop.permute.xlu0 %1306
        %1310 = vset.pattern.permute.xlu0 0
        %1311 = vperm.xlu0 %1310, %v1293
        %v1312 = vpop.permute.xlu0 %1311
        %v1314 = vadd.f32 %v666, %v1297
        %v1315 = vadd.f32 %v667, %v1297
        %v1316 = vadd.f32 %v668, %v1302
        %v1317 = vadd.f32 %v669, %v1302
        %v1318 = vadd.f32 %v670, %v1307
        %v1319 = vadd.f32 %v671, %v1307
        %v1320 = vadd.f32 %v672, %v1312
        %v1321 = vadd.f32 %v673, %v1312
        %v1322 = vmul.f32 %v1314, %v571
        %v1323 = vmul.f32 %v1315, %v572
        %v1324 = vmul.f32 %v1316, %v571
        %v1325 = vmul.f32 %v1317, %v572
        %v1326 = vmul.f32 %v1318, %v571
        %v1327 = vmul.f32 %v1319, %v572
        %v1328 = vmul.f32 %v1320, %v571
        %v1329 = vmul.f32 %v1321, %v572
        %v1330 = vpack.c.bf16 %v1323, %v1322
        %v1331 = vpack.c.bf16 %v1325, %v1324
        %v1332 = vpack.c.bf16 %v1327, %v1326
        %v1333 = vpack.c.bf16 %v1329, %v1328
        %v1338 = vunpack.c.l.b16 %v1330
        %v1339 = vunpack.c.h.b16 %v1330
        %v1340 = vunpack.c.l.b16 %v1331
        %v1341 = vunpack.c.h.b16 %v1331
        %v1342 = vunpack.c.l.b16 %v1332
        %v1343 = vunpack.c.h.b16 %v1332
        %v1344 = vunpack.c.l.b16 %v1333
        %v1345 = vunpack.c.h.b16 %v1333
        %v1346 = vpack.c.b16 %v1340, %v1338
        %v1347 = vpack.c.b16 %v1341, %v1339
        %v1348 = vpack.c.b16 %v1344, %v1342
        %v1349 = vpack.c.b16 %v1345, %v1343
        %1350 = vrot.lane.b32.xlu0 %v1346, 1
        %v1351 = vpop.permute.xlu0 %1350
        %1352 = vrot.lane.b32.xlu0 %v1347, 1
        %v1353 = vpop.permute.xlu0 %1352
        %1354 = vrot.lane.b32.xlu0 %v1348, 1
        %v1355 = vpop.permute.xlu0 %1354
        %1356 = vrot.lane.b32.xlu0 %v1349, 1
        %v1357 = vpop.permute.xlu0 %1356
        %vm1358 = vcmask 7168
        %v1359 = vsel %vm1358, %v1351, %v1353
        %v1360 = vsel %vm1358, %v1355, %v1357
        %vm1363 = vcmask 7168
        %v1366 = vsel %vm1363, 0, %v1351
        %v1369 = vsel %vm1363, 0, %v1355
        %1371 = vrot.lane.b32.xlu0 %v1346, 127
        %v1372 = vpop.permute.xlu0 %1371
        %1373 = vrot.lane.b32.xlu0 %v1347, 127
        %v1374 = vpop.permute.xlu0 %1373
        %1375 = vrot.lane.b32.xlu0 %v1348, 127
        %v1376 = vpop.permute.xlu0 %1375
        %1377 = vrot.lane.b32.xlu0 %v1349, 127
        %v1378 = vpop.permute.xlu0 %1377
        %vm1379 = vcmask 1039360
        %v1380 = vsel %vm1379, %v1372, %v1374
        %v1381 = vsel %vm1379, %v1376, %v1378
        %vm1384 = vcmask 89088
        %v1386 = vsel %vm1384, %v1374, 0
        %v1389 = vsel %vm1384, %v1378, 0
        %v1395 = vld [vmem:[%s7] sm:$0xf]
        %v1396 = vld [vmem:[%s7 + $0x4] sm:$0xf]
        %v1397 = vld [vmem:[%s7 + $0x8] sm:$0xf]
        %v1398 = vld [vmem:[%s7 + $0xc] sm:$0xf]
        %v1399 = vld [vmem:[%s7 + $0x10] sm:$0xf]
        %v1400 = vld [vmem:[%s7 + $0x14] sm:$0xf]
        %v1401 = vld [vmem:[%s7 + $0x18] sm:$0xf]
        %v1402 = vld [vmem:[%s7 + $0x1c] sm:$0xf]
        %v1403 = vld [vmem:[#allocation2] sm:$0xff]
        %v1404 = vld [vmem:[#allocation2 + $0x8] sm:$0xff]
        %v1405 = vld [vmem:[#allocation2 + $0x10] sm:$0xff]
        %v1406 = vld [vmem:[#allocation2 + $0x18] sm:$0xff]
        %v1407 = vld [vmem:[#allocation2 + $0x20] sm:$0xff]
        %v1408 = vld [vmem:[#allocation2 + $0x28] sm:$0xff]
        %v1409 = vld [vmem:[#allocation2 + $0x30] sm:$0xff]
        %v1410 = vld [vmem:[#allocation2 + $0x38] sm:$0xff]
        %v1411 = vld [vmem:[#allocation2 + $0x40] sm:$0xff]
        %v1412 = vld [vmem:[#allocation2 + $0x48] sm:$0xff]
        %v1413 = vld [vmem:[#allocation2 + $0x50] sm:$0xff]
        %v1414 = vld [vmem:[#allocation2 + $0x58] sm:$0xff]
        %v1415 = vld [vmem:[#allocation2 + $0x60] sm:$0xff]
        %v1416 = vld [vmem:[#allocation2 + $0x68] sm:$0xff]
        %v1417 = vld [vmem:[#allocation2 + $0x70] sm:$0xff]
        %v1418 = vld [vmem:[#allocation2 + $0x78] sm:$0xff]
        %v1427 = vunpack.c.l.b16 %v1395
        %v1428 = vunpack.c.l.b16 %v1396
        %v1429 = vunpack.c.l.b16 %v1397
        %v1430 = vunpack.c.l.b16 %v1398
        %v1431 = vunpack.c.l.b16 %v1399
        %v1432 = vunpack.c.l.b16 %v1400
        %v1433 = vunpack.c.l.b16 %v1401
        %v1434 = vunpack.c.l.b16 %v1402
        %v1435 = vpack.c.b16 %v1428, %v1427
        %v1436 = vpack.c.b16 %v1430, %v1429
        %v1437 = vpack.c.b16 %v1432, %v1431
        %v1438 = vpack.c.b16 %v1434, %v1433
        %vm1439 = vcmask 785408
        %v1441 = vsel %vm1439, %v1435, 0
        %v1444 = vsel %vm1439, %v1436, 0
        %v1447 = vsel %vm1439, %v1437, 0
        %v1450 = vsel %vm1439, %v1438, 0
        %1452 = vmatpush.bf16.msra.mxu0 0
        %1453 = vmatpush.bf16.msra.mxu0 0
        %1454 = vmatpush.bf16.msra.mxu0 %v1381
        %1455 = vmatpush.bf16.msra.mxu0 %v1380
        %1456 = vmatpush.bf16.msra.mxu0 %v1348
        %1457 = vmatpush.bf16.msra.mxu0 %v1346
        %1458 = vmatpush.bf16.msra.mxu0 %v1369
        %1459 = vmatpush.bf16.msra.mxu0 %v1366
        %1460 = vmatmul.bf16.gmra.mxu0 %v1441
        %v1461 = vpop.f32.mrf.mxu0
        %v1462 = vadd.f32 %v1403, %v1461
        %v1463 = vpop.f32.mrf.mxu0
        %v1464 = vadd.f32 %v1405, %v1463
        %1465 = vmatmul.bf16.gmra.mxu0 %v1444
        %v1466 = vpop.f32.mrf.mxu0
        %v1467 = vadd.f32 %v1407, %v1466
        %v1468 = vpop.f32.mrf.mxu0
        %v1469 = vadd.f32 %v1409, %v1468
        %1470 = vmatmul.bf16.gmra.mxu0 %v1447
        %v1471 = vpop.f32.mrf.mxu0
        %v1472 = vadd.f32 %v1411, %v1471
        %v1473 = vpop.f32.mrf.mxu0
        %v1474 = vadd.f32 %v1413, %v1473
        %1475 = vmatmul.bf16.gmra.mxu0 %v1450
        %v1476 = vpop.f32.mrf.mxu0
        %v1477 = vadd.f32 %v1415, %v1476
        %v1478 = vpop.f32.mrf.mxu0
        %v1479 = vadd.f32 %v1417, %v1478
        %1480 = vdwg.mxu0
        %1481 = vmatpush.bf16.msra.mxu0 0
        %1482 = vmatpush.bf16.msra.mxu0 0
        %1483 = vmatpush.bf16.msra.mxu0 %v1389
        %1484 = vmatpush.bf16.msra.mxu0 %v1386
        %1485 = vmatpush.bf16.msra.mxu0 %v1349
        %1486 = vmatpush.bf16.msra.mxu0 %v1347
        %1487 = vmatpush.bf16.msra.mxu0 %v1360
        %1488 = vmatpush.bf16.msra.mxu0 %v1359
        %1489 = vmatmul.bf16.gmra.mxu0 %v1441
        %v1490 = vpop.f32.mrf.mxu0
        %v1491 = vadd.f32 %v1404, %v1490
        %v1492 = vpop.f32.mrf.mxu0
        %v1493 = vadd.f32 %v1406, %v1492
        %1494 = vmatmul.bf16.gmra.mxu0 %v1444
        %v1495 = vpop.f32.mrf.mxu0
        %v1496 = vadd.f32 %v1408, %v1495
        %v1497 = vpop.f32.mrf.mxu0
        %v1498 = vadd.f32 %v1410, %v1497
        %1499 = vmatmul.bf16.gmra.mxu0 %v1447
        %v1500 = vpop.f32.mrf.mxu0
        %v1501 = vadd.f32 %v1412, %v1500
        %v1502 = vpop.f32.mrf.mxu0
        %v1503 = vadd.f32 %v1414, %v1502
        %1504 = vmatmul.bf16.gmra.mxu0 %v1450
        %v1505 = vpop.f32.mrf.mxu0
        %v1506 = vadd.f32 %v1416, %v1505
        %v1507 = vpop.f32.mrf.mxu0
        %v1508 = vadd.f32 %v1418, %v1507
        %1509 = vdwg.mxu0
        %v1510 = vxor.u32 %v1462, 2147483648
        %v1511 = vxor.u32 %v1491, 2147483648
        %v1512 = vxor.u32 %v1464, 2147483648
        %v1513 = vxor.u32 %v1493, 2147483648
        %v1514 = vxor.u32 %v1467, 2147483648
        %v1515 = vxor.u32 %v1496, 2147483648
        %v1516 = vxor.u32 %v1469, 2147483648
        %v1517 = vxor.u32 %v1498, 2147483648
        %v1518 = vmul.f32 %v1510, 1.442695
        %v1519 = vpow.pop %v1518
        %v1520 = vmul.f32 %v1511, 1.442695
        %v1521 = vpow.pop %v1520
        %v1522 = vmul.f32 %v1512, 1.442695
        %v1523 = vpow.pop %v1522
        %v1524 = vmul.f32 %v1513, 1.442695
        %v1525 = vpow.pop %v1524
        %v1526 = vmul.f32 %v1514, 1.442695
        %v1527 = vpow.pop %v1526
        %v1528 = vmul.f32 %v1515, 1.442695
        %v1529 = vpow.pop %v1528
        %v1530 = vmul.f32 %v1516, 1.442695
        %v1531 = vpow.pop %v1530
        %v1532 = vmul.f32 %v1517, 1.442695
        %v1533 = vpow.pop %v1532
        %v1534 = vadd.f32 %v1519, 1.0
        %v1535 = vadd.f32 %v1521, 1.0
        %v1536 = vadd.f32 %v1523, 1.0
        %v1537 = vadd.f32 %v1525, 1.0
        %v1538 = vadd.f32 %v1527, 1.0
        %v1539 = vadd.f32 %v1529, 1.0
        %v1540 = vadd.f32 %v1531, 1.0
        %v1541 = vadd.f32 %v1533, 1.0
        %v1542 = vrcp.pop %v1534
        %v1543 = vmul.f32 %v1534, %v1542
        %v1544 = vsub.f32 1.0, %v1543
        %v1545 = vmul.f32 %v1542, %v1544
        %v1546 = vadd.f32 %v1542, %v1545
        %vm1547 = vweird.f32 %v1534
        %vm1548 = vweird.f32 %v1542
        %vm1549 = vmor %vm1547, %vm1548
        %v1550 = vsel %vm1549, %v1542, %v1546
        %v1551 = vand.u32 2147483647, %v1534
        %vm1552 = vcmp.eq.f32.partialorder %v1551, 8.507059e+37
        %v1553 = vand.u32 %v1534, 2147483648
        %v1554 = vor.u32 1.1754944e-38, %v1553
        %v1555 = vsel %vm1552, %v1554, %v1550
        %v1556 = vmul.f32 1.0, %v1555
        %v1557 = vrcp.pop %v1535
        %v1558 = vmul.f32 %v1535, %v1557
        %v1559 = vsub.f32 1.0, %v1558
        %v1560 = vmul.f32 %v1557, %v1559
        %v1561 = vadd.f32 %v1557, %v1560
        %vm1562 = vweird.f32 %v1535
        %vm1563 = vweird.f32 %v1557
        %vm1564 = vmor %vm1562, %vm1563
        %v1565 = vsel %vm1564, %v1557, %v1561
        %v1566 = vand.u32 2147483647, %v1535
        %vm1567 = vcmp.eq.f32.partialorder %v1566, 8.507059e+37
        %v1568 = vand.u32 %v1535, 2147483648
        %v1569 = vor.u32 1.1754944e-38, %v1568
        %v1570 = vsel %vm1567, %v1569, %v1565
        %v1571 = vmul.f32 1.0, %v1570
        %v1572 = vrcp.pop %v1536
        %v1573 = vmul.f32 %v1536, %v1572
        %v1574 = vsub.f32 1.0, %v1573
        %v1575 = vmul.f32 %v1572, %v1574
        %v1576 = vadd.f32 %v1572, %v1575
        %vm1577 = vweird.f32 %v1536
        %vm1578 = vweird.f32 %v1572
        %vm1579 = vmor %vm1577, %vm1578
        %v1580 = vsel %vm1579, %v1572, %v1576
        %v1581 = vand.u32 2147483647, %v1536
        %vm1582 = vcmp.eq.f32.partialorder %v1581, 8.507059e+37
        %v1583 = vand.u32 %v1536, 2147483648
        %v1584 = vor.u32 1.1754944e-38, %v1583
        %v1585 = vsel %vm1582, %v1584, %v1580
        %v1586 = vmul.f32 1.0, %v1585
        %v1587 = vrcp.pop %v1537
        %v1588 = vmul.f32 %v1537, %v1587
        %v1589 = vsub.f32 1.0, %v1588
        %v1590 = vmul.f32 %v1587, %v1589
        %v1591 = vadd.f32 %v1587, %v1590
        %vm1592 = vweird.f32 %v1537
        %vm1593 = vweird.f32 %v1587
        %vm1594 = vmor %vm1592, %vm1593
        %v1595 = vsel %vm1594, %v1587, %v1591
        %v1596 = vand.u32 2147483647, %v1537
        %vm1597 = vcmp.eq.f32.partialorder %v1596, 8.507059e+37
        %v1598 = vand.u32 %v1537, 2147483648
        %v1599 = vor.u32 1.1754944e-38, %v1598
        %v1600 = vsel %vm1597, %v1599, %v1595
        %v1601 = vmul.f32 1.0, %v1600
        %v1602 = vrcp.pop %v1538
        %v1603 = vmul.f32 %v1538, %v1602
        %v1604 = vsub.f32 1.0, %v1603
        %v1605 = vmul.f32 %v1602, %v1604
        %v1606 = vadd.f32 %v1602, %v1605
        %vm1607 = vweird.f32 %v1538
        %vm1608 = vweird.f32 %v1602
        %vm1609 = vmor %vm1607, %vm1608
        %v1610 = vsel %vm1609, %v1602, %v1606
        %v1611 = vand.u32 2147483647, %v1538
        %vm1612 = vcmp.eq.f32.partialorder %v1611, 8.507059e+37
        %v1613 = vand.u32 %v1538, 2147483648
        %v1614 = vor.u32 1.1754944e-38, %v1613
        %v1615 = vsel %vm1612, %v1614, %v1610
        %v1616 = vmul.f32 1.0, %v1615
        %v1617 = vrcp.pop %v1539
        %v1618 = vmul.f32 %v1539, %v1617
        %v1619 = vsub.f32 1.0, %v1618
        %v1620 = vmul.f32 %v1617, %v1619
        %v1621 = vadd.f32 %v1617, %v1620
        %vm1622 = vweird.f32 %v1539
        %vm1623 = vweird.f32 %v1617
        %vm1624 = vmor %vm1622, %vm1623
        %v1625 = vsel %vm1624, %v1617, %v1621
        %v1626 = vand.u32 2147483647, %v1539
        %vm1627 = vcmp.eq.f32.partialorder %v1626, 8.507059e+37
        %v1628 = vand.u32 %v1539, 2147483648
        %v1629 = vor.u32 1.1754944e-38, %v1628
        %v1630 = vsel %vm1627, %v1629, %v1625
        %v1631 = vmul.f32 1.0, %v1630
        %v1632 = vrcp.pop %v1540
        %v1633 = vmul.f32 %v1540, %v1632
        %v1634 = vsub.f32 1.0, %v1633
        %v1635 = vmul.f32 %v1632, %v1634
        %v1636 = vadd.f32 %v1632, %v1635
        %vm1637 = vweird.f32 %v1540
        %vm1638 = vweird.f32 %v1632
        %vm1639 = vmor %vm1637, %vm1638
        %v1640 = vsel %vm1639, %v1632, %v1636
        %v1641 = vand.u32 2147483647, %v1540
        %vm1642 = vcmp.eq.f32.partialorder %v1641, 8.507059e+37
        %v1643 = vand.u32 %v1540, 2147483648
        %v1644 = vor.u32 1.1754944e-38, %v1643
        %v1645 = vsel %vm1642, %v1644, %v1640
        %v1646 = vmul.f32 1.0, %v1645
        %v1647 = vrcp.pop %v1541
        %v1648 = vmul.f32 %v1541, %v1647
        %v1649 = vsub.f32 1.0, %v1648
        %v1650 = vmul.f32 %v1647, %v1649
        %v1651 = vadd.f32 %v1647, %v1650
        %vm1652 = vweird.f32 %v1541
        %vm1653 = vweird.f32 %v1647
        %vm1654 = vmor %vm1652, %vm1653
        %v1655 = vsel %vm1654, %v1647, %v1651
        %v1656 = vand.u32 2147483647, %v1541
        %vm1657 = vcmp.eq.f32.partialorder %v1656, 8.507059e+37
        %v1658 = vand.u32 %v1541, 2147483648
        %v1659 = vor.u32 1.1754944e-38, %v1658
        %v1660 = vsel %vm1657, %v1659, %v1655
        %v1661 = vmul.f32 1.0, %v1660
        %v1662 = vtanh.pop %v1472
        %v1663 = vtanh.pop %v1501
        %v1664 = vtanh.pop %v1474
        %v1665 = vtanh.pop %v1503
        %v1666 = vtanh.pop %v1477
        %v1667 = vtanh.pop %v1506
        %v1668 = vtanh.pop %v1479
        %v1669 = vtanh.pop %v1508
        %v1670 = vmul.f32 %v1556, %v1662
        %v1671 = vmul.f32 %v1571, %v1663
        %v1672 = vmul.f32 %v1586, %v1664
        %v1673 = vmul.f32 %v1601, %v1665
        %v1674 = vmul.f32 %v1616, %v1666
        %v1675 = vmul.f32 %v1631, %v1667
        %v1676 = vmul.f32 %v1646, %v1668
        %v1677 = vmul.f32 %v1661, %v1669
        %v1678 = vld [vmem:[%s8] sm:$0xf]
        %v1679 = vld [vmem:[%s8 + $0x4] sm:$0xf]
        %v1680 = vld [vmem:[%s8 + $0x8] sm:$0xf]
        %v1681 = vld [vmem:[%s8 + $0xc] sm:$0xf]
        %v1682 = vld [vmem:[%s8 + $0x10] sm:$0xf]
        %v1683 = vld [vmem:[%s8 + $0x14] sm:$0xf]
        %v1684 = vld [vmem:[%s8 + $0x18] sm:$0xf]
        %v1685 = vld [vmem:[%s8 + $0x1c] sm:$0xf]
        %v1686 = vpack.c.bf16 %v1672, %v1670
        %v1687 = vpack.c.bf16 %v1673, %v1671
        %v1688 = vpack.c.bf16 %v1676, %v1674
        %v1689 = vpack.c.bf16 %v1677, %v1675
        %v1690 = vld [vmem:[%s9] sm:$0xff]
        %v1691 = vld [vmem:[%s9 + $0x8] sm:$0xff]
        %v1692 = vld [vmem:[%s9 + $0x10] sm:$0xff]
        %v1693 = vld [vmem:[%s9 + $0x18] sm:$0xff]
        %v1694 = vld [vmem:[%s9 + $0x20] sm:$0xff]
        %v1695 = vld [vmem:[%s9 + $0x28] sm:$0xff]
        %v1696 = vld [vmem:[%s9 + $0x30] sm:$0xff]
        %v1697 = vld [vmem:[%s9 + $0x38] sm:$0xff]
        %1699 = vset.pattern.permute.xlu0 0
        %1700 = vperm.xlu0 %1699, %v1690
        %v1701 = vpop.permute.xlu0 %1700
        %1704 = vset.pattern.permute.xlu0 0
        %1705 = vperm.xlu0 %1704, %v1691
        %v1706 = vpop.permute.xlu0 %1705
        %1709 = vset.pattern.permute.xlu0 0
        %1710 = vperm.xlu0 %1709, %v1692
        %v1711 = vpop.permute.xlu0 %1710
        %1714 = vset.pattern.permute.xlu0 0
        %1715 = vperm.xlu0 %1714, %v1693
        %v1716 = vpop.permute.xlu0 %1715
        %1719 = vset.pattern.permute.xlu0 0
        %1720 = vperm.xlu0 %1719, %v1694
        %v1721 = vpop.permute.xlu0 %1720
        %1724 = vset.pattern.permute.xlu0 0
        %1725 = vperm.xlu0 %1724, %v1695
        %v1726 = vpop.permute.xlu0 %1725
        %1729 = vset.pattern.permute.xlu0 0
        %1730 = vperm.xlu0 %1729, %v1696
        %v1731 = vpop.permute.xlu0 %1730
        %1734 = vset.pattern.permute.xlu0 0
        %1735 = vperm.xlu0 %1734, %v1697
        %v1736 = vpop.permute.xlu0 %1735
        %v1746 = vunpack.c.l.b16 %v1678
        %v1747 = vunpack.c.l.b16 %v1679
        %v1748 = vunpack.c.l.b16 %v1680
        %v1749 = vunpack.c.l.b16 %v1681
        %v1750 = vunpack.c.l.b16 %v1682
        %v1751 = vunpack.c.l.b16 %v1683
        %v1752 = vunpack.c.l.b16 %v1684
        %v1753 = vunpack.c.l.b16 %v1685
        %v1754 = vpack.c.b16 %v1747, %v1746
        %v1755 = vpack.c.b16 %v1749, %v1748
        %v1756 = vpack.c.b16 %v1751, %v1750
        %v1757 = vpack.c.b16 %v1753, %v1752
        %v1759 = vsel %vm998, %v1754, 0
        %v1762 = vsel %vm998, %v1755, 0
        %v1765 = vsel %vm998, %v1756, 0
        %v1768 = vsel %vm998, %v1757, 0
        %1770 = vmatpush.bf16.msra.mxu0 0
        %1771 = vmatpush.bf16.msra.mxu0 0
        %1772 = vmatpush.bf16.msra.mxu0 0
        %1773 = vmatpush.bf16.msra.mxu0 0
        %1774 = vmatpush.bf16.msra.mxu0 0
        %1775 = vmatpush.bf16.msra.mxu0 0
        %1776 = vmatpush.bf16.msra.mxu0 %v1688
        %1777 = vmatpush.bf16.msra.mxu0 %v1686
        %1778 = vmatmul.bf16.gmra.mxu0 %v1759
        %v1779 = vpop.f32.mrf.mxu0
        %v1780 = vadd.f32 %v1701, %v1779
        %v1781 = vpop.f32.mrf.mxu0
        %v1782 = vadd.f32 %v1706, %v1781
        %1783 = vmatmul.bf16.gmra.mxu0 %v1762
        %v1784 = vpop.f32.mrf.mxu0
        %v1785 = vadd.f32 %v1711, %v1784
        %v1786 = vpop.f32.mrf.mxu0
        %v1787 = vadd.f32 %v1716, %v1786
        %1788 = vmatmul.bf16.gmra.mxu0 %v1765
        %v1789 = vpop.f32.mrf.mxu0
        %v1790 = vadd.f32 %v1721, %v1789
        %v1791 = vpop.f32.mrf.mxu0
        %v1792 = vadd.f32 %v1726, %v1791
        %1793 = vmatmul.bf16.gmra.mxu0 %v1768
        %v1794 = vpop.f32.mrf.mxu0
        %v1795 = vadd.f32 %v1731, %v1794
        %v1796 = vpop.f32.mrf.mxu0
        %v1797 = vadd.f32 %v1736, %v1796
        %1798 = vdwg.mxu0
        %1799 = vmatpush.bf16.msra.mxu0 0
        %1800 = vmatpush.bf16.msra.mxu0 0
        %1801 = vmatpush.bf16.msra.mxu0 0
        %1802 = vmatpush.bf16.msra.mxu0 0
        %1803 = vmatpush.bf16.msra.mxu0 0
        %1804 = vmatpush.bf16.msra.mxu0 0
        %1805 = vmatpush.bf16.msra.mxu0 %v1689
        %1806 = vmatpush.bf16.msra.mxu0 %v1687
        %1807 = vmatmul.bf16.gmra.mxu0 %v1759
        %v1808 = vpop.f32.mrf.mxu0
        %v1809 = vadd.f32 %v1701, %v1808
        %v1810 = vpop.f32.mrf.mxu0
        %v1811 = vadd.f32 %v1706, %v1810
        %1812 = vmatmul.bf16.gmra.mxu0 %v1762
        %v1813 = vpop.f32.mrf.mxu0
        %v1814 = vadd.f32 %v1711, %v1813
        %v1815 = vpop.f32.mrf.mxu0
        %v1816 = vadd.f32 %v1716, %v1815
        %1817 = vmatmul.bf16.gmra.mxu0 %v1765
        %v1818 = vpop.f32.mrf.mxu0
        %v1819 = vadd.f32 %v1721, %v1818
        %v1820 = vpop.f32.mrf.mxu0
        %v1821 = vadd.f32 %v1726, %v1820
        %1822 = vmatmul.bf16.gmra.mxu0 %v1768
        %v1823 = vpop.f32.mrf.mxu0
        %v1824 = vadd.f32 %v1731, %v1823
        %v1825 = vpop.f32.mrf.mxu0
        %v1826 = vadd.f32 %v1736, %v1825
        %1827 = vdwg.mxu0
        %v1828 = vadd.f32 %v666, %v1780
        %v1829 = vadd.f32 %v667, %v1809
        %v1830 = vadd.f32 %v668, %v1782
        %v1831 = vadd.f32 %v669, %v1811
        %v1832 = vadd.f32 %v670, %v1785
        %v1833 = vadd.f32 %v671, %v1814
        %v1834 = vadd.f32 %v672, %v1787
        %v1835 = vadd.f32 %v673, %v1816
        %v1836 = vmul.f32 %v1828, 0.70710677
        %v1837 = vmul.f32 %v1829, 0.70710677
        %v1838 = vmul.f32 %v1830, 0.70710677
        %v1839 = vmul.f32 %v1831, 0.70710677
        %v1840 = vmul.f32 %v1832, 0.70710677
        %v1841 = vmul.f32 %v1833, 0.70710677
        %v1842 = vmul.f32 %v1834, 0.70710677
        %v1843 = vmul.f32 %v1835, 0.70710677
        %v1844 = vadd.f32 %v1790, 0.0
        %v1845 = vadd.f32 %v1819, 0.0
        %v1846 = vadd.f32 %v1792, 0.0
        %v1847 = vadd.f32 %v1821, 0.0
        %v1848 = vadd.f32 %v1795, 0.0
        %v1849 = vadd.f32 %v1824, 0.0
        %v1850 = vadd.f32 %v1797, 0.0
        %v1851 = vadd.f32 %v1826, 0.0
        %s1852 = scalar_lea.vmem %s547, 32
        %v1853 = vld [vmem:[%s1852] sm:$0xff]
        %v1854 = vld [vmem:[%s1852 + $0x8] sm:$0xff]
        %v1855 = vld [vmem:[%s1852 + $0x10] sm:$0xff]
        %v1856 = vld [vmem:[%s1852 + $0x18] sm:$0xff]
        %1858 = vset.pattern.permute.xlu0 0
        %1859 = vperm.xlu0 %1858, %v1853
        %v1860 = vpop.permute.xlu0 %1859
        %1863 = vset.pattern.permute.xlu0 0
        %1864 = vperm.xlu0 %1863, %v1854
        %v1865 = vpop.permute.xlu0 %1864
        %1868 = vset.pattern.permute.xlu0 0
        %1869 = vperm.xlu0 %1868, %v1855
        %v1870 = vpop.permute.xlu0 %1869
        %1873 = vset.pattern.permute.xlu0 0
        %1874 = vperm.xlu0 %1873, %v1856
        %v1875 = vpop.permute.xlu0 %1874
        %v1877 = vadd.f32 %v1836, %v1860
        %v1878 = vadd.f32 %v1837, %v1860
        %v1879 = vadd.f32 %v1838, %v1865
        %v1880 = vadd.f32 %v1839, %v1865
        %v1881 = vadd.f32 %v1840, %v1870
        %v1882 = vadd.f32 %v1841, %v1870
        %v1883 = vadd.f32 %v1842, %v1875
        %v1884 = vadd.f32 %v1843, %v1875
        %v1885 = vmul.f32 %v1877, %v571
        %v1886 = vmul.f32 %v1878, %v572
        %v1887 = vmul.f32 %v1879, %v571
        %v1888 = vmul.f32 %v1880, %v572
        %v1889 = vmul.f32 %v1881, %v571
        %v1890 = vmul.f32 %v1882, %v572
        %v1891 = vmul.f32 %v1883, %v571
        %v1892 = vmul.f32 %v1884, %v572
        %v1893 = vpack.c.bf16 %v1886, %v1885
        %v1894 = vpack.c.bf16 %v1888, %v1887
        %v1895 = vpack.c.bf16 %v1890, %v1889
        %v1896 = vpack.c.bf16 %v1892, %v1891
        %v1901 = vunpack.c.l.b16 %v1893
        %v1902 = vunpack.c.h.b16 %v1893
        %v1903 = vunpack.c.l.b16 %v1894
        %v1904 = vunpack.c.h.b16 %v1894
        %v1905 = vunpack.c.l.b16 %v1895
        %v1906 = vunpack.c.h.b16 %v1895
        %v1907 = vunpack.c.l.b16 %v1896
        %v1908 = vunpack.c.h.b16 %v1896
        %v1909 = vpack.c.b16 %v1903, %v1901
        %v1910 = vpack.c.b16 %v1904, %v1902
        %v1911 = vpack.c.b16 %v1907, %v1905
        %v1912 = vpack.c.b16 %v1908, %v1906
        %1913 = vrot.lane.b32.xlu0 %v1909, 2
        %v1914 = vpop.permute.xlu0 %1913
        %1915 = vrot.lane.b32.xlu0 %v1910, 2
        %v1916 = vpop.permute.xlu0 %1915
        %1917 = vrot.lane.b32.xlu0 %v1911, 2
        %v1918 = vpop.permute.xlu0 %1917
        %1919 = vrot.lane.b32.xlu0 %v1912, 2
        %v1920 = vpop.permute.xlu0 %1919
        %vm1921 = vcmask 15360
        %v1922 = vsel %vm1921, %v1914, %v1916
        %v1923 = vsel %vm1921, %v1918, %v1920
        %vm1926 = vcmask 15360
        %v1928 = vsel %vm1926, 0, %v1914
        %v1931 = vsel %vm1926, 0, %v1918
        %1933 = vrot.lane.b32.xlu0 %v1909, 126
        %v1934 = vpop.permute.xlu0 %1933
        %1935 = vrot.lane.b32.xlu0 %v1910, 126
        %v1936 = vpop.permute.xlu0 %1935
        %1937 = vrot.lane.b32.xlu0 %v1911, 126
        %v1938 = vpop.permute.xlu0 %1937
        %1939 = vrot.lane.b32.xlu0 %v1912, 126
        %v1940 = vpop.permute.xlu0 %1939
        %vm1941 = vcmask 1031168
        %v1942 = vsel %vm1941, %v1934, %v1936
        %v1943 = vsel %vm1941, %v1938, %v1940
        %vm1946 = vcmask 80896
        %v1948 = vsel %vm1946, %v1936, 0
        %v1951 = vsel %vm1946, %v1940, 0
        %s1957 = scalar_lea.vmem %s7, 32
        %v1958 = vld [vmem:[%s1957] sm:$0xf]
        %v1959 = vld [vmem:[%s1957 + $0x4] sm:$0xf]
        %v1960 = vld [vmem:[%s1957 + $0x8] sm:$0xf]
        %v1961 = vld [vmem:[%s1957 + $0xc] sm:$0xf]
        %v1962 = vld [vmem:[%s1957 + $0x10] sm:$0xf]
        %v1963 = vld [vmem:[%s1957 + $0x14] sm:$0xf]
        %v1964 = vld [vmem:[%s1957 + $0x18] sm:$0xf]
        %v1965 = vld [vmem:[%s1957 + $0x1c] sm:$0xf]
        %v1966 = vld [vmem:[#allocation2 + $0x80] sm:$0xff]
        %v1967 = vld [vmem:[#allocation2 + $0x88] sm:$0xff]
        %v1968 = vld [vmem:[#allocation2 + $0x90] sm:$0xff]
        %v1969 = vld [vmem:[#allocation2 + $0x98] sm:$0xff]
        %v1970 = vld [vmem:[#allocation2 + $0xa0] sm:$0xff]
        %v1971 = vld [vmem:[#allocation2 + $0xa8] sm:$0xff]
        %v1972 = vld [vmem:[#allocation2 + $0xb0] sm:$0xff]
        %v1973 = vld [vmem:[#allocation2 + $0xb8] sm:$0xff]
        %v1974 = vld [vmem:[#allocation2 + $0xc0] sm:$0xff]
        %v1975 = vld [vmem:[#allocation2 + $0xc8] sm:$0xff]
        %v1976 = vld [vmem:[#allocation2 + $0xd0] sm:$0xff]
        %v1977 = vld [vmem:[#allocation2 + $0xd8] sm:$0xff]
        %v1978 = vld [vmem:[#allocation2 + $0xe0] sm:$0xff]
        %v1979 = vld [vmem:[#allocation2 + $0xe8] sm:$0xff]
        %v1980 = vld [vmem:[#allocation2 + $0xf0] sm:$0xff]
        %v1981 = vld [vmem:[#allocation2 + $0xf8] sm:$0xff]
        %v1990 = vunpack.c.l.b16 %v1958
        %v1991 = vunpack.c.l.b16 %v1959
        %v1992 = vunpack.c.l.b16 %v1960
        %v1993 = vunpack.c.l.b16 %v1961
        %v1994 = vunpack.c.l.b16 %v1962
        %v1995 = vunpack.c.l.b16 %v1963
        %v1996 = vunpack.c.l.b16 %v1964
        %v1997 = vunpack.c.l.b16 %v1965
        %v1998 = vpack.c.b16 %v1991, %v1990
        %v1999 = vpack.c.b16 %v1993, %v1992
        %v2000 = vpack.c.b16 %v1995, %v1994
        %v2001 = vpack.c.b16 %v1997, %v1996
        %v2003 = vsel %vm1439, %v1998, 0
        %v2006 = vsel %vm1439, %v1999, 0
        %v2009 = vsel %vm1439, %v2000, 0
        %v2012 = vsel %vm1439, %v2001, 0
        %2014 = vmatpush.bf16.msra.mxu0 0
        %2015 = vmatpush.bf16.msra.mxu0 0
        %2016 = vmatpush.bf16.msra.mxu0 %v1943
        %2017 = vmatpush.bf16.msra.mxu0 %v1942
        %2018 = vmatpush.bf16.msra.mxu0 %v1911
        %2019 = vmatpush.bf16.msra.mxu0 %v1909
        %2020 = vmatpush.bf16.msra.mxu0 %v1931
        %2021 = vmatpush.bf16.msra.mxu0 %v1928
        %2022 = vmatmul.bf16.gmra.mxu0 %v2003
        %v2023 = vpop.f32.mrf.mxu0
        %v2024 = vadd.f32 %v1966, %v2023
        %v2025 = vpop.f32.mrf.mxu0
        %v2026 = vadd.f32 %v1968, %v2025
        %2027 = vmatmul.bf16.gmra.mxu0 %v2006
        %v2028 = vpop.f32.mrf.mxu0
        %v2029 = vadd.f32 %v1970, %v2028
        %v2030 = vpop.f32.mrf.mxu0
        %v2031 = vadd.f32 %v1972, %v2030
        %2032 = vmatmul.bf16.gmra.mxu0 %v2009
        %v2033 = vpop.f32.mrf.mxu0
        %v2034 = vadd.f32 %v1974, %v2033
        %v2035 = vpop.f32.mrf.mxu0
        %v2036 = vadd.f32 %v1976, %v2035
        %2037 = vmatmul.bf16.gmra.mxu0 %v2012
        %v2038 = vpop.f32.mrf.mxu0
        %v2039 = vadd.f32 %v1978, %v2038
        %v2040 = vpop.f32.mrf.mxu0
        %v2041 = vadd.f32 %v1980, %v2040
        %2042 = vdwg.mxu0
        %2043 = vmatpush.bf16.msra.mxu0 0
        %2044 = vmatpush.bf16.msra.mxu0 0
        %2045 = vmatpush.bf16.msra.mxu0 %v1951
        %2046 = vmatpush.bf16.msra.mxu0 %v1948
        %2047 = vmatpush.bf16.msra.mxu0 %v1912
        %2048 = vmatpush.bf16.msra.mxu0 %v1910
        %2049 = vmatpush.bf16.msra.mxu0 %v1923
        %2050 = vmatpush.bf16.msra.mxu0 %v1922
        %2051 = vmatmul.bf16.gmra.mxu0 %v2003
        %v2052 = vpop.f32.mrf.mxu0
        %v2053 = vadd.f32 %v1967, %v2052
        %v2054 = vpop.f32.mrf.mxu0
        %v2055 = vadd.f32 %v1969, %v2054
        %2056 = vmatmul.bf16.gmra.mxu0 %v2006
        %v2057 = vpop.f32.mrf.mxu0
        %v2058 = vadd.f32 %v1971, %v2057
        %v2059 = vpop.f32.mrf.mxu0
        %v2060 = vadd.f32 %v1973, %v2059
        %2061 = vmatmul.bf16.gmra.mxu0 %v2009
        %v2062 = vpop.f32.mrf.mxu0
        %v2063 = vadd.f32 %v1975, %v2062
        %v2064 = vpop.f32.mrf.mxu0
        %v2065 = vadd.f32 %v1977, %v2064
        %2066 = vmatmul.bf16.gmra.mxu0 %v2012
        %v2067 = vpop.f32.mrf.mxu0
        %v2068 = vadd.f32 %v1979, %v2067
        %v2069 = vpop.f32.mrf.mxu0
        %v2070 = vadd.f32 %v1981, %v2069
        %2071 = vdwg.mxu0
        %v2072 = vxor.u32 %v2024, 2147483648
        %v2073 = vxor.u32 %v2053, 2147483648
        %v2074 = vxor.u32 %v2026, 2147483648
        %v2075 = vxor.u32 %v2055, 2147483648
        %v2076 = vxor.u32 %v2029, 2147483648
        %v2077 = vxor.u32 %v2058, 2147483648
        %v2078 = vxor.u32 %v2031, 2147483648
        %v2079 = vxor.u32 %v2060, 2147483648
        %v2080 = vmul.f32 %v2072, 1.442695
        %v2081 = vpow.pop %v2080
        %v2082 = vmul.f32 %v2073, 1.442695
        %v2083 = vpow.pop %v2082
        %v2084 = vmul.f32 %v2074, 1.442695
        %v2085 = vpow.pop %v2084
        %v2086 = vmul.f32 %v2075, 1.442695
        %v2087 = vpow.pop %v2086
        %v2088 = vmul.f32 %v2076, 1.442695
        %v2089 = vpow.pop %v2088
        %v2090 = vmul.f32 %v2077, 1.442695
        %v2091 = vpow.pop %v2090
        %v2092 = vmul.f32 %v2078, 1.442695
        %v2093 = vpow.pop %v2092
        %v2094 = vmul.f32 %v2079, 1.442695
        %v2095 = vpow.pop %v2094
        %v2096 = vadd.f32 %v2081, 1.0
        %v2097 = vadd.f32 %v2083, 1.0
        %v2098 = vadd.f32 %v2085, 1.0
        %v2099 = vadd.f32 %v2087, 1.0
        %v2100 = vadd.f32 %v2089, 1.0
        %v2101 = vadd.f32 %v2091, 1.0
        %v2102 = vadd.f32 %v2093, 1.0
        %v2103 = vadd.f32 %v2095, 1.0
        %v2104 = vrcp.pop %v2096
        %v2105 = vmul.f32 %v2096, %v2104
        %v2106 = vsub.f32 1.0, %v2105
        %v2107 = vmul.f32 %v2104, %v2106
        %v2108 = vadd.f32 %v2104, %v2107
        %vm2109 = vweird.f32 %v2096
        %vm2110 = vweird.f32 %v2104
        %vm2111 = vmor %vm2109, %vm2110
        %v2112 = vsel %vm2111, %v2104, %v2108
        %v2113 = vand.u32 2147483647, %v2096
        %vm2114 = vcmp.eq.f32.partialorder %v2113, 8.507059e+37
        %v2115 = vand.u32 %v2096, 2147483648
        %v2116 = vor.u32 1.1754944e-38, %v2115
        %v2117 = vsel %vm2114, %v2116, %v2112
        %v2118 = vmul.f32 1.0, %v2117
        %v2119 = vrcp.pop %v2097
        %v2120 = vmul.f32 %v2097, %v2119
        %v2121 = vsub.f32 1.0, %v2120
        %v2122 = vmul.f32 %v2119, %v2121
        %v2123 = vadd.f32 %v2119, %v2122
        %vm2124 = vweird.f32 %v2097
        %vm2125 = vweird.f32 %v2119
        %vm2126 = vmor %vm2124, %vm2125
        %v2127 = vsel %vm2126, %v2119, %v2123
        %v2128 = vand.u32 2147483647, %v2097
        %vm2129 = vcmp.eq.f32.partialorder %v2128, 8.507059e+37
        %v2130 = vand.u32 %v2097, 2147483648
        %v2131 = vor.u32 1.1754944e-38, %v2130
        %v2132 = vsel %vm2129, %v2131, %v2127
        %v2133 = vmul.f32 1.0, %v2132
        %v2134 = vrcp.pop %v2098
        %v2135 = vmul.f32 %v2098, %v2134
        %v2136 = vsub.f32 1.0, %v2135
        %v2137 = vmul.f32 %v2134, %v2136
        %v2138 = vadd.f32 %v2134, %v2137
        %vm2139 = vweird.f32 %v2098
        %vm2140 = vweird.f32 %v2134
        %vm2141 = vmor %vm2139, %vm2140
        %v2142 = vsel %vm2141, %v2134, %v2138
        %v2143 = vand.u32 2147483647, %v2098
        %vm2144 = vcmp.eq.f32.partialorder %v2143, 8.507059e+37
        %v2145 = vand.u32 %v2098, 2147483648
        %v2146 = vor.u32 1.1754944e-38, %v2145
        %v2147 = vsel %vm2144, %v2146, %v2142
        %v2148 = vmul.f32 1.0, %v2147
        %v2149 = vrcp.pop %v2099
        %v2150 = vmul.f32 %v2099, %v2149
        %v2151 = vsub.f32 1.0, %v2150
        %v2152 = vmul.f32 %v2149, %v2151
        %v2153 = vadd.f32 %v2149, %v2152
        %vm2154 = vweird.f32 %v2099
        %vm2155 = vweird.f32 %v2149
        %vm2156 = vmor %vm2154, %vm2155
        %v2157 = vsel %vm2156, %v2149, %v2153
        %v2158 = vand.u32 2147483647, %v2099
        %vm2159 = vcmp.eq.f32.partialorder %v2158, 8.507059e+37
        %v2160 = vand.u32 %v2099, 2147483648
        %v2161 = vor.u32 1.1754944e-38, %v2160
        %v2162 = vsel %vm2159, %v2161, %v2157
        %v2163 = vmul.f32 1.0, %v2162
        %v2164 = vrcp.pop %v2100
        %v2165 = vmul.f32 %v2100, %v2164
        %v2166 = vsub.f32 1.0, %v2165
        %v2167 = vmul.f32 %v2164, %v2166
        %v2168 = vadd.f32 %v2164, %v2167
        %vm2169 = vweird.f32 %v2100
        %vm2170 = vweird.f32 %v2164
        %vm2171 = vmor %vm2169, %vm2170
        %v2172 = vsel %vm2171, %v2164, %v2168
        %v2173 = vand.u32 2147483647, %v2100
        %vm2174 = vcmp.eq.f32.partialorder %v2173, 8.507059e+37
        %v2175 = vand.u32 %v2100, 2147483648
        %v2176 = vor.u32 1.1754944e-38, %v2175
        %v2177 = vsel %vm2174, %v2176, %v2172
        %v2178 = vmul.f32 1.0, %v2177
        %v2179 = vrcp.pop %v2101
        %v2180 = vmul.f32 %v2101, %v2179
        %v2181 = vsub.f32 1.0, %v2180
        %v2182 = vmul.f32 %v2179, %v2181
        %v2183 = vadd.f32 %v2179, %v2182
        %vm2184 = vweird.f32 %v2101
        %vm2185 = vweird.f32 %v2179
        %vm2186 = vmor %vm2184, %vm2185
        %v2187 = vsel %vm2186, %v2179, %v2183
        %v2188 = vand.u32 2147483647, %v2101
        %vm2189 = vcmp.eq.f32.partialorder %v2188, 8.507059e+37
        %v2190 = vand.u32 %v2101, 2147483648
        %v2191 = vor.u32 1.1754944e-38, %v2190
        %v2192 = vsel %vm2189, %v2191, %v2187
        %v2193 = vmul.f32 1.0, %v2192
        %v2194 = vrcp.pop %v2102
        %v2195 = vmul.f32 %v2102, %v2194
        %v2196 = vsub.f32 1.0, %v2195
        %v2197 = vmul.f32 %v2194, %v2196
        %v2198 = vadd.f32 %v2194, %v2197
        %vm2199 = vweird.f32 %v2102
        %vm2200 = vweird.f32 %v2194
        %vm2201 = vmor %vm2199, %vm2200
        %v2202 = vsel %vm2201, %v2194, %v2198
        %v2203 = vand.u32 2147483647, %v2102
        %vm2204 = vcmp.eq.f32.partialorder %v2203, 8.507059e+37
        %v2205 = vand.u32 %v2102, 2147483648
        %v2206 = vor.u32 1.1754944e-38, %v2205
        %v2207 = vsel %vm2204, %v2206, %v2202
        %v2208 = vmul.f32 1.0, %v2207
        %v2209 = vrcp.pop %v2103
        %v2210 = vmul.f32 %v2103, %v2209
        %v2211 = vsub.f32 1.0, %v2210
        %v2212 = vmul.f32 %v2209, %v2211
        %v2213 = vadd.f32 %v2209, %v2212
        %vm2214 = vweird.f32 %v2103
        %vm2215 = vweird.f32 %v2209
        %vm2216 = vmor %vm2214, %vm2215
        %v2217 = vsel %vm2216, %v2209, %v2213
        %v2218 = vand.u32 2147483647, %v2103
        %vm2219 = vcmp.eq.f32.partialorder %v2218, 8.507059e+37
        %v2220 = vand.u32 %v2103, 2147483648
        %v2221 = vor.u32 1.1754944e-38, %v2220
        %v2222 = vsel %vm2219, %v2221, %v2217
        %v2223 = vmul.f32 1.0, %v2222
        %v2224 = vtanh.pop %v2034
        %v2225 = vtanh.pop %v2063
        %v2226 = vtanh.pop %v2036
        %v2227 = vtanh.pop %v2065
        %v2228 = vtanh.pop %v2039
        %v2229 = vtanh.pop %v2068
        %v2230 = vtanh.pop %v2041
        %v2231 = vtanh.pop %v2070
        %v2232 = vmul.f32 %v2118, %v2224
        %v2233 = vmul.f32 %v2133, %v2225
        %v2234 = vmul.f32 %v2148, %v2226
        %v2235 = vmul.f32 %v2163, %v2227
        %v2236 = vmul.f32 %v2178, %v2228
        %v2237 = vmul.f32 %v2193, %v2229
        %v2238 = vmul.f32 %v2208, %v2230
        %v2239 = vmul.f32 %v2223, %v2231
        %s2240 = scalar_lea.vmem %s8, 32
        %v2241 = vld [vmem:[%s2240] sm:$0xf]
        %v2242 = vld [vmem:[%s2240 + $0x4] sm:$0xf]
        %v2243 = vld [vmem:[%s2240 + $0x8] sm:$0xf]
        %v2244 = vld [vmem:[%s2240 + $0xc] sm:$0xf]
        %v2245 = vld [vmem:[%s2240 + $0x10] sm:$0xf]
        %v2246 = vld [vmem:[%s2240 + $0x14] sm:$0xf]
        %v2247 = vld [vmem:[%s2240 + $0x18] sm:$0xf]
        %v2248 = vld [vmem:[%s2240 + $0x1c] sm:$0xf]
        %v2249 = vpack.c.bf16 %v2234, %v2232
        %v2250 = vpack.c.bf16 %v2235, %v2233
        %v2251 = vpack.c.bf16 %v2238, %v2236
        %v2252 = vpack.c.bf16 %v2239, %v2237
        %s2253 = scalar_lea.vmem %s9, 64
        %v2254 = vld [vmem:[%s2253] sm:$0xff]
        %v2255 = vld [vmem:[%s2253 + $0x8] sm:$0xff]
        %v2256 = vld [vmem:[%s2253 + $0x10] sm:$0xff]
        %v2257 = vld [vmem:[%s2253 + $0x18] sm:$0xff]
        %v2258 = vld [vmem:[%s2253 + $0x20] sm:$0xff]
        %v2259 = vld [vmem:[%s2253 + $0x28] sm:$0xff]
        %v2260 = vld [vmem:[%s2253 + $0x30] sm:$0xff]
        %v2261 = vld [vmem:[%s2253 + $0x38] sm:$0xff]
        %2263 = vset.pattern.permute.xlu0 0
        %2264 = vperm.xlu0 %2263, %v2254
        %v2265 = vpop.permute.xlu0 %2264
        %2268 = vset.pattern.permute.xlu0 0
        %2269 = vperm.xlu0 %2268, %v2255
        %v2270 = vpop.permute.xlu0 %2269
        %2273 = vset.pattern.permute.xlu0 0
        %2274 = vperm.xlu0 %2273, %v2256
        %v2275 = vpop.permute.xlu0 %2274
        %2278 = vset.pattern.permute.xlu0 0
        %2279 = vperm.xlu0 %2278, %v2257
        %v2280 = vpop.permute.xlu0 %2279
        %2283 = vset.pattern.permute.xlu0 0
        %2284 = vperm.xlu0 %2283, %v2258
        %v2285 = vpop.permute.xlu0 %2284
        %2288 = vset.pattern.permute.xlu0 0
        %2289 = vperm.xlu0 %2288, %v2259
        %v2290 = vpop.permute.xlu0 %2289
        %2293 = vset.pattern.permute.xlu0 0
        %2294 = vperm.xlu0 %2293, %v2260
        %v2295 = vpop.permute.xlu0 %2294
        %2298 = vset.pattern.permute.xlu0 0
        %2299 = vperm.xlu0 %2298, %v2261
        %v2300 = vpop.permute.xlu0 %2299
        %v2310 = vunpack.c.l.b16 %v2241
        %v2311 = vunpack.c.l.b16 %v2242
        %v2312 = vunpack.c.l.b16 %v2243
        %v2313 = vunpack.c.l.b16 %v2244
        %v2314 = vunpack.c.l.b16 %v2245
        %v2315 = vunpack.c.l.b16 %v2246
        %v2316 = vunpack.c.l.b16 %v2247
        %v2317 = vunpack.c.l.b16 %v2248
        %v2318 = vpack.c.b16 %v2311, %v2310
        %v2319 = vpack.c.b16 %v2313, %v2312
        %v2320 = vpack.c.b16 %v2315, %v2314
        %v2321 = vpack.c.b16 %v2317, %v2316
        %v2323 = vsel %vm998, %v2318, 0
        %v2326 = vsel %vm998, %v2319, 0
        %v2329 = vsel %vm998, %v2320, 0
        %v2332 = vsel %vm998, %v2321, 0
        %2334 = vmatpush.bf16.msra.mxu0 0
        %2335 = vmatpush.bf16.msra.mxu0 0
        %2336 = vmatpush.bf16.msra.mxu0 0
        %2337 = vmatpush.bf16.msra.mxu0 0
        %2338 = vmatpush.bf16.msra.mxu0 0
        %2339 = vmatpush.bf16.msra.mxu0 0
        %2340 = vmatpush.bf16.msra.mxu0 %v2251
        %2341 = vmatpush.bf16.msra.mxu0 %v2249
        %2342 = vmatmul.bf16.gmra.mxu0 %v2323
        %v2343 = vpop.f32.mrf.mxu0
        %v2344 = vadd.f32 %v2265, %v2343
        %v2345 = vpop.f32.mrf.mxu0
        %v2346 = vadd.f32 %v2270, %v2345
        %2347 = vmatmul.bf16.gmra.mxu0 %v2326
        %v2348 = vpop.f32.mrf.mxu0
        %v2349 = vadd.f32 %v2275, %v2348
        %v2350 = vpop.f32.mrf.mxu0
        %v2351 = vadd.f32 %v2280, %v2350
        %2352 = vmatmul.bf16.gmra.mxu0 %v2329
        %v2353 = vpop.f32.mrf.mxu0
        %v2354 = vadd.f32 %v2285, %v2353
        %v2355 = vpop.f32.mrf.mxu0
        %v2356 = vadd.f32 %v2290, %v2355
        %2357 = vmatmul.bf16.gmra.mxu0 %v2332
        %v2358 = vpop.f32.mrf.mxu0
        %v2359 = vadd.f32 %v2295, %v2358
        %v2360 = vpop.f32.mrf.mxu0
        %v2361 = vadd.f32 %v2300, %v2360
        %2362 = vdwg.mxu0
        %2363 = vmatpush.bf16.msra.mxu0 0
        %2364 = vmatpush.bf16.msra.mxu0 0
        %2365 = vmatpush.bf16.msra.mxu0 0
        %2366 = vmatpush.bf16.msra.mxu0 0
        %2367 = vmatpush.bf16.msra.mxu0 0
        %2368 = vmatpush.bf16.msra.mxu0 0
        %2369 = vmatpush.bf16.msra.mxu0 %v2252
        %2370 = vmatpush.bf16.msra.mxu0 %v2250
        %2371 = vmatmul.bf16.gmra.mxu0 %v2323
        %v2372 = vpop.f32.mrf.mxu0
        %v2373 = vadd.f32 %v2265, %v2372
        %v2374 = vpop.f32.mrf.mxu0
        %v2375 = vadd.f32 %v2270, %v2374
        %2376 = vmatmul.bf16.gmra.mxu0 %v2326
        %v2377 = vpop.f32.mrf.mxu0
        %v2378 = vadd.f32 %v2275, %v2377
        %v2379 = vpop.f32.mrf.mxu0
        %v2380 = vadd.f32 %v2280, %v2379
        %2381 = vmatmul.bf16.gmra.mxu0 %v2329
        %v2382 = vpop.f32.mrf.mxu0
        %v2383 = vadd.f32 %v2285, %v2382
        %v2384 = vpop.f32.mrf.mxu0
        %v2385 = vadd.f32 %v2290, %v2384
        %2386 = vmatmul.bf16.gmra.mxu0 %v2332
        %v2387 = vpop.f32.mrf.mxu0
        %v2388 = vadd.f32 %v2295, %v2387
        %v2389 = vpop.f32.mrf.mxu0
        %v2390 = vadd.f32 %v2300, %v2389
        %2391 = vdwg.mxu0
        %v2392 = vadd.f32 %v1836, %v2344
        %v2393 = vadd.f32 %v1837, %v2373
        %v2394 = vadd.f32 %v1838, %v2346
        %v2395 = vadd.f32 %v1839, %v2375
        %v2396 = vadd.f32 %v1840, %v2349
        %v2397 = vadd.f32 %v1841, %v2378
        %v2398 = vadd.f32 %v1842, %v2351
        %v2399 = vadd.f32 %v1843, %v2380
        %v2400 = vmul.f32 %v2392, 0.70710677
        %v2401 = vmul.f32 %v2393, 0.70710677
        %v2402 = vmul.f32 %v2394, 0.70710677
        %v2403 = vmul.f32 %v2395, 0.70710677
        %v2404 = vmul.f32 %v2396, 0.70710677
        %v2405 = vmul.f32 %v2397, 0.70710677
        %v2406 = vmul.f32 %v2398, 0.70710677
        %v2407 = vmul.f32 %v2399, 0.70710677
        %v2408 = vadd.f32 %v1844, %v2354
        %v2409 = vadd.f32 %v1845, %v2383
        %v2410 = vadd.f32 %v1846, %v2356
        %v2411 = vadd.f32 %v1847, %v2385
        %v2412 = vadd.f32 %v1848, %v2359
        %v2413 = vadd.f32 %v1849, %v2388
        %v2414 = vadd.f32 %v1850, %v2361
        %v2415 = vadd.f32 %v1851, %v2390
        %s2416 = scalar_lea.vmem %s547, 64
        %v2417 = vld [vmem:[%s2416] sm:$0xff]
        %v2418 = vld [vmem:[%s2416 + $0x8] sm:$0xff]
        %v2419 = vld [vmem:[%s2416 + $0x10] sm:$0xff]
        %v2420 = vld [vmem:[%s2416 + $0x18] sm:$0xff]
        %2422 = vset.pattern.permute.xlu0 0
        %2423 = vperm.xlu0 %2422, %v2417
        %v2424 = vpop.permute.xlu0 %2423
        %2427 = vset.pattern.permute.xlu0 0
        %2428 = vperm.xlu0 %2427, %v2418
        %v2429 = vpop.permute.xlu0 %2428
        %2432 = vset.pattern.permute.xlu0 0
        %2433 = vperm.xlu0 %2432, %v2419
        %v2434 = vpop.permute.xlu0 %2433
        %2437 = vset.pattern.permute.xlu0 0
        %2438 = vperm.xlu0 %2437, %v2420
        %v2439 = vpop.permute.xlu0 %2438
        %v2441 = vadd.f32 %v2400, %v2424
        %v2442 = vadd.f32 %v2401, %v2424
        %v2443 = vadd.f32 %v2402, %v2429
        %v2444 = vadd.f32 %v2403, %v2429
        %v2445 = vadd.f32 %v2404, %v2434
        %v2446 = vadd.f32 %v2405, %v2434
        %v2447 = vadd.f32 %v2406, %v2439
        %v2448 = vadd.f32 %v2407, %v2439
        %v2449 = vmul.f32 %v2441, %v571
        %v2450 = vmul.f32 %v2442, %v572
        %v2451 = vmul.f32 %v2443, %v571
        %v2452 = vmul.f32 %v2444, %v572
        %v2453 = vmul.f32 %v2445, %v571
        %v2454 = vmul.f32 %v2446, %v572
        %v2455 = vmul.f32 %v2447, %v571
        %v2456 = vmul.f32 %v2448, %v572
        %v2457 = vpack.c.bf16 %v2450, %v2449
        %v2458 = vpack.c.bf16 %v2452, %v2451
        %v2459 = vpack.c.bf16 %v2454, %v2453
        %v2460 = vpack.c.bf16 %v2456, %v2455
        %v2465 = vunpack.c.l.b16 %v2457
        %v2466 = vunpack.c.h.b16 %v2457
        %v2467 = vunpack.c.l.b16 %v2458
        %v2468 = vunpack.c.h.b16 %v2458
        %v2469 = vunpack.c.l.b16 %v2459
        %v2470 = vunpack.c.h.b16 %v2459
        %v2471 = vunpack.c.l.b16 %v2460
        %v2472 = vunpack.c.h.b16 %v2460
        %v2473 = vpack.c.b16 %v2467, %v2465
        %v2474 = vpack.c.b16 %v2468, %v2466
        %v2475 = vpack.c.b16 %v2471, %v2469
        %v2476 = vpack.c.b16 %v2472, %v2470
        %2477 = vrot.lane.b32.xlu0 %v2473, 1
        %v2478 = vpop.permute.xlu0 %2477
        %2479 = vrot.lane.b32.xlu0 %v2474, 1
        %v2480 = vpop.permute.xlu0 %2479
        %2481 = vrot.lane.b32.xlu0 %v2475, 1
        %v2482 = vpop.permute.xlu0 %2481
        %2483 = vrot.lane.b32.xlu0 %v2476, 1
        %v2484 = vpop.permute.xlu0 %2483
        %v2485 = vsel %vm1358, %v2478, %v2480
        %v2486 = vsel %vm1358, %v2482, %v2484
        %v2490 = vsel %vm1363, 0, %v2478
        %v2493 = vsel %vm1363, 0, %v2482
        %2495 = vrot.lane.b32.xlu0 %v2473, 127
        %v2496 = vpop.permute.xlu0 %2495
        %2497 = vrot.lane.b32.xlu0 %v2474, 127
        %v2498 = vpop.permute.xlu0 %2497
        %2499 = vrot.lane.b32.xlu0 %v2475, 127
        %v2500 = vpop.permute.xlu0 %2499
        %2501 = vrot.lane.b32.xlu0 %v2476, 127
        %v2502 = vpop.permute.xlu0 %2501
        %v2503 = vsel %vm1379, %v2496, %v2498
        %v2504 = vsel %vm1379, %v2500, %v2502
        %v2508 = vsel %vm1384, %v2498, 0
        %v2511 = vsel %vm1384, %v2502, 0
        %s2517 = scalar_lea.vmem %s7, 64
        %v2518 = vld [vmem:[%s2517] sm:$0xf]
        %v2519 = vld [vmem:[%s2517 + $0x4] sm:$0xf]
        %v2520 = vld [vmem:[%s2517 + $0x8] sm:$0xf]
        %v2521 = vld [vmem:[%s2517 + $0xc] sm:$0xf]
        %v2522 = vld [vmem:[%s2517 + $0x10] sm:$0xf]
        %v2523 = vld [vmem:[%s2517 + $0x14] sm:$0xf]
        %v2524 = vld [vmem:[%s2517 + $0x18] sm:$0xf]
        %v2525 = vld [vmem:[%s2517 + $0x1c] sm:$0xf]
        %v2526 = vld [vmem:[#allocation2 + $0x100] sm:$0xff]
        %v2527 = vld [vmem:[#allocation2 + $0x108] sm:$0xff]
        %v2528 = vld [vmem:[#allocation2 + $0x110] sm:$0xff]
        %v2529 = vld [vmem:[#allocation2 + $0x118] sm:$0xff]
        %v2530 = vld [vmem:[#allocation2 + $0x120] sm:$0xff]
        %v2531 = vld [vmem:[#allocation2 + $0x128] sm:$0xff]
        %v2532 = vld [vmem:[#allocation2 + $0x130] sm:$0xff]
        %v2533 = vld [vmem:[#allocation2 + $0x138] sm:$0xff]
        %v2534 = vld [vmem:[#allocation2 + $0x140] sm:$0xff]
        %v2535 = vld [vmem:[#allocation2 + $0x148] sm:$0xff]
        %v2536 = vld [vmem:[#allocation2 + $0x150] sm:$0xff]
        %v2537 = vld [vmem:[#allocation2 + $0x158] sm:$0xff]
        %v2538 = vld [vmem:[#allocation2 + $0x160] sm:$0xff]
        %v2539 = vld [vmem:[#allocation2 + $0x168] sm:$0xff]
        %v2540 = vld [vmem:[#allocation2 + $0x170] sm:$0xff]
        %v2541 = vld [vmem:[#allocation2 + $0x178] sm:$0xff]
        %v2550 = vunpack.c.l.b16 %v2518
        %v2551 = vunpack.c.l.b16 %v2519
        %v2552 = vunpack.c.l.b16 %v2520
        %v2553 = vunpack.c.l.b16 %v2521
        %v2554 = vunpack.c.l.b16 %v2522
        %v2555 = vunpack.c.l.b16 %v2523
        %v2556 = vunpack.c.l.b16 %v2524
        %v2557 = vunpack.c.l.b16 %v2525
        %v2558 = vpack.c.b16 %v2551, %v2550
        %v2559 = vpack.c.b16 %v2553, %v2552
        %v2560 = vpack.c.b16 %v2555, %v2554
        %v2561 = vpack.c.b16 %v2557, %v2556
        %v2563 = vsel %vm1439, %v2558, 0
        %v2566 = vsel %vm1439, %v2559, 0
        %v2569 = vsel %vm1439, %v2560, 0
        %v2572 = vsel %vm1439, %v2561, 0
        %2574 = vmatpush.bf16.msra.mxu0 0
        %2575 = vmatpush.bf16.msra.mxu0 0
        %2576 = vmatpush.bf16.msra.mxu0 %v2504
        %2577 = vmatpush.bf16.msra.mxu0 %v2503
        %2578 = vmatpush.bf16.msra.mxu0 %v2475
        %2579 = vmatpush.bf16.msra.mxu0 %v2473
        %2580 = vmatpush.bf16.msra.mxu0 %v2493
        %2581 = vmatpush.bf16.msra.mxu0 %v2490
        %2582 = vmatmul.bf16.gmra.mxu0 %v2563
        %v2583 = vpop.f32.mrf.mxu0
        %v2584 = vadd.f32 %v2526, %v2583
        %v2585 = vpop.f32.mrf.mxu0
        %v2586 = vadd.f32 %v2528, %v2585
        %2587 = vmatmul.bf16.gmra.mxu0 %v2566
        %v2588 = vpop.f32.mrf.mxu0
        %v2589 = vadd.f32 %v2530, %v2588
        %v2590 = vpop.f32.mrf.mxu0
        %v2591 = vadd.f32 %v2532, %v2590
        %2592 = vmatmul.bf16.gmra.mxu0 %v2569
        %v2593 = vpop.f32.mrf.mxu0
        %v2594 = vadd.f32 %v2534, %v2593
        %v2595 = vpop.f32.mrf.mxu0
        %v2596 = vadd.f32 %v2536, %v2595
        %2597 = vmatmul.bf16.gmra.mxu0 %v2572
        %v2598 = vpop.f32.mrf.mxu0
        %v2599 = vadd.f32 %v2538, %v2598
        %v2600 = vpop.f32.mrf.mxu0
        %v2601 = vadd.f32 %v2540, %v2600
        %2602 = vdwg.mxu0
        %2603 = vmatpush.bf16.msra.mxu0 0
        %2604 = vmatpush.bf16.msra.mxu0 0
        %2605 = vmatpush.bf16.msra.mxu0 %v2511
        %2606 = vmatpush.bf16.msra.mxu0 %v2508
        %2607 = vmatpush.bf16.msra.mxu0 %v2476
        %2608 = vmatpush.bf16.msra.mxu0 %v2474
        %2609 = vmatpush.bf16.msra.mxu0 %v2486
        %2610 = vmatpush.bf16.msra.mxu0 %v2485
        %2611 = vmatmul.bf16.gmra.mxu0 %v2563
        %v2612 = vpop.f32.mrf.mxu0
        %v2613 = vadd.f32 %v2527, %v2612
        %v2614 = vpop.f32.mrf.mxu0
        %v2615 = vadd.f32 %v2529, %v2614
        %2616 = vmatmul.bf16.gmra.mxu0 %v2566
        %v2617 = vpop.f32.mrf.mxu0
        %v2618 = vadd.f32 %v2531, %v2617
        %v2619 = vpop.f32.mrf.mxu0
        %v2620 = vadd.f32 %v2533, %v2619
        %2621 = vmatmul.bf16.gmra.mxu0 %v2569
        %v2622 = vpop.f32.mrf.mxu0
        %v2623 = vadd.f32 %v2535, %v2622
        %v2624 = vpop.f32.mrf.mxu0
        %v2625 = vadd.f32 %v2537, %v2624
        %2626 = vmatmul.bf16.gmra.mxu0 %v2572
        %v2627 = vpop.f32.mrf.mxu0
        %v2628 = vadd.f32 %v2539, %v2627
        %v2629 = vpop.f32.mrf.mxu0
        %v2630 = vadd.f32 %v2541, %v2629
        %2631 = vdwg.mxu0
        %v2632 = vxor.u32 %v2584, 2147483648
        %v2633 = vxor.u32 %v2613, 2147483648
        %v2634 = vxor.u32 %v2586, 2147483648
        %v2635 = vxor.u32 %v2615, 2147483648
        %v2636 = vxor.u32 %v2589, 2147483648
        %v2637 = vxor.u32 %v2618, 2147483648
        %v2638 = vxor.u32 %v2591, 2147483648
        %v2639 = vxor.u32 %v2620, 2147483648
        %v2640 = vmul.f32 %v2632, 1.442695
        %v2641 = vpow.pop %v2640
        %v2642 = vmul.f32 %v2633, 1.442695
        %v2643 = vpow.pop %v2642
        %v2644 = vmul.f32 %v2634, 1.442695
        %v2645 = vpow.pop %v2644
        %v2646 = vmul.f32 %v2635, 1.442695
        %v2647 = vpow.pop %v2646
        %v2648 = vmul.f32 %v2636, 1.442695
        %v2649 = vpow.pop %v2648
        %v2650 = vmul.f32 %v2637, 1.442695
        %v2651 = vpow.pop %v2650
        %v2652 = vmul.f32 %v2638, 1.442695
        %v2653 = vpow.pop %v2652
        %v2654 = vmul.f32 %v2639, 1.442695
        %v2655 = vpow.pop %v2654
        %v2656 = vadd.f32 %v2641, 1.0
        %v2657 = vadd.f32 %v2643, 1.0
        %v2658 = vadd.f32 %v2645, 1.0
        %v2659 = vadd.f32 %v2647, 1.0
        %v2660 = vadd.f32 %v2649, 1.0
        %v2661 = vadd.f32 %v2651, 1.0
        %v2662 = vadd.f32 %v2653, 1.0
        %v2663 = vadd.f32 %v2655, 1.0
        %v2664 = vrcp.pop %v2656
        %v2665 = vmul.f32 %v2656, %v2664
        %v2666 = vsub.f32 1.0, %v2665
        %v2667 = vmul.f32 %v2664, %v2666
        %v2668 = vadd.f32 %v2664, %v2667
        %vm2669 = vweird.f32 %v2656
        %vm2670 = vweird.f32 %v2664
        %vm2671 = vmor %vm2669, %vm2670
        %v2672 = vsel %vm2671, %v2664, %v2668
        %v2673 = vand.u32 2147483647, %v2656
        %vm2674 = vcmp.eq.f32.partialorder %v2673, 8.507059e+37
        %v2675 = vand.u32 %v2656, 2147483648
        %v2676 = vor.u32 1.1754944e-38, %v2675
        %v2677 = vsel %vm2674, %v2676, %v2672
        %v2678 = vmul.f32 1.0, %v2677
        %v2679 = vrcp.pop %v2657
        %v2680 = vmul.f32 %v2657, %v2679
        %v2681 = vsub.f32 1.0, %v2680
        %v2682 = vmul.f32 %v2679, %v2681
        %v2683 = vadd.f32 %v2679, %v2682
        %vm2684 = vweird.f32 %v2657
        %vm2685 = vweird.f32 %v2679
        %vm2686 = vmor %vm2684, %vm2685
        %v2687 = vsel %vm2686, %v2679, %v2683
        %v2688 = vand.u32 2147483647, %v2657
        %vm2689 = vcmp.eq.f32.partialorder %v2688, 8.507059e+37
        %v2690 = vand.u32 %v2657, 2147483648
        %v2691 = vor.u32 1.1754944e-38, %v2690
        %v2692 = vsel %vm2689, %v2691, %v2687
        %v2693 = vmul.f32 1.0, %v2692
        %v2694 = vrcp.pop %v2658
        %v2695 = vmul.f32 %v2658, %v2694
        %v2696 = vsub.f32 1.0, %v2695
        %v2697 = vmul.f32 %v2694, %v2696
        %v2698 = vadd.f32 %v2694, %v2697
        %vm2699 = vweird.f32 %v2658
        %vm2700 = vweird.f32 %v2694
        %vm2701 = vmor %vm2699, %vm2700
        %v2702 = vsel %vm2701, %v2694, %v2698
        %v2703 = vand.u32 2147483647, %v2658
        %vm2704 = vcmp.eq.f32.partialorder %v2703, 8.507059e+37
        %v2705 = vand.u32 %v2658, 2147483648
        %v2706 = vor.u32 1.1754944e-38, %v2705
        %v2707 = vsel %vm2704, %v2706, %v2702
        %v2708 = vmul.f32 1.0, %v2707
        %v2709 = vrcp.pop %v2659
        %v2710 = vmul.f32 %v2659, %v2709
        %v2711 = vsub.f32 1.0, %v2710
        %v2712 = vmul.f32 %v2709, %v2711
        %v2713 = vadd.f32 %v2709, %v2712
        %vm2714 = vweird.f32 %v2659
        %vm2715 = vweird.f32 %v2709
        %vm2716 = vmor %vm2714, %vm2715
        %v2717 = vsel %vm2716, %v2709, %v2713
        %v2718 = vand.u32 2147483647, %v2659
        %vm2719 = vcmp.eq.f32.partialorder %v2718, 8.507059e+37
        %v2720 = vand.u32 %v2659, 2147483648
        %v2721 = vor.u32 1.1754944e-38, %v2720
        %v2722 = vsel %vm2719, %v2721, %v2717
        %v2723 = vmul.f32 1.0, %v2722
        %v2724 = vrcp.pop %v2660
        %v2725 = vmul.f32 %v2660, %v2724
        %v2726 = vsub.f32 1.0, %v2725
        %v2727 = vmul.f32 %v2724, %v2726
        %v2728 = vadd.f32 %v2724, %v2727
        %vm2729 = vweird.f32 %v2660
        %vm2730 = vweird.f32 %v2724
        %vm2731 = vmor %vm2729, %vm2730
        %v2732 = vsel %vm2731, %v2724, %v2728
        %v2733 = vand.u32 2147483647, %v2660
        %vm2734 = vcmp.eq.f32.partialorder %v2733, 8.507059e+37
        %v2735 = vand.u32 %v2660, 2147483648
        %v2736 = vor.u32 1.1754944e-38, %v2735
        %v2737 = vsel %vm2734, %v2736, %v2732
        %v2738 = vmul.f32 1.0, %v2737
        %v2739 = vrcp.pop %v2661
        %v2740 = vmul.f32 %v2661, %v2739
        %v2741 = vsub.f32 1.0, %v2740
        %v2742 = vmul.f32 %v2739, %v2741
        %v2743 = vadd.f32 %v2739, %v2742
        %vm2744 = vweird.f32 %v2661
        %vm2745 = vweird.f32 %v2739
        %vm2746 = vmor %vm2744, %vm2745
        %v2747 = vsel %vm2746, %v2739, %v2743
        %v2748 = vand.u32 2147483647, %v2661
        %vm2749 = vcmp.eq.f32.partialorder %v2748, 8.507059e+37
        %v2750 = vand.u32 %v2661, 2147483648
        %v2751 = vor.u32 1.1754944e-38, %v2750
        %v2752 = vsel %vm2749, %v2751, %v2747
        %v2753 = vmul.f32 1.0, %v2752
        %v2754 = vrcp.pop %v2662
        %v2755 = vmul.f32 %v2662, %v2754
        %v2756 = vsub.f32 1.0, %v2755
        %v2757 = vmul.f32 %v2754, %v2756
        %v2758 = vadd.f32 %v2754, %v2757
        %vm2759 = vweird.f32 %v2662
        %vm2760 = vweird.f32 %v2754
        %vm2761 = vmor %vm2759, %vm2760
        %v2762 = vsel %vm2761, %v2754, %v2758
        %v2763 = vand.u32 2147483647, %v2662
        %vm2764 = vcmp.eq.f32.partialorder %v2763, 8.507059e+37
        %v2765 = vand.u32 %v2662, 2147483648
        %v2766 = vor.u32 1.1754944e-38, %v2765
        %v2767 = vsel %vm2764, %v2766, %v2762
        %v2768 = vmul.f32 1.0, %v2767
        %v2769 = vrcp.pop %v2663
        %v2770 = vmul.f32 %v2663, %v2769
        %v2771 = vsub.f32 1.0, %v2770
        %v2772 = vmul.f32 %v2769, %v2771
        %v2773 = vadd.f32 %v2769, %v2772
        %vm2774 = vweird.f32 %v2663
        %vm2775 = vweird.f32 %v2769
        %vm2776 = vmor %vm2774, %vm2775
        %v2777 = vsel %vm2776, %v2769, %v2773
        %v2778 = vand.u32 2147483647, %v2663
        %vm2779 = vcmp.eq.f32.partialorder %v2778, 8.507059e+37
        %v2780 = vand.u32 %v2663, 2147483648
        %v2781 = vor.u32 1.1754944e-38, %v2780
        %v2782 = vsel %vm2779, %v2781, %v2777
        %v2783 = vmul.f32 1.0, %v2782
        %v2784 = vtanh.pop %v2594
        %v2785 = vtanh.pop %v2623
        %v2786 = vtanh.pop %v2596
        %v2787 = vtanh.pop %v2625
        %v2788 = vtanh.pop %v2599
        %v2789 = vtanh.pop %v2628
        %v2790 = vtanh.pop %v2601
        %v2791 = vtanh.pop %v2630
        %v2792 = vmul.f32 %v2678, %v2784
        %v2793 = vmul.f32 %v2693, %v2785
        %v2794 = vmul.f32 %v2708, %v2786
        %v2795 = vmul.f32 %v2723, %v2787
        %v2796 = vmul.f32 %v2738, %v2788
        %v2797 = vmul.f32 %v2753, %v2789
        %v2798 = vmul.f32 %v2768, %v2790
        %v2799 = vmul.f32 %v2783, %v2791
        %s2800 = scalar_lea.vmem %s8, 64
        %v2801 = vld [vmem:[%s2800] sm:$0xf]
        %v2802 = vld [vmem:[%s2800 + $0x4] sm:$0xf]
        %v2803 = vld [vmem:[%s2800 + $0x8] sm:$0xf]
        %v2804 = vld [vmem:[%s2800 + $0xc] sm:$0xf]
        %v2805 = vld [vmem:[%s2800 + $0x10] sm:$0xf]
        %v2806 = vld [vmem:[%s2800 + $0x14] sm:$0xf]
        %v2807 = vld [vmem:[%s2800 + $0x18] sm:$0xf]
        %v2808 = vld [vmem:[%s2800 + $0x1c] sm:$0xf]
        %v2809 = vpack.c.bf16 %v2794, %v2792
        %v2810 = vpack.c.bf16 %v2795, %v2793
        %v2811 = vpack.c.bf16 %v2798, %v2796
        %v2812 = vpack.c.bf16 %v2799, %v2797
        %s2813 = scalar_lea.vmem %s9, 128
        %v2814 = vld [vmem:[%s2813] sm:$0xff]
        %v2815 = vld [vmem:[%s2813 + $0x8] sm:$0xff]
        %v2816 = vld [vmem:[%s2813 + $0x10] sm:$0xff]
        %v2817 = vld [vmem:[%s2813 + $0x18] sm:$0xff]
        %v2818 = vld [vmem:[%s2813 + $0x20] sm:$0xff]
        %v2819 = vld [vmem:[%s2813 + $0x28] sm:$0xff]
        %v2820 = vld [vmem:[%s2813 + $0x30] sm:$0xff]
        %v2821 = vld [vmem:[%s2813 + $0x38] sm:$0xff]
        %2823 = vset.pattern.permute.xlu0 0
        %2824 = vperm.xlu0 %2823, %v2814
        %v2825 = vpop.permute.xlu0 %2824
        %2828 = vset.pattern.permute.xlu0 0
        %2829 = vperm.xlu0 %2828, %v2815
        %v2830 = vpop.permute.xlu0 %2829
        %2833 = vset.pattern.permute.xlu0 0
        %2834 = vperm.xlu0 %2833, %v2816
        %v2835 = vpop.permute.xlu0 %2834
        %2838 = vset.pattern.permute.xlu0 0
        %2839 = vperm.xlu0 %2838, %v2817
        %v2840 = vpop.permute.xlu0 %2839
        %2843 = vset.pattern.permute.xlu0 0
        %2844 = vperm.xlu0 %2843, %v2818
        %v2845 = vpop.permute.xlu0 %2844
        %2848 = vset.pattern.permute.xlu0 0
        %2849 = vperm.xlu0 %2848, %v2819
        %v2850 = vpop.permute.xlu0 %2849
        %2853 = vset.pattern.permute.xlu0 0
        %2854 = vperm.xlu0 %2853, %v2820
        %v2855 = vpop.permute.xlu0 %2854
        %2858 = vset.pattern.permute.xlu0 0
        %2859 = vperm.xlu0 %2858, %v2821
        %v2860 = vpop.permute.xlu0 %2859
        %v2870 = vunpack.c.l.b16 %v2801
        %v2871 = vunpack.c.l.b16 %v2802
        %v2872 = vunpack.c.l.b16 %v2803
        %v2873 = vunpack.c.l.b16 %v2804
        %v2874 = vunpack.c.l.b16 %v2805
        %v2875 = vunpack.c.l.b16 %v2806
        %v2876 = vunpack.c.l.b16 %v2807
        %v2877 = vunpack.c.l.b16 %v2808
        %v2878 = vpack.c.b16 %v2871, %v2870
        %v2879 = vpack.c.b16 %v2873, %v2872
        %v2880 = vpack.c.b16 %v2875, %v2874
        %v2881 = vpack.c.b16 %v2877, %v2876
        %v2883 = vsel %vm998, %v2878, 0
        %v2886 = vsel %vm998, %v2879, 0
        %v2889 = vsel %vm998, %v2880, 0
        %v2892 = vsel %vm998, %v2881, 0
        %2894 = vmatpush.bf16.msra.mxu0 0
        %2895 = vmatpush.bf16.msra.mxu0 0
        %2896 = vmatpush.bf16.msra.mxu0 0
        %2897 = vmatpush.bf16.msra.mxu0 0
        %2898 = vmatpush.bf16.msra.mxu0 0
        %2899 = vmatpush.bf16.msra.mxu0 0
        %2900 = vmatpush.bf16.msra.mxu0 %v2811
        %2901 = vmatpush.bf16.msra.mxu0 %v2809
        %2902 = vmatmul.bf16.gmra.mxu0 %v2883
        %v2903 = vpop.f32.mrf.mxu0
        %v2904 = vadd.f32 %v2825, %v2903
        %v2905 = vpop.f32.mrf.mxu0
        %v2906 = vadd.f32 %v2830, %v2905
        %2907 = vmatmul.bf16.gmra.mxu0 %v2886
        %v2908 = vpop.f32.mrf.mxu0
        %v2909 = vadd.f32 %v2835, %v2908
        %v2910 = vpop.f32.mrf.mxu0
        %v2911 = vadd.f32 %v2840, %v2910
        %2912 = vmatmul.bf16.gmra.mxu0 %v2889
        %v2913 = vpop.f32.mrf.mxu0
        %v2914 = vadd.f32 %v2845, %v2913
        %v2915 = vpop.f32.mrf.mxu0
        %v2916 = vadd.f32 %v2850, %v2915
        %2917 = vmatmul.bf16.gmra.mxu0 %v2892
        %v2918 = vpop.f32.mrf.mxu0
        %v2919 = vadd.f32 %v2855, %v2918
        %v2920 = vpop.f32.mrf.mxu0
        %v2921 = vadd.f32 %v2860, %v2920
        %2922 = vdwg.mxu0
        %2923 = vmatpush.bf16.msra.mxu0 0
        %2924 = vmatpush.bf16.msra.mxu0 0
        %2925 = vmatpush.bf16.msra.mxu0 0
        %2926 = vmatpush.bf16.msra.mxu0 0
        %2927 = vmatpush.bf16.msra.mxu0 0
        %2928 = vmatpush.bf16.msra.mxu0 0
        %2929 = vmatpush.bf16.msra.mxu0 %v2812
        %2930 = vmatpush.bf16.msra.mxu0 %v2810
        %2931 = vmatmul.bf16.gmra.mxu0 %v2883
        %v2932 = vpop.f32.mrf.mxu0
        %v2933 = vadd.f32 %v2825, %v2932
        %v2934 = vpop.f32.mrf.mxu0
        %v2935 = vadd.f32 %v2830, %v2934
        %2936 = vmatmul.bf16.gmra.mxu0 %v2886
        %v2937 = vpop.f32.mrf.mxu0
        %v2938 = vadd.f32 %v2835, %v2937
        %v2939 = vpop.f32.mrf.mxu0
        %v2940 = vadd.f32 %v2840, %v2939
        %2941 = vmatmul.bf16.gmra.mxu0 %v2889
        %v2942 = vpop.f32.mrf.mxu0
        %v2943 = vadd.f32 %v2845, %v2942
        %v2944 = vpop.f32.mrf.mxu0
        %v2945 = vadd.f32 %v2850, %v2944
        %2946 = vmatmul.bf16.gmra.mxu0 %v2892
        %v2947 = vpop.f32.mrf.mxu0
        %v2948 = vadd.f32 %v2855, %v2947
        %v2949 = vpop.f32.mrf.mxu0
        %v2950 = vadd.f32 %v2860, %v2949
        %2951 = vdwg.mxu0
        %v2952 = vadd.f32 %v2400, %v2904
        %v2953 = vadd.f32 %v2401, %v2933
        %v2954 = vadd.f32 %v2402, %v2906
        %v2955 = vadd.f32 %v2403, %v2935
        %v2956 = vadd.f32 %v2404, %v2909
        %v2957 = vadd.f32 %v2405, %v2938
        %v2958 = vadd.f32 %v2406, %v2911
        %v2959 = vadd.f32 %v2407, %v2940
        %v2960 = vmul.f32 %v2952, 0.70710677
        %v2961 = vmul.f32 %v2953, 0.70710677
        %v2962 = vmul.f32 %v2954, 0.70710677
        %v2963 = vmul.f32 %v2955, 0.70710677
        %v2964 = vmul.f32 %v2956, 0.70710677
        %v2965 = vmul.f32 %v2957, 0.70710677
        %v2966 = vmul.f32 %v2958, 0.70710677
        %v2967 = vmul.f32 %v2959, 0.70710677
        %v2968 = vadd.f32 %v2408, %v2914
        %v2969 = vadd.f32 %v2409, %v2943
        %v2970 = vadd.f32 %v2410, %v2916
        %v2971 = vadd.f32 %v2411, %v2945
        %v2972 = vadd.f32 %v2412, %v2919
        %v2973 = vadd.f32 %v2413, %v2948
        %v2974 = vadd.f32 %v2414, %v2921
        %v2975 = vadd.f32 %v2415, %v2950
        %s2976 = scalar_lea.vmem %s547, 96
        %v2977 = vld [vmem:[%s2976] sm:$0xff]
        %v2978 = vld [vmem:[%s2976 + $0x8] sm:$0xff]
        %v2979 = vld [vmem:[%s2976 + $0x10] sm:$0xff]
        %v2980 = vld [vmem:[%s2976 + $0x18] sm:$0xff]
        %2982 = vset.pattern.permute.xlu0 0
        %2983 = vperm.xlu0 %2982, %v2977
        %v2984 = vpop.permute.xlu0 %2983
        %2987 = vset.pattern.permute.xlu0 0
        %2988 = vperm.xlu0 %2987, %v2978
        %v2989 = vpop.permute.xlu0 %2988
        %2992 = vset.pattern.permute.xlu0 0
        %2993 = vperm.xlu0 %2992, %v2979
        %v2994 = vpop.permute.xlu0 %2993
        %2997 = vset.pattern.permute.xlu0 0
        %2998 = vperm.xlu0 %2997, %v2980
        %v2999 = vpop.permute.xlu0 %2998
        %v3001 = vadd.f32 %v2960, %v2984
        %v3002 = vadd.f32 %v2961, %v2984
        %v3003 = vadd.f32 %v2962, %v2989
        %v3004 = vadd.f32 %v2963, %v2989
        %v3005 = vadd.f32 %v2964, %v2994
        %v3006 = vadd.f32 %v2965, %v2994
        %v3007 = vadd.f32 %v2966, %v2999
        %v3008 = vadd.f32 %v2967, %v2999
        %v3009 = vmul.f32 %v3001, %v571
        %v3010 = vmul.f32 %v3002, %v572
        %v3011 = vmul.f32 %v3003, %v571
        %v3012 = vmul.f32 %v3004, %v572
        %v3013 = vmul.f32 %v3005, %v571
        %v3014 = vmul.f32 %v3006, %v572
        %v3015 = vmul.f32 %v3007, %v571
        %v3016 = vmul.f32 %v3008, %v572
        %v3017 = vpack.c.bf16 %v3010, %v3009
        %v3018 = vpack.c.bf16 %v3012, %v3011
        %v3019 = vpack.c.bf16 %v3014, %v3013
        %v3020 = vpack.c.bf16 %v3016, %v3015
        %v3025 = vunpack.c.l.b16 %v3017
        %v3026 = vunpack.c.h.b16 %v3017
        %v3027 = vunpack.c.l.b16 %v3018
        %v3028 = vunpack.c.h.b16 %v3018
        %v3029 = vunpack.c.l.b16 %v3019
        %v3030 = vunpack.c.h.b16 %v3019
        %v3031 = vunpack.c.l.b16 %v3020
        %v3032 = vunpack.c.h.b16 %v3020
        %v3033 = vpack.c.b16 %v3027, %v3025
        %v3034 = vpack.c.b16 %v3028, %v3026
        %v3035 = vpack.c.b16 %v3031, %v3029
        %v3036 = vpack.c.b16 %v3032, %v3030
        %3037 = vrot.lane.b32.xlu0 %v3033, 2
        %v3038 = vpop.permute.xlu0 %3037
        %3039 = vrot.lane.b32.xlu0 %v3034, 2
        %v3040 = vpop.permute.xlu0 %3039
        %3041 = vrot.lane.b32.xlu0 %v3035, 2
        %v3042 = vpop.permute.xlu0 %3041
        %3043 = vrot.lane.b32.xlu0 %v3036, 2
        %v3044 = vpop.permute.xlu0 %3043
        %v3045 = vsel %vm1921, %v3038, %v3040
        %v3046 = vsel %vm1921, %v3042, %v3044
        %v3050 = vsel %vm1926, 0, %v3038
        %v3053 = vsel %vm1926, 0, %v3042
        %3055 = vrot.lane.b32.xlu0 %v3033, 126
        %v3056 = vpop.permute.xlu0 %3055
        %3057 = vrot.lane.b32.xlu0 %v3034, 126
        %v3058 = vpop.permute.xlu0 %3057
        %3059 = vrot.lane.b32.xlu0 %v3035, 126
        %v3060 = vpop.permute.xlu0 %3059
        %3061 = vrot.lane.b32.xlu0 %v3036, 126
        %v3062 = vpop.permute.xlu0 %3061
        %v3063 = vsel %vm1941, %v3056, %v3058
        %v3064 = vsel %vm1941, %v3060, %v3062
        %v3068 = vsel %vm1946, %v3058, 0
        %v3071 = vsel %vm1946, %v3062, 0
        %s3077 = scalar_lea.vmem %s7, 96
        %v3078 = vld [vmem:[%s3077] sm:$0xf]
        %v3079 = vld [vmem:[%s3077 + $0x4] sm:$0xf]
        %v3080 = vld [vmem:[%s3077 + $0x8] sm:$0xf]
        %v3081 = vld [vmem:[%s3077 + $0xc] sm:$0xf]
        %v3082 = vld [vmem:[%s3077 + $0x10] sm:$0xf]
        %v3083 = vld [vmem:[%s3077 + $0x14] sm:$0xf]
        %v3084 = vld [vmem:[%s3077 + $0x18] sm:$0xf]
        %v3085 = vld [vmem:[%s3077 + $0x1c] sm:$0xf]
        %v3086 = vld [vmem:[#allocation2 + $0x180] sm:$0xff]
        %v3087 = vld [vmem:[#allocation2 + $0x188] sm:$0xff]
        %v3088 = vld [vmem:[#allocation2 + $0x190] sm:$0xff]
        %v3089 = vld [vmem:[#allocation2 + $0x198] sm:$0xff]
        %v3090 = vld [vmem:[#allocation2 + $0x1a0] sm:$0xff]
        %v3091 = vld [vmem:[#allocation2 + $0x1a8] sm:$0xff]
        %v3092 = vld [vmem:[#allocation2 + $0x1b0] sm:$0xff]
        %v3093 = vld [vmem:[#allocation2 + $0x1b8] sm:$0xff]
        %v3094 = vld [vmem:[#allocation2 + $0x1c0] sm:$0xff]
        %v3095 = vld [vmem:[#allocation2 + $0x1c8] sm:$0xff]
        %v3096 = vld [vmem:[#allocation2 + $0x1d0] sm:$0xff]
        %v3097 = vld [vmem:[#allocation2 + $0x1d8] sm:$0xff]
        %v3098 = vld [vmem:[#allocation2 + $0x1e0] sm:$0xff]
        %v3099 = vld [vmem:[#allocation2 + $0x1e8] sm:$0xff]
        %v3100 = vld [vmem:[#allocation2 + $0x1f0] sm:$0xff]
        %v3101 = vld [vmem:[#allocation2 + $0x1f8] sm:$0xff]
        %v3110 = vunpack.c.l.b16 %v3078
        %v3111 = vunpack.c.l.b16 %v3079
        %v3112 = vunpack.c.l.b16 %v3080
        %v3113 = vunpack.c.l.b16 %v3081
        %v3114 = vunpack.c.l.b16 %v3082
        %v3115 = vunpack.c.l.b16 %v3083
        %v3116 = vunpack.c.l.b16 %v3084
        %v3117 = vunpack.c.l.b16 %v3085
        %v3118 = vpack.c.b16 %v3111, %v3110
        %v3119 = vpack.c.b16 %v3113, %v3112
        %v3120 = vpack.c.b16 %v3115, %v3114
        %v3121 = vpack.c.b16 %v3117, %v3116
        %v3123 = vsel %vm1439, %v3118, 0
        %v3126 = vsel %vm1439, %v3119, 0
        %v3129 = vsel %vm1439, %v3120, 0
        %v3132 = vsel %vm1439, %v3121, 0
        %3134 = vmatpush.bf16.msra.mxu0 0
        %3135 = vmatpush.bf16.msra.mxu0 0
        %3136 = vmatpush.bf16.msra.mxu0 %v3064
        %3137 = vmatpush.bf16.msra.mxu0 %v3063
        %3138 = vmatpush.bf16.msra.mxu0 %v3035
        %3139 = vmatpush.bf16.msra.mxu0 %v3033
        %3140 = vmatpush.bf16.msra.mxu0 %v3053
        %3141 = vmatpush.bf16.msra.mxu0 %v3050
        %3142 = vmatmul.bf16.gmra.mxu0 %v3123
        %v3143 = vpop.f32.mrf.mxu0
        %v3144 = vadd.f32 %v3086, %v3143
        %v3145 = vpop.f32.mrf.mxu0
        %v3146 = vadd.f32 %v3088, %v3145
        %3147 = vmatmul.bf16.gmra.mxu0 %v3126
        %v3148 = vpop.f32.mrf.mxu0
        %v3149 = vadd.f32 %v3090, %v3148
        %v3150 = vpop.f32.mrf.mxu0
        %v3151 = vadd.f32 %v3092, %v3150
        %3152 = vmatmul.bf16.gmra.mxu0 %v3129
        %v3153 = vpop.f32.mrf.mxu0
        %v3154 = vadd.f32 %v3094, %v3153
        %v3155 = vpop.f32.mrf.mxu0
        %v3156 = vadd.f32 %v3096, %v3155
        %3157 = vmatmul.bf16.gmra.mxu0 %v3132
        %v3158 = vpop.f32.mrf.mxu0
        %v3159 = vadd.f32 %v3098, %v3158
        %v3160 = vpop.f32.mrf.mxu0
        %v3161 = vadd.f32 %v3100, %v3160
        %3162 = vdwg.mxu0
        %3163 = vmatpush.bf16.msra.mxu0 0
        %3164 = vmatpush.bf16.msra.mxu0 0
        %3165 = vmatpush.bf16.msra.mxu0 %v3071
        %3166 = vmatpush.bf16.msra.mxu0 %v3068
        %3167 = vmatpush.bf16.msra.mxu0 %v3036
        %3168 = vmatpush.bf16.msra.mxu0 %v3034
        %3169 = vmatpush.bf16.msra.mxu0 %v3046
        %3170 = vmatpush.bf16.msra.mxu0 %v3045
        %3171 = vmatmul.bf16.gmra.mxu0 %v3123
        %v3172 = vpop.f32.mrf.mxu0
        %v3173 = vadd.f32 %v3087, %v3172
        %v3174 = vpop.f32.mrf.mxu0
        %v3175 = vadd.f32 %v3089, %v3174
        %3176 = vmatmul.bf16.gmra.mxu0 %v3126
        %v3177 = vpop.f32.mrf.mxu0
        %v3178 = vadd.f32 %v3091, %v3177
        %v3179 = vpop.f32.mrf.mxu0
        %v3180 = vadd.f32 %v3093, %v3179
        %3181 = vmatmul.bf16.gmra.mxu0 %v3129
        %v3182 = vpop.f32.mrf.mxu0
        %v3183 = vadd.f32 %v3095, %v3182
        %v3184 = vpop.f32.mrf.mxu0
        %v3185 = vadd.f32 %v3097, %v3184
        %3186 = vmatmul.bf16.gmra.mxu0 %v3132
        %v3187 = vpop.f32.mrf.mxu0
        %v3188 = vadd.f32 %v3099, %v3187
        %v3189 = vpop.f32.mrf.mxu0
        %v3190 = vadd.f32 %v3101, %v3189
        %3191 = vdwg.mxu0
        %v3192 = vxor.u32 %v3144, 2147483648
        %v3193 = vxor.u32 %v3173, 2147483648
        %v3194 = vxor.u32 %v3146, 2147483648
        %v3195 = vxor.u32 %v3175, 2147483648
        %v3196 = vxor.u32 %v3149, 2147483648
        %v3197 = vxor.u32 %v3178, 2147483648
        %v3198 = vxor.u32 %v3151, 2147483648
        %v3199 = vxor.u32 %v3180, 2147483648
        %v3200 = vmul.f32 %v3192, 1.442695
        %v3201 = vpow.pop %v3200
        %v3202 = vmul.f32 %v3193, 1.442695
        %v3203 = vpow.pop %v3202
        %v3204 = vmul.f32 %v3194, 1.442695
        %v3205 = vpow.pop %v3204
        %v3206 = vmul.f32 %v3195, 1.442695
        %v3207 = vpow.pop %v3206
        %v3208 = vmul.f32 %v3196, 1.442695
        %v3209 = vpow.pop %v3208
        %v3210 = vmul.f32 %v3197, 1.442695
        %v3211 = vpow.pop %v3210
        %v3212 = vmul.f32 %v3198, 1.442695
        %v3213 = vpow.pop %v3212
        %v3214 = vmul.f32 %v3199, 1.442695
        %v3215 = vpow.pop %v3214
        %v3216 = vadd.f32 %v3201, 1.0
        %v3217 = vadd.f32 %v3203, 1.0
        %v3218 = vadd.f32 %v3205, 1.0
        %v3219 = vadd.f32 %v3207, 1.0
        %v3220 = vadd.f32 %v3209, 1.0
        %v3221 = vadd.f32 %v3211, 1.0
        %v3222 = vadd.f32 %v3213, 1.0
        %v3223 = vadd.f32 %v3215, 1.0
        %v3224 = vrcp.pop %v3216
        %v3225 = vmul.f32 %v3216, %v3224
        %v3226 = vsub.f32 1.0, %v3225
        %v3227 = vmul.f32 %v3224, %v3226
        %v3228 = vadd.f32 %v3224, %v3227
        %vm3229 = vweird.f32 %v3216
        %vm3230 = vweird.f32 %v3224
        %vm3231 = vmor %vm3229, %vm3230
        %v3232 = vsel %vm3231, %v3224, %v3228
        %v3233 = vand.u32 2147483647, %v3216
        %vm3234 = vcmp.eq.f32.partialorder %v3233, 8.507059e+37
        %v3235 = vand.u32 %v3216, 2147483648
        %v3236 = vor.u32 1.1754944e-38, %v3235
        %v3237 = vsel %vm3234, %v3236, %v3232
        %v3238 = vmul.f32 1.0, %v3237
        %v3239 = vrcp.pop %v3217
        %v3240 = vmul.f32 %v3217, %v3239
        %v3241 = vsub.f32 1.0, %v3240
        %v3242 = vmul.f32 %v3239, %v3241
        %v3243 = vadd.f32 %v3239, %v3242
        %vm3244 = vweird.f32 %v3217
        %vm3245 = vweird.f32 %v3239
        %vm3246 = vmor %vm3244, %vm3245
        %v3247 = vsel %vm3246, %v3239, %v3243
        %v3248 = vand.u32 2147483647, %v3217
        %vm3249 = vcmp.eq.f32.partialorder %v3248, 8.507059e+37
        %v3250 = vand.u32 %v3217, 2147483648
        %v3251 = vor.u32 1.1754944e-38, %v3250
        %v3252 = vsel %vm3249, %v3251, %v3247
        %v3253 = vmul.f32 1.0, %v3252
        %v3254 = vrcp.pop %v3218
        %v3255 = vmul.f32 %v3218, %v3254
        %v3256 = vsub.f32 1.0, %v3255
        %v3257 = vmul.f32 %v3254, %v3256
        %v3258 = vadd.f32 %v3254, %v3257
        %vm3259 = vweird.f32 %v3218
        %vm3260 = vweird.f32 %v3254
        %vm3261 = vmor %vm3259, %vm3260
        %v3262 = vsel %vm3261, %v3254, %v3258
        %v3263 = vand.u32 2147483647, %v3218
        %vm3264 = vcmp.eq.f32.partialorder %v3263, 8.507059e+37
        %v3265 = vand.u32 %v3218, 2147483648
        %v3266 = vor.u32 1.1754944e-38, %v3265
        %v3267 = vsel %vm3264, %v3266, %v3262
        %v3268 = vmul.f32 1.0, %v3267
        %v3269 = vrcp.pop %v3219
        %v3270 = vmul.f32 %v3219, %v3269
        %v3271 = vsub.f32 1.0, %v3270
        %v3272 = vmul.f32 %v3269, %v3271
        %v3273 = vadd.f32 %v3269, %v3272
        %vm3274 = vweird.f32 %v3219
        %vm3275 = vweird.f32 %v3269
        %vm3276 = vmor %vm3274, %vm3275
        %v3277 = vsel %vm3276, %v3269, %v3273
        %v3278 = vand.u32 2147483647, %v3219
        %vm3279 = vcmp.eq.f32.partialorder %v3278, 8.507059e+37
        %v3280 = vand.u32 %v3219, 2147483648
        %v3281 = vor.u32 1.1754944e-38, %v3280
        %v3282 = vsel %vm3279, %v3281, %v3277
        %v3283 = vmul.f32 1.0, %v3282
        %v3284 = vrcp.pop %v3220
        %v3285 = vmul.f32 %v3220, %v3284
        %v3286 = vsub.f32 1.0, %v3285
        %v3287 = vmul.f32 %v3284, %v3286
        %v3288 = vadd.f32 %v3284, %v3287
        %vm3289 = vweird.f32 %v3220
        %vm3290 = vweird.f32 %v3284
        %vm3291 = vmor %vm3289, %vm3290
        %v3292 = vsel %vm3291, %v3284, %v3288
        %v3293 = vand.u32 2147483647, %v3220
        %vm3294 = vcmp.eq.f32.partialorder %v3293, 8.507059e+37
        %v3295 = vand.u32 %v3220, 2147483648
        %v3296 = vor.u32 1.1754944e-38, %v3295
        %v3297 = vsel %vm3294, %v3296, %v3292
        %v3298 = vmul.f32 1.0, %v3297
        %v3299 = vrcp.pop %v3221
        %v3300 = vmul.f32 %v3221, %v3299
        %v3301 = vsub.f32 1.0, %v3300
        %v3302 = vmul.f32 %v3299, %v3301
        %v3303 = vadd.f32 %v3299, %v3302
        %vm3304 = vweird.f32 %v3221
        %vm3305 = vweird.f32 %v3299
        %vm3306 = vmor %vm3304, %vm3305
        %v3307 = vsel %vm3306, %v3299, %v3303
        %v3308 = vand.u32 2147483647, %v3221
        %vm3309 = vcmp.eq.f32.partialorder %v3308, 8.507059e+37
        %v3310 = vand.u32 %v3221, 2147483648
        %v3311 = vor.u32 1.1754944e-38, %v3310
        %v3312 = vsel %vm3309, %v3311, %v3307
        %v3313 = vmul.f32 1.0, %v3312
        %v3314 = vrcp.pop %v3222
        %v3315 = vmul.f32 %v3222, %v3314
        %v3316 = vsub.f32 1.0, %v3315
        %v3317 = vmul.f32 %v3314, %v3316
        %v3318 = vadd.f32 %v3314, %v3317
        %vm3319 = vweird.f32 %v3222
        %vm3320 = vweird.f32 %v3314
        %vm3321 = vmor %vm3319, %vm3320
        %v3322 = vsel %vm3321, %v3314, %v3318
        %v3323 = vand.u32 2147483647, %v3222
        %vm3324 = vcmp.eq.f32.partialorder %v3323, 8.507059e+37
        %v3325 = vand.u32 %v3222, 2147483648
        %v3326 = vor.u32 1.1754944e-38, %v3325
        %v3327 = vsel %vm3324, %v3326, %v3322
        %v3328 = vmul.f32 1.0, %v3327
        %v3329 = vrcp.pop %v3223
        %v3330 = vmul.f32 %v3223, %v3329
        %v3331 = vsub.f32 1.0, %v3330
        %v3332 = vmul.f32 %v3329, %v3331
        %v3333 = vadd.f32 %v3329, %v3332
        %vm3334 = vweird.f32 %v3223
        %vm3335 = vweird.f32 %v3329
        %vm3336 = vmor %vm3334, %vm3335
        %v3337 = vsel %vm3336, %v3329, %v3333
        %v3338 = vand.u32 2147483647, %v3223
        %vm3339 = vcmp.eq.f32.partialorder %v3338, 8.507059e+37
        %v3340 = vand.u32 %v3223, 2147483648
        %v3341 = vor.u32 1.1754944e-38, %v3340
        %v3342 = vsel %vm3339, %v3341, %v3337
        %v3343 = vmul.f32 1.0, %v3342
        %v3344 = vtanh.pop %v3154
        %v3345 = vtanh.pop %v3183
        %v3346 = vtanh.pop %v3156
        %v3347 = vtanh.pop %v3185
        %v3348 = vtanh.pop %v3159
        %v3349 = vtanh.pop %v3188
        %v3350 = vtanh.pop %v3161
        %v3351 = vtanh.pop %v3190
        %v3352 = vmul.f32 %v3238, %v3344
        %v3353 = vmul.f32 %v3253, %v3345
        %v3354 = vmul.f32 %v3268, %v3346
        %v3355 = vmul.f32 %v3283, %v3347
        %v3356 = vmul.f32 %v3298, %v3348
        %v3357 = vmul.f32 %v3313, %v3349
        %v3358 = vmul.f32 %v3328, %v3350
        %v3359 = vmul.f32 %v3343, %v3351
        %s3360 = scalar_lea.vmem %s8, 96
        %v3361 = vld [vmem:[%s3360] sm:$0xf]
        %v3362 = vld [vmem:[%s3360 + $0x4] sm:$0xf]
        %v3363 = vld [vmem:[%s3360 + $0x8] sm:$0xf]
        %v3364 = vld [vmem:[%s3360 + $0xc] sm:$0xf]
        %v3365 = vld [vmem:[%s3360 + $0x10] sm:$0xf]
        %v3366 = vld [vmem:[%s3360 + $0x14] sm:$0xf]
        %v3367 = vld [vmem:[%s3360 + $0x18] sm:$0xf]
        %v3368 = vld [vmem:[%s3360 + $0x1c] sm:$0xf]
        %v3369 = vpack.c.bf16 %v3354, %v3352
        %v3370 = vpack.c.bf16 %v3355, %v3353
        %v3371 = vpack.c.bf16 %v3358, %v3356
        %v3372 = vpack.c.bf16 %v3359, %v3357
        %s3373 = scalar_lea.vmem %s9, 192
        %v3374 = vld [vmem:[%s3373] sm:$0xff]
        %v3375 = vld [vmem:[%s3373 + $0x8] sm:$0xff]
        %v3376 = vld [vmem:[%s3373 + $0x10] sm:$0xff]
        %v3377 = vld [vmem:[%s3373 + $0x18] sm:$0xff]
        %v3378 = vld [vmem:[%s3373 + $0x20] sm:$0xff]
        %v3379 = vld [vmem:[%s3373 + $0x28] sm:$0xff]
        %v3380 = vld [vmem:[%s3373 + $0x30] sm:$0xff]
        %v3381 = vld [vmem:[%s3373 + $0x38] sm:$0xff]
        %3383 = vset.pattern.permute.xlu0 0
        %3384 = vperm.xlu0 %3383, %v3374
        %v3385 = vpop.permute.xlu0 %3384
        %3387 = vset.pattern.permute.xlu0 0
        %3388 = vperm.xlu0 %3387, %v3375
        %v3389 = vpop.permute.xlu0 %3388
        %3391 = vset.pattern.permute.xlu0 0
        %3392 = vperm.xlu0 %3391, %v3376
        %v3393 = vpop.permute.xlu0 %3392
        %3395 = vset.pattern.permute.xlu0 0
        %3396 = vperm.xlu0 %3395, %v3377
        %v3397 = vpop.permute.xlu0 %3396
        %3399 = vset.pattern.permute.xlu0 0
        %3400 = vperm.xlu0 %3399, %v3378
        %v3401 = vpop.permute.xlu0 %3400
        %3404 = vset.pattern.permute.xlu0 0
        %3405 = vperm.xlu0 %3404, %v3379
        %v3406 = vpop.permute.xlu0 %3405
        %3409 = vset.pattern.permute.xlu0 0
        %3410 = vperm.xlu0 %3409, %v3380
        %v3411 = vpop.permute.xlu0 %3410
        %3414 = vset.pattern.permute.xlu0 0
        %3415 = vperm.xlu0 %3414, %v3381
        %v3416 = vpop.permute.xlu0 %3415
        %v3426 = vunpack.c.l.b16 %v3361
        %v3427 = vunpack.c.l.b16 %v3362
        %v3428 = vunpack.c.l.b16 %v3363
        %v3429 = vunpack.c.l.b16 %v3364
        %v3430 = vunpack.c.l.b16 %v3365
        %v3431 = vunpack.c.l.b16 %v3366
        %v3432 = vunpack.c.l.b16 %v3367
        %v3433 = vunpack.c.l.b16 %v3368
        %v3434 = vpack.c.b16 %v3427, %v3426
        %v3435 = vpack.c.b16 %v3429, %v3428
        %v3436 = vpack.c.b16 %v3431, %v3430
        %v3437 = vpack.c.b16 %v3433, %v3432
        %v3439 = vsel %vm998, %v3434, 0
        %v3442 = vsel %vm998, %v3435, 0
        %v3445 = vsel %vm998, %v3436, 0
        %v3448 = vsel %vm998, %v3437, 0
        %3450 = vmatpush.bf16.msra.mxu0 0
        %3451 = vmatpush.bf16.msra.mxu0 0
        %3452 = vmatpush.bf16.msra.mxu0 0
        %3453 = vmatpush.bf16.msra.mxu0 0
        %3454 = vmatpush.bf16.msra.mxu0 0
        %3455 = vmatpush.bf16.msra.mxu0 0
        %3456 = vmatpush.bf16.msra.mxu0 %v3371
        %3457 = vmatpush.bf16.msra.mxu0 %v3369
        %3458 = vmatmul.bf16.gmra.mxu0 %v3439
        %v3459 = vpop.f32.mrf.mxu0
        %v3460 = vpop.f32.mrf.mxu0
        %3461 = vmatmul.bf16.gmra.mxu0 %v3442
        %v3462 = vpop.f32.mrf.mxu0
        %v3463 = vpop.f32.mrf.mxu0
        %3464 = vmatmul.bf16.gmra.mxu0 %v3445
        %v3465 = vpop.f32.mrf.mxu0
        %v3466 = vadd.f32 %v3401, %v3465
        %v3467 = vpop.f32.mrf.mxu0
        %v3468 = vadd.f32 %v3406, %v3467
        %3469 = vmatmul.bf16.gmra.mxu0 %v3448
        %v3470 = vpop.f32.mrf.mxu0
        %v3471 = vadd.f32 %v3411, %v3470
        %v3472 = vpop.f32.mrf.mxu0
        %v3473 = vadd.f32 %v3416, %v3472
        %3474 = vdwg.mxu0
        %3475 = vmatpush.bf16.msra.mxu0 0
        %3476 = vmatpush.bf16.msra.mxu0 0
        %3477 = vmatpush.bf16.msra.mxu0 0
        %3478 = vmatpush.bf16.msra.mxu0 0
        %3479 = vmatpush.bf16.msra.mxu0 0
        %3480 = vmatpush.bf16.msra.mxu0 0
        %3481 = vmatpush.bf16.msra.mxu0 %v3372
        %3482 = vmatpush.bf16.msra.mxu0 %v3370
        %3483 = vmatmul.bf16.gmra.mxu0 %v3439
        %v3484 = vpop.f32.mrf.mxu0
        %v3485 = vpop.f32.mrf.mxu0
        %3486 = vmatmul.bf16.gmra.mxu0 %v3442
        %v3487 = vpop.f32.mrf.mxu0
        %v3488 = vpop.f32.mrf.mxu0
        %3489 = vmatmul.bf16.gmra.mxu0 %v3445
        %v3490 = vpop.f32.mrf.mxu0
        %v3491 = vadd.f32 %v3401, %v3490
        %v3492 = vpop.f32.mrf.mxu0
        %v3493 = vadd.f32 %v3406, %v3492
        %3494 = vmatmul.bf16.gmra.mxu0 %v3448
        %v3495 = vpop.f32.mrf.mxu0
        %v3496 = vadd.f32 %v3411, %v3495
        %v3497 = vpop.f32.mrf.mxu0
        %v3498 = vadd.f32 %v3416, %v3497
        %3499 = vdwg.mxu0
        %v3500 = vadd.f32 %v2968, %v3466
        %v3501 = vadd.f32 %v2969, %v3491
        %v3502 = vadd.f32 %v2970, %v3468
        %v3503 = vadd.f32 %v2971, %v3493
        %v3504 = vadd.f32 %v2972, %v3471
        %v3505 = vadd.f32 %v2973, %v3496
        %v3506 = vadd.f32 %v2974, %v3473
        %v3507 = vadd.f32 %v2975, %v3498
        %v3508 = vmul.f32 %v3500, 0.5
        %v3509 = vmul.f32 %v3501, 0.5
        %v3510 = vmul.f32 %v3502, 0.5
        %v3511 = vmul.f32 %v3503, 0.5
        %v3512 = vmul.f32 %v3504, 0.5
        %v3513 = vmul.f32 %v3505, 0.5
        %v3514 = vmul.f32 %v3506, 0.5
        %v3515 = vmul.f32 %v3507, 0.5
        %v3516 = vld [vmem:[%s10] sm:$0xf]
        %v3517 = vld [vmem:[%s10 + $0x4] sm:$0xf]
        %v3518 = vld [vmem:[%s10 + $0x8] sm:$0xf]
        %v3519 = vld [vmem:[%s10 + $0xc] sm:$0xf]
        %v3520 = vpack.c.bf16 %v3510, %v3508
        %v3521 = vpack.c.bf16 %v3511, %v3509
        %v3522 = vpack.c.bf16 %v3514, %v3512
        %v3523 = vpack.c.bf16 %v3515, %v3513
        %v3524 = vld [vmem:[%s11] sm:$0xff]
        %v3525 = vld [vmem:[%s11 + $0x8] sm:$0xff]
        %v3526 = vld [vmem:[%s11 + $0x10] sm:$0xff]
        %v3527 = vld [vmem:[%s11 + $0x18] sm:$0xff]
        %3529 = vset.pattern.permute.xlu0 0
        %3530 = vperm.xlu0 %3529, %v3524
        %v3531 = vpop.permute.xlu0 %3530
        %3534 = vset.pattern.permute.xlu0 0
        %3535 = vperm.xlu0 %3534, %v3525
        %v3536 = vpop.permute.xlu0 %3535
        %3539 = vset.pattern.permute.xlu0 0
        %3540 = vperm.xlu0 %3539, %v3526
        %v3541 = vpop.permute.xlu0 %3540
        %3544 = vset.pattern.permute.xlu0 0
        %3545 = vperm.xlu0 %3544, %v3527
        %v3546 = vpop.permute.xlu0 %3545
        %v3552 = vunpack.c.l.b16 %v3516
        %v3553 = vunpack.c.l.b16 %v3517
        %v3554 = vunpack.c.l.b16 %v3518
        %v3555 = vunpack.c.l.b16 %v3519
        %v3556 = vpack.c.b16 %v3553, %v3552
        %v3557 = vpack.c.b16 %v3555, %v3554
        %v3559 = vsel %vm998, %v3556, 0
        %v3562 = vsel %vm998, %v3557, 0
        %3564 = vmatpush.bf16.msra.mxu0 0
        %3565 = vmatpush.bf16.msra.mxu0 0
        %3566 = vmatpush.bf16.msra.mxu0 0
        %3567 = vmatpush.bf16.msra.mxu0 0
        %3568 = vmatpush.bf16.msra.mxu0 0
        %3569 = vmatpush.bf16.msra.mxu0 0
        %3570 = vmatpush.bf16.msra.mxu0 %v3522
        %3571 = vmatpush.bf16.msra.mxu0 %v3520
        %3572 = vmatmul.bf16.gmra.mxu0 %v3559
        %v3573 = vpop.f32.mrf.mxu0
        %v3574 = vadd.f32 %v3531, %v3573
        %v3575 = vpop.f32.mrf.mxu0
        %v3576 = vadd.f32 %v3536, %v3575
        %3577 = vmatmul.bf16.gmra.mxu0 %v3562
        %v3578 = vpop.f32.mrf.mxu0
        %v3579 = vadd.f32 %v3541, %v3578
        %v3580 = vpop.f32.mrf.mxu0
        %v3581 = vadd.f32 %v3546, %v3580
        %3582 = vdwg.mxu0
        %3583 = vmatpush.bf16.msra.mxu0 0
        %3584 = vmatpush.bf16.msra.mxu0 0
        %3585 = vmatpush.bf16.msra.mxu0 0
        %3586 = vmatpush.bf16.msra.mxu0 0
        %3587 = vmatpush.bf16.msra.mxu0 0
        %3588 = vmatpush.bf16.msra.mxu0 0
        %3589 = vmatpush.bf16.msra.mxu0 %v3523
        %3590 = vmatpush.bf16.msra.mxu0 %v3521
        %3591 = vmatmul.bf16.gmra.mxu0 %v3559
        %v3592 = vpop.f32.mrf.mxu0
        %v3593 = vadd.f32 %v3531, %v3592
        %v3594 = vpop.f32.mrf.mxu0
        %v3595 = vadd.f32 %v3536, %v3594
        %3596 = vmatmul.bf16.gmra.mxu0 %v3562
        %v3597 = vpop.f32.mrf.mxu0
        %v3598 = vadd.f32 %v3541, %v3597
        %v3599 = vpop.f32.mrf.mxu0
        %v3600 = vadd.f32 %v3546, %v3599
        %3601 = vdwg.mxu0
        %v3602 = vmax.f32 %v3574, 0.0
        %v3603 = vmax.f32 %v3593, 0.0
        %v3604 = vmax.f32 %v3576, 0.0
        %v3605 = vmax.f32 %v3595, 0.0
        %v3606 = vmax.f32 %v3579, 0.0
        %v3607 = vmax.f32 %v3598, 0.0
        %v3608 = vmax.f32 %v3581, 0.0
        %v3609 = vmax.f32 %v3600, 0.0
        %v3610 = vld [vmem:[%s12] sm:$0xf]
        %v3611 = vld [vmem:[%s12 + $0x4] sm:$0xf]
        %v3612 = vpack.c.bf16 %v3604, %v3602
        %v3613 = vpack.c.bf16 %v3605, %v3603
        %v3614 = vpack.c.bf16 %v3608, %v3606
        %v3615 = vpack.c.bf16 %v3609, %v3607
        %v3616 = vld [vmem:[%s13] sm:$0xff]
        %v3617 = vld [vmem:[%s13 + $0x8] sm:$0xff]
        %3619 = vset.pattern.permute.xlu0 0
        %3620 = vperm.xlu0 %3619, %v3616
        %v3621 = vpop.permute.xlu0 %3620
        %3624 = vset.pattern.permute.xlu0 0
        %3625 = vperm.xlu0 %3624, %v3617
        %v3626 = vpop.permute.xlu0 %3625
        %v3630 = vunpack.c.l.b16 %v3610
        %v3631 = vunpack.c.l.b16 %v3611
        %v3632 = vpack.c.b16 %v3631, %v3630
        %v3634 = vsel %vm998, %v3632, 0
        %3636 = vmatpush.bf16.msra.mxu0 0
        %3637 = vmatpush.bf16.msra.mxu0 0
        %3638 = vmatpush.bf16.msra.mxu0 0
        %3639 = vmatpush.bf16.msra.mxu0 0
        %3640 = vmatpush.bf16.msra.mxu0 0
        %3641 = vmatpush.bf16.msra.mxu0 0
        %3642 = vmatpush.bf16.msra.mxu0 %v3614
        %3643 = vmatpush.bf16.msra.mxu0 %v3612
        %3644 = vmatmul.bf16.gmra.mxu0 %v3634
        %v3645 = vpop.f32.mrf.mxu0
        %v3646 = vadd.f32 %v3621, %v3645
        %v3647 = vpop.f32.mrf.mxu0
        %v3648 = vadd.f32 %v3626, %v3647
        %3649 = vdwg.mxu0
        %3650 = vmatpush.bf16.msra.mxu0 0
        %3651 = vmatpush.bf16.msra.mxu0 0
        %3652 = vmatpush.bf16.msra.mxu0 0
        %3653 = vmatpush.bf16.msra.mxu0 0
        %3654 = vmatpush.bf16.msra.mxu0 0
        %3655 = vmatpush.bf16.msra.mxu0 0
        %3656 = vmatpush.bf16.msra.mxu0 %v3615
        %3657 = vmatpush.bf16.msra.mxu0 %v3613
        %3658 = vmatmul.bf16.gmra.mxu0 %v3634
        %v3659 = vpop.f32.mrf.mxu0
        %v3660 = vadd.f32 %v3621, %v3659
        %v3661 = vpop.f32.mrf.mxu0
        %v3662 = vadd.f32 %v3626, %v3661
        %3663 = vdwg.mxu0
        %3668 = vrot.lane.b32.xlu0 %v3646, 122
        %v3669 = vpop.permute.xlu0 %3668
        %3670 = vrot.lane.b32.xlu0 %v3660, 122
        %v3671 = vpop.permute.xlu0 %3670
        %3672 = vrot.lane.b32.xlu0 %v3648, 122
        %v3673 = vpop.permute.xlu0 %3672
        %3674 = vrot.lane.b32.xlu0 %v3662, 122
        %v3675 = vpop.permute.xlu0 %3674
        %vm3676 = vcmask 998400
        %v3677 = vsel %vm3676, %v3669, %v3671
        %v3678 = vsel %vm3676, %v3673, %v3675
        %3681 = vst [vmem:[%s524] sm:$0xff] %v3677
        %3682 = vst [vmem:[%s524 + $0x8] sm:$0xff] %v3678
        %s3683 = sand.u32 %s363, 1
        %s3684 = scalar_lea.sflag [#allocation4], %s3683
        %s3685 = sand.u32 %s363, 1
        %s3686 = smul.addr %s3685, 16
        %s3687 = scalar_lea.vmem [#allocation3], %s3686
        // Predicated region
        $region77: #{tpu_custom_call.1} parent=75 // pred_check
          %p3688 = pneg %p373
        $region78: #{tpu_custom_call.1} parent=75 // pred_check_branch
          %3690 = sbr.rel (%p3688) target = $region80
        $region79: #{tpu_custom_call.1} parent=75 // pred_region
          %3692 = vsyncadd %s3684, 0
          %s3693 = smul.addr %s32, 2
          %s3694 = sadd.s32 %s33, %s3693
          %s3695 = smul.addr %s3694, 8
          %s3696 = scalar_lea.hbm %s14, %s3695
          %s3697 = sshll.u32 %s3687, 4
          %s3698 = int_to_ptr.vmem [resolvable:$true] %s3697
          %s3699 = sshll.u32 %s3696, 4
          %s3700 = int_to_ptr.hbm [resolvable:$true] %s3699
          %3705 = dma.vmem_to_hbm [thread:$0]  %s3698, 256, %s3700, %s3684, 128, 128, 8
        $region80: #{tpu_custom_call.1} parent=75 // pred_fallthru
          _
      $region76: #{tpu_custom_call.1} parent=5 // pred_fallthru
        _
      %p3706 = scmp.le.s32.totalorder 2, %s23
      // Predicated region
      $region81: #{tpu_custom_call.1} parent=5 // pred_check
        %p3707 = pneg %p3706
      $region82: #{tpu_custom_call.1} parent=5 // pred_check_branch
        %3709 = sbr.rel (%p3707) target = $region84
      $region83: #{tpu_custom_call.1} parent=5 // pred_region
        %s3710 = ssub.s32 %s23, 2
        // Predicated region
        $region85: #{tpu_custom_call.1} parent=83 // pred_check
          %p3711 = pneg %p379
        $region86: #{tpu_custom_call.1} parent=83 // pred_check_branch
          %3713 = sbr.rel (%p3711) target = $region88
        $region87: #{tpu_custom_call.1} parent=83 // pred_region
          %s3714 = sand.u32 %s364, 1
          %s3715 = scalar_lea.sflag [#allocation4], %s3714
          %s3716 = sand.u32 %s364, 1
          %s3717 = smul.addr %s3716, 16
          %s3718 = scalar_lea.vmem [#allocation3], %s3717
          %3720 = dma.done %s3715, 256
        $region88: #{tpu_custom_call.1} parent=83 // pred_fallthru
          _
      $region84: #{tpu_custom_call.1} parent=5 // pred_fallthru
        _
    $region6: #{tpu_custom_call.1} parent=1 // loop_footer
      %s27 = sadd.s32 1, %s23
    $region7: #{tpu_custom_call.1} parent=1 // loop_footer_branch
      %22 = sbr.rel target = $region3
    $region8: #{tpu_custom_call.1} parent=1 // loop_exit
      _
    %3721 = vsyncpa [#allocation4], 1
    %s3722 = scalar_lea.sflag [#allocation4], 1
    %3723 = vsyncpa %s3722, 1

</llo_original>
